<compile_context>
chip_gen: v6e
topology: v6e:2x2x1
jax: 0.10.0
libtpu: 0.0.40
codegen_flags: <defaults>
</compile_context>

<pallas_src>
import math
import functools

import numpy as np
import jax
import jax.numpy as jnp
from jax.experimental import pallas as pl
from jax.experimental.pallas import tpu as pltpu

EPS = 1e-5
EMBED_PAD = 128    # lane-padded embedding width
VOCAB_PAD = 128    # lane-padded vocab width


# ---------------------------------------------------------------------------
# Fused decoder kernel: grid = (layer,), batch folded into the block.
# ---------------------------------------------------------------------------
def _decoder_kernel(x_ref, enc_ref, hsel_ref, bias_ref,
                    w_qkv_ref, b_qkv_ref, w_qv_ref, b_qv_ref,
                    w_oth_ref, b_oth_ref, ln_g_ref, ln_b_ref,
                    ff_w1_ref, ff_b1_ref, ff_w2_ref, ff_b2_ref,
                    fc_w_ref, fc_b_ref,
                    out_ref, x_vmem,
                    *, batch, n_heads, e_real):
    layer = pl.program_id(0)
    n_layers = pl.num_programs(0)
    BS, Ep = x_ref.shape                  # B*S rows, 128 lanes
    S = BS // batch
    hd = e_real // n_heads
    scale = 1.0 / math.sqrt(hd)
    inv_e = 1.0 / e_real
    pad_n = float(Ep - e_real)
    f32, bf16 = jnp.float32, jnp.bfloat16

    # Residual stream stays resident in VMEM across the sequential layer axis.
    @pl.when(layer == 0)
    def _():
        x_vmem[...] = x_ref[...]

    x = x_vmem[...]                       # (BS, Ep) f32, padded lanes exactly 0
    enc_bf = enc_ref[...].astype(bf16)    # (BS, Ep)
    hsel = hsel_ref[...]                  # (H*BS, Ep) 0/1 head-column selector
    bias_self = bias_ref[0]               # (H*BS, BS) causal + cross-batch mask
    bias_cross = bias_ref[1]              # (H*BS, BS) cross-batch mask only
    ln_g = ln_g_ref[...]                  # (3, Ep)
    ln_b = ln_b_ref[...]                  # (3, Ep)
    b_oth = b_oth_ref[...]                # (3, Ep)  [self_o, cross_k, cross_o]

    def layer_norm(v, idx):
        # Padded lanes of v are exactly zero -> correct the statistics
        # analytically instead of rebuilding a lane-valid mask every step.
        mean = jnp.sum(v, axis=-1, keepdims=True) * inv_e
        d = v - mean
        var = (jnp.sum(d * d, axis=-1, keepdims=True) - pad_n * mean * mean) * inv_e
        var = jnp.maximum(var, 0.0)
        y = d * jax.lax.rsqrt(var + EPS)
        # gamma/beta are zero in padded lanes -> padding stays exactly zero
        return y * ln_g[idx:idx + 1] + ln_b[idx:idx + 1]

    def attend(q, k, v, bias):
        """All heads & batch elements with lane-dense 2-D matmuls.

        Row order r = h*(B*S) + b*S + i; cross-batch score columns are killed
        by the additive bias, head columns selected by hsel.
        """
        q_rep = jnp.concatenate([q] * n_heads, axis=0)     # (H*BS, Ep) sublane concat
        q_bd = q_rep * hsel                                 # block-diagonal Q
        s = jax.lax.dot_general(q_bd.astype(bf16), k.astype(bf16),
                                (((1,), (1,)), ((), ())),
                                preferred_element_type=f32) * scale + bias
        m = jnp.max(s, axis=-1, keepdims=True)
        e = jnp.exp(s - m)
        p = e * pl.reciprocal(jnp.sum(e, axis=-1, keepdims=True), approx=True)
        ctx = jnp.dot(p.astype(bf16), v.astype(bf16),
                      preferred_element_type=f32)           # (H*BS, Ep)
        ctx = ctx * hsel
        folded = ctx[0:BS]                                  # fold heads: VPU adds
        for h in range(1, n_heads):
            folded = folded + ctx[h * BS:(h + 1) * BS]
        return folded                                       # (BS, Ep)

    # ---- self-attention: MHA(x, x, x, mask) ---------------------------------
    qkv = jnp.dot(x.astype(bf16), w_qkv_ref[...],
                  preferred_element_type=f32) + b_qkv_ref[...]        # (BS, 3Ep)
    ctx_s = attend(qkv[:, :Ep], qkv[:, Ep:2 * Ep], qkv[:, 2 * Ep:], bias_self)
    att = jnp.dot(ctx_s.astype(bf16), w_oth_ref[0],
                  preferred_element_type=f32) + b_oth[0:1]
    q_state = layer_norm(att + x, 0)            # do(norm(att + x)); dropout = id

    # ---- cross-attention: MHA(query=enc_out, key=q_state, value=enc_out) ----
    qv = jnp.dot(enc_bf, w_qv_ref[...],
                 preferred_element_type=f32) + b_qv_ref[...]          # (BS, 2Ep)
    kx = jnp.dot(q_state.astype(bf16), w_oth_ref[1],
                 preferred_element_type=f32) + b_oth[1:2]
    ctx_c = attend(qv[:, :Ep], kx, qv[:, Ep:], bias_cross)
    cross = jnp.dot(ctx_c.astype(bf16), w_oth_ref[2],
                    preferred_element_type=f32) + b_oth[2:3]
    n1 = layer_norm(cross + q_state, 1)

    # ---- feed-forward --------------------------------------------------------
    h1 = jnp.dot(n1.astype(bf16), ff_w1_ref[...],
                 preferred_element_type=f32) + ff_b1_ref[...]
    h1 = jnp.maximum(h1, 0.0)
    ff = jnp.dot(h1.astype(bf16), ff_w2_ref[...],
                 preferred_element_type=f32) + ff_b2_ref[...]
    new_x = layer_norm(ff + n1, 2)

    x_vmem[...] = new_x

    # ---- final projection + softmax over the BATCH axis (legacy dim=0) ------
    @pl.when(layer == n_layers - 1)
    def _():
        logits = jnp.dot(new_x.astype(bf16), fc_w_ref[...],
                         preferred_element_type=f32) + fc_b_ref[...]  # (BS, Vp)
        parts = [logits[b * S:(b + 1) * S] for b in range(batch)]
        mx = parts[0]
        for part in parts[1:]:
            mx = jnp.maximum(mx, part)
        exps = [jnp.exp(part - mx) for part in parts]
        denom = exps[0]
        for e2 in exps[1:]:
            denom = denom + e2
        for b in range(batch):
            out_ref[b, :, :] = exps[b] / denom   # exact divide (user-visible output)


def fused_decoder(x, enc, head_sel, attn_bias, p, batch, n_heads, e_real):
    BS, Ep = x.shape
    L = p["w_qkv"].shape[0]
    FF = p["ff_w1"].shape[-1]
    Vp = p["fc_w"].shape[-1]
    S = BS // batch
    kernel = functools.partial(_decoder_kernel,
                               batch=batch, n_heads=n_heads, e_real=e_real)
    return pl.pallas_call(
        kernel,
        out_shape=jax.ShapeDtypeStruct((batch, S, Vp), jnp.float32),
        grid=(L,),
        in_specs=[
            pl.BlockSpec((BS, Ep), lambda l: (0, 0)),                 # x0
            pl.BlockSpec((BS, Ep), lambda l: (0, 0)),                 # enc_out
            pl.BlockSpec(head_sel.shape, lambda l: (0, 0)),           # head selector
            pl.BlockSpec(attn_bias.shape, lambda l: (0, 0, 0)),       # attention biases
            pl.BlockSpec((None, Ep, 3 * Ep), lambda l: (l, 0, 0)),    # self qkv W (fused)
            pl.BlockSpec((None, 1, 3 * Ep), lambda l: (l, 0, 0)),     # self qkv b
            pl.BlockSpec((None, Ep, 2 * Ep), lambda l: (l, 0, 0)),    # cross q,v W (fused)
            pl.BlockSpec((None, 1, 2 * Ep), lambda l: (l, 0, 0)),     # cross q,v b
            pl.BlockSpec((None, 3, Ep, Ep), lambda l: (l, 0, 0, 0)),  # [self_o, cross_k, cross_o] W
            pl.BlockSpec((None, 3, Ep), lambda l: (l, 0, 0)),         # their biases
            pl.BlockSpec((None, 3, Ep), lambda l: (l, 0, 0)),         # LN gammas
            pl.BlockSpec((None, 3, Ep), lambda l: (l, 0, 0)),         # LN betas
            pl.BlockSpec((None, Ep, FF), lambda l: (l, 0, 0)),        # FFN W1
            pl.BlockSpec((None, 1, FF), lambda l: (l, 0, 0)),         # FFN b1
            pl.BlockSpec((None, FF, Ep), lambda l: (l, 0, 0)),        # FFN W2
            pl.BlockSpec((None, 1, Ep), lambda l: (l, 0, 0)),         # FFN b2
            pl.BlockSpec((Ep, Vp), lambda l: (0, 0)),                 # final fc W
            pl.BlockSpec((1, Vp), lambda l: (0, 0)),                  # final fc b
        ],
        out_specs=pl.BlockSpec((batch, S, Vp), lambda l: (0, 0, 0)),
        scratch_shapes=[pltpu.VMEM((BS, Ep), jnp.float32)],
        compiler_params=pltpu.CompilerParams(
            dimension_semantics=("arbitrary",),
            vmem_limit_bytes=32 * 1024 * 1024),
    )(x, enc, head_sel, attn_bias,
      p["w_qkv"], p["b_qkv"], p["w_qv"], p["b_qv"], p["w_oth"], p["b_oth"],
      p["ln_g"], p["ln_b"], p["ff_w1"], p["ff_b1"], p["ff_w2"], p["ff_b2"],
      p["fc_w"], p["fc_b"])


# ---------------------------------------------------------------------------
# Parameter initialization (shapes from the nn.Module __init__; padded/packed)
# ---------------------------------------------------------------------------
def _linear_init(key, fan_in, fan_out):
    kw, kb = jax.random.split(key)
    bound = 1.0 / math.sqrt(fan_in)
    w = jax.random.uniform(kw, (fan_in, fan_out), jnp.float32, -bound, bound)
    b = jax.random.uniform(kb, (fan_out,), jnp.float32, -bound, bound)
    return w, b


def _pos_encoding(seq_len, embed_dim):
    # exact reproduction of the PyTorch double loop (non-standard formula).
    pe = np.zeros((seq_len, embed_dim), dtype=np.float32)
    for pos in range(seq_len):
        for i in range(0, embed_dim, 2):
            pe[pos, i] = math.sin(pos / 10000 ** (2 * i / embed_dim))
            pe[pos, i + 1] = math.cos(pos / 10000 ** (2 * (i + 1) / embed_dim))
    return jnp.asarray(pe)


def init_params(key, vocab, embed_dim, seq_len, n_layers, expansion_factor):
    E, Ep, Vp = embed_dim, EMBED_PAD, VOCAB_PAD
    FF = expansion_factor * E
    pe_cols, pv = Ep - E, Vp - vocab

    keys = jax.random.split(key, n_layers + 2)
    embed = jax.random.normal(keys[0], (vocab, E), jnp.float32)
    fc_w, fc_b = _linear_init(keys[1], E, vocab)

    def padw(w):
        return jnp.pad(w, ((0, pe_cols), (0, pe_cols)))

    def padb(b):
        return jnp.pad(b, (0, pe_cols))

    w_qkv, b_qkv, w_qv, b_qv, w_oth, b_oth = [], [], [], [], [], []
    ln_g, ln_b = [], []
    ff_w1, ff_b1, ff_w2, ff_b2 = [], [], [], []
    for l in range(n_layers):
        k = jax.random.split(keys[2 + l], 10)
        sq = _linear_init(k[0], E, E)   # self q
        sk = _linear_init(k[1], E, E)   # self k
        sv = _linear_init(k[2], E, E)   # self v
        so = _linear_init(k[3], E, E)   # self out
        cq = _linear_init(k[4], E, E)   # cross q (applied to enc_out)
        ck = _linear_init(k[5], E, E)   # cross k (applied to decoder state)
        cv = _linear_init(k[6], E, E)   # cross v (applied to enc_out)
        co = _linear_init(k[7], E, E)   # cross out

        w_qkv.append(jnp.concatenate([padw(sq[0]), padw(sk[0]), padw(sv[0])], axis=1))
        b_qkv.append(jnp.concatenate([padb(sq[1]), padb(sk[1]), padb(sv[1])])[None, :])
        w_qv.append(jnp.concatenate([padw(cq[0]), padw(cv[0])], axis=1))
        b_qv.append(jnp.concatenate([padb(cq[1]), padb(cv[1])])[None, :])
        w_oth.append(jnp.stack([padw(so[0]), padw(ck[0]), padw(co[0])]))
        b_oth.append(jnp.stack([padb(so[1]), padb(ck[1]), padb(co[1])]))

        ln_g.append(jnp.pad(jnp.ones((3, E), jnp.float32), ((0, 0), (0, pe_cols))))
        ln_b.append(jnp.zeros((3, Ep), jnp.float32))

        w1, b1 = _linear_init(k[8], E, FF)
        w2, b2 = _linear_init(k[9], FF, E)
        ff_w1.append(jnp.pad(w1, ((0, pe_cols), (0, 0))))
        ff_b1.append(b1[None, :])
        ff_w2.append(jnp.pad(w2, ((0, 0), (0, pe_cols))))
        ff_b2.append(padb(b2)[None, :])

    return {
        "embed": embed,
        "pos_enc": _pos_encoding(seq_len, E),
        "w_qkv": jnp.stack(w_qkv).astype(jnp.bfloat16),    # (L, Ep, 3Ep)
        "b_qkv": jnp.stack(b_qkv),                         # (L, 1, 3Ep)
        "w_qv": jnp.stack(w_qv).astype(jnp.bfloat16),      # (L, Ep, 2Ep)
        "b_qv": jnp.stack(b_qv),                           # (L, 1, 2Ep)
        "w_oth": jnp.stack(w_oth).astype(jnp.bfloat16),    # (L, 3, Ep, Ep)
        "b_oth": jnp.stack(b_oth),                         # (L, 3, Ep)
        "ln_g": jnp.stack(ln_g),                           # (L, 3, Ep)
        "ln_b": jnp.stack(ln_b),                           # (L, 3, Ep)
        "ff_w1": jnp.stack(ff_w1).astype(jnp.bfloat16),    # (L, Ep, FF)
        "ff_b1": jnp.stack(ff_b1),                         # (L, 1, FF)
        "ff_w2": jnp.stack(ff_w2).astype(jnp.bfloat16),    # (L, FF, Ep)
        "ff_b2": jnp.stack(ff_b2),                         # (L, 1, Ep)
        "fc_w": jnp.pad(fc_w, ((0, pe_cols), (0, pv))).astype(jnp.bfloat16),  # (Ep, Vp)
        "fc_b": jnp.pad(fc_b, (0, pv))[None, :],           # (1, Vp)
        "embed_dim": E,
        "vocab": vocab,
    }


# ---------------------------------------------------------------------------
# Forward pass (structure mirrors TransformerDecoder.forward)
# ---------------------------------------------------------------------------
def transformer_decoder_forward(params, tokens, enc_out, mask, n_heads):
    B, S = tokens.shape
    E = params["embed_dim"]
    Ep = EMBED_PAD
    H = n_heads
    hd = E // H
    BS = B * S
    ROWS = H * BS
    assert enc_out.shape[1] == S

    # word embedding (gather) + positional encoding: plain-JAX glue.
    # TODO(synk): nn.Dropout(0.2) layers are identity (eval mode); training-mode
    # RNG dropout is not reproduced.
    x = params["embed"][tokens] + params["pos_enc"][None, :S, :]
    x = jnp.pad(x, ((0, 0), (0, 0), (0, Ep - E))).reshape(BS, Ep)
    enc = jnp.pad(enc_out, ((0, 0), (0, 0), (0, Ep - E))).reshape(BS, Ep)

    # Static head-column selector (row order r = h*B*S + b*S + i).
    r = np.arange(ROWS)
    c = np.arange(Ep)
    head_sel = jnp.asarray(((r[:, None] // BS) == (c[None, :] // hd))
                           .astype(np.float32))

    # Additive attention biases: kill cross-batch columns; self-attn also gets
    # the causal mask (finite fill so fully-masked entries never produce NaN).
    rb = (r % BS) // S
    jb = np.arange(BS) // S
    cross_batch = jnp.asarray(rb[:, None] != jb[None, :])
    causal = jnp.tile(mask, (B * H, B)) > 0.0
    bias_self = jnp.where(cross_batch | causal, -1e30, 0.0).astype(jnp.float32)
    bias_cross = jnp.where(cross_batch, -1e30, 0.0).astype(jnp.float32)
    attn_bias = jnp.stack([bias_self, bias_cross])          # (2, H*BS, BS)

    out = fused_decoder(x, enc, head_sel, attn_bias, params, B, n_heads, E)
    return out[..., :params["vocab"]]                        # drop vocab padding


# ---------------------------------------------------------------------------
# Main
# ---------------------------------------------------------------------------
if __name__ == "__main__":
    B, S, E = 2, 8, 64
    N_HEADS = 8                 # hardcoded in the PyTorch layer construction
    EXPANSION = 4               # hardcoded in the PyTorch layer construction
    VOCAB = 16
    N_LAYERS = 2

    root = jax.random.PRNGKey(0)
    k_params, k_tok, k_enc = jax.random.split(root, 3)

    params = init_params(k_params, VOCAB, E, S, N_LAYERS, EXPANSION)

    tokens = jax.random.randint(k_tok, (B, S), 0, VOCAB, dtype=jnp.int32)
    enc_out = jax.random.normal(k_enc, (B, S, E), jnp.float32)
    # causal mask: 1.0 where the position should be masked (filled with -inf)
    mask = jnp.triu(jnp.ones((S, S), jnp.float32), k=1)

    out = transformer_decoder_forward(params, tokens, enc_out, mask, N_HEADS)
    out = jax.block_until_ready(out)

    assert out.shape == (B, S, VOCAB), out.shape
    assert bool(jnp.all(jnp.isfinite(out)))
    # softmax is over the batch axis (PyTorch legacy implicit dim=0 for 3-D);
    # the final softmax uses an exact divide, so the sum is 1 to f32 precision.
    assert bool(jnp.allclose(jnp.sum(out, axis=0), 1.0, atol=1e-4))

    print("KERNEL_OK")
</pallas_src>

<mosaic_0001>
module attributes {stable_mosaic.version = 11 : i64} {
  func.func @_decoder_kernel(%arg0: i32, %arg1: memref<16x128xf32, #tpu.memory_space<vmem>>, %arg2: memref<16x128xf32, #tpu.memory_space<vmem>>, %arg3: memref<128x128xf32, #tpu.memory_space<vmem>>, %arg4: memref<2x128x16xf32, #tpu.memory_space<vmem>>, %arg5: memref<1x128x384xbf16, #tpu.memory_space<vmem>>, %arg6: memref<1x1x384xf32, #tpu.memory_space<vmem>>, %arg7: memref<1x128x256xbf16, #tpu.memory_space<vmem>>, %arg8: memref<1x1x256xf32, #tpu.memory_space<vmem>>, %arg9: memref<1x3x128x128xbf16, #tpu.memory_space<vmem>>, %arg10: memref<1x3x128xf32, #tpu.memory_space<vmem>>, %arg11: memref<1x3x128xf32, #tpu.memory_space<vmem>>, %arg12: memref<1x3x128xf32, #tpu.memory_space<vmem>>, %arg13: memref<1x128x256xbf16, #tpu.memory_space<vmem>>, %arg14: memref<1x1x256xf32, #tpu.memory_space<vmem>>, %arg15: memref<1x256x128xbf16, #tpu.memory_space<vmem>>, %arg16: memref<1x1x128xf32, #tpu.memory_space<vmem>>, %arg17: memref<128x128xbf16, #tpu.memory_space<vmem>>, %arg18: memref<1x128xf32, #tpu.memory_space<vmem>>, %arg19: memref<2x8x128xf32, #tpu.memory_space<vmem>>, %arg20: memref<16x128xf32, #tpu.memory_space<vmem>>) attributes {dimension_semantics = [#tpu.dimension_semantics<arbitrary>], iteration_bounds = array<i64: 2>, scalar_prefetch = 0 : i64, scratch_operands = 1 : i64, tpu.core_type = #tpu.core_type<tc>, window_params = [{pipeline_mode = #tpu.pipeline_mode<synchronous>, transform_indices = @transform_0, window_bounds = array<i64: 16, 128>}, {pipeline_mode = #tpu.pipeline_mode<synchronous>, transform_indices = @transform_1, window_bounds = array<i64: 16, 128>}, {pipeline_mode = #tpu.pipeline_mode<synchronous>, transform_indices = @transform_2, window_bounds = array<i64: 128, 128>}, {pipeline_mode = #tpu.pipeline_mode<synchronous>, transform_indices = @transform_3, window_bounds = array<i64: 2, 128, 16>}, {transform_indices = @transform_4, window_bounds = array<i64: 1, 128, 384>}, {transform_indices = @transform_5, window_bounds = array<i64: 1, 1, 384>}, {transform_indices = @transform_6, window_bounds = array<i64: 1, 128, 256>}, {transform_indices = @transform_7, window_bounds = array<i64: 1, 1, 256>}, {transform_indices = @transform_8, window_bounds = array<i64: 1, 3, 128, 128>}, {transform_indices = @transform_9, window_bounds = array<i64: 1, 3, 128>}, {transform_indices = @transform_10, window_bounds = array<i64: 1, 3, 128>}, {transform_indices = @transform_11, window_bounds = array<i64: 1, 3, 128>}, {transform_indices = @transform_12, window_bounds = array<i64: 1, 128, 256>}, {transform_indices = @transform_13, window_bounds = array<i64: 1, 1, 256>}, {transform_indices = @transform_14, window_bounds = array<i64: 1, 256, 128>}, {transform_indices = @transform_15, window_bounds = array<i64: 1, 1, 128>}, {pipeline_mode = #tpu.pipeline_mode<synchronous>, transform_indices = @transform_16, window_bounds = array<i64: 128, 128>}, {pipeline_mode = #tpu.pipeline_mode<synchronous>, transform_indices = @transform_17, window_bounds = array<i64: 1, 128>}, {pipeline_mode = #tpu.pipeline_mode<synchronous>, transform_indices = @transform_18, window_bounds = array<i64: 2, 8, 128>}]} {
    %c0_i32 = arith.constant 0 : i32
    %0 = arith.cmpi eq, %arg0, %c0_i32 : i32
    %1 = arith.extui %0 : i1 to i32
    %c0_i32_0 = arith.constant 0 : i32
    %2 = arith.cmpi ne, %1, %c0_i32_0 : i32
    scf.if %2 {
      %c0_96 = arith.constant 0 : index
      %c0_97 = arith.constant 0 : index
      %241 = vector.load %arg1[%c0_96, %c0_97] : memref<16x128xf32, #tpu.memory_space<vmem>>, vector<16x128xf32>
      %c0_98 = arith.constant 0 : index
      %c0_99 = arith.constant 0 : index
      %242 = vector.load %arg20[%c0_98, %c0_99] : memref<16x128xf32, #tpu.memory_space<vmem>>, vector<16x128xf32>
      tpu.vector_store %arg20[%c0_98, %c0_99], %241 {strides = array<i32>} : memref<16x128xf32, #tpu.memory_space<vmem>>, vector<16x128xf32>,
    } else {
    }
    %c0 = arith.constant 0 : index
    %c0_1 = arith.constant 0 : index
    %3 = vector.load %arg20[%c0, %c0_1] : memref<16x128xf32, #tpu.memory_space<vmem>>, vector<16x128xf32>
    %c0_2 = arith.constant 0 : index
    %c0_3 = arith.constant 0 : index
    %4 = vector.load %arg2[%c0_2, %c0_3] : memref<16x128xf32, #tpu.memory_space<vmem>>, vector<16x128xf32>
    %5 = arith.truncf %4 : vector<16x128xf32> to vector<16x128xbf16>
    %c0_4 = arith.constant 0 : index
    %c0_5 = arith.constant 0 : index
    %6 = vector.load %arg3[%c0_4, %c0_5] : memref<128x128xf32, #tpu.memory_space<vmem>>, vector<128x128xf32>
    %c0_6 = arith.constant 0 : index
    %c0_7 = arith.constant 0 : index
    %c0_8 = arith.constant 0 : index
    %7 = vector.load %arg4[%c0_6, %c0_7, %c0_8] : memref<2x128x16xf32, #tpu.memory_space<vmem>>, vector<1x128x16xf32>
    %8 = vector.shape_cast %7 : vector<1x128x16xf32> to vector<128x16xf32>
    %c1 = arith.constant 1 : index
    %c0_9 = arith.constant 0 : index
    %c0_10 = arith.constant 0 : index
    %9 = vector.load %arg4[%c1, %c0_9, %c0_10] : memref<2x128x16xf32, #tpu.memory_space<vmem>>, vector<1x128x16xf32>
    %10 = vector.shape_cast %9 : vector<1x128x16xf32> to vector<128x16xf32>
    %c0_11 = arith.constant 0 : index
    %c0_12 = arith.constant 0 : index
    %c0_13 = arith.constant 0 : index
    %11 = vector.load %arg11[%c0_11, %c0_12, %c0_13] : memref<1x3x128xf32, #tpu.memory_space<vmem>>, vector<1x3x128xf32>
    %12 = vector.shape_cast %11 : vector<1x3x128xf32> to vector<3x128xf32>
    %c0_14 = arith.constant 0 : index
    %c0_15 = arith.constant 0 : index
    %c0_16 = arith.constant 0 : index
    %13 = vector.load %arg12[%c0_14, %c0_15, %c0_16] : memref<1x3x128xf32, #tpu.memory_space<vmem>>, vector<1x3x128xf32>
    %14 = vector.shape_cast %13 : vector<1x3x128xf32> to vector<3x128xf32>
    %c0_17 = arith.constant 0 : index
    %c0_18 = arith.constant 0 : index
    %c0_19 = arith.constant 0 : index
    %15 = vector.load %arg10[%c0_17, %c0_18, %c0_19] : memref<1x3x128xf32, #tpu.memory_space<vmem>>, vector<1x3x128xf32>
    %16 = vector.shape_cast %15 : vector<1x3x128xf32> to vector<3x128xf32>
    %17 = arith.truncf %3 : vector<16x128xf32> to vector<16x128xbf16>
    %c0_20 = arith.constant 0 : index
    %c0_21 = arith.constant 0 : index
    %c0_22 = arith.constant 0 : index
    %18 = vector.load %arg5[%c0_20, %c0_21, %c0_22] : memref<1x128x384xbf16, #tpu.memory_space<vmem>>, vector<1x128x384xbf16>
    %19 = vector.shape_cast %18 : vector<1x128x384xbf16> to vector<128x384xbf16>
    %cst = arith.constant dense<0.000000e+00> : vector<16x384xf32>
    %20 = tpu.matmul %17, %19, %cst {dimension_numbers = #tpu.dot_dimension_numbers<[1], [0], [0], [1], [0, 0, 1, 1], [], []>} : vector<16x128xbf16>, vector<128x384xbf16>, vector<16x384xf32> -> vector<16x384xf32>
    %c0_23 = arith.constant 0 : index
    %c0_24 = arith.constant 0 : index
    %c0_25 = arith.constant 0 : index
    %21 = vector.load %arg6[%c0_23, %c0_24, %c0_25] : memref<1x1x384xf32, #tpu.memory_space<vmem>>, vector<1x1x384xf32>
    %22 = vector.shape_cast %21 : vector<1x1x384xf32> to vector<1x384xf32>
    %23 = vector.broadcast %22 : vector<1x384xf32> to vector<16x384xf32>
    %24 = arith.addf %20, %23 : vector<16x384xf32>
    %25 = vector.extract_strided_slice %24 {offsets = [0, 0], sizes = [16, 128], strides = [1, 1]} : vector<16x384xf32> to vector<16x128xf32>
    %26 = vector.extract_strided_slice %24 {offsets = [0, 128], sizes = [16, 128], strides = [1, 1]} : vector<16x384xf32> to vector<16x128xf32>
    %27 = vector.extract_strided_slice %24 {offsets = [0, 256], sizes = [16, 128], strides = [1, 1]} : vector<16x384xf32> to vector<16x128xf32>
    %28 = tpu.concatenate %25, %25, %25, %25, %25, %25, %25, %25 in 0 : vector<16x128xf32>, vector<16x128xf32>, vector<16x128xf32>, vector<16x128xf32>, vector<16x128xf32>, vector<16x128xf32>, vector<16x128xf32>, vector<16x128xf32> -> vector<128x128xf32>
    %29 = arith.mulf %28, %6 : vector<128x128xf32>
    %30 = arith.truncf %29 : vector<128x128xf32> to vector<128x128xbf16>
    %31 = arith.truncf %26 : vector<16x128xf32> to vector<16x128xbf16>
    %cst_26 = arith.constant dense<0.000000e+00> : vector<128x16xf32>
    %32 = tpu.matmul %30, %31, %cst_26 {dimension_numbers = #tpu.dot_dimension_numbers<[1], [1], [0], [0], [0, 0, 1, 0], [], []>} : vector<128x128xbf16>, vector<16x128xbf16>, vector<128x16xf32> -> vector<128x16xf32>
    %cst_27 = arith.constant 0.353553385 : f32
    %33 = vector.broadcast %cst_27 : f32 to vector<128x16xf32>
    %34 = arith.mulf %32, %33 : vector<128x16xf32>
    %35 = arith.addf %34, %8 : vector<128x16xf32>
    %cst_28 = arith.constant dense<0xFF800000> : vector<128xf32>
    %36 = vector.multi_reduction <maximumf>, %35, %cst_28 [1] : vector<128x16xf32> to vector<128xf32>
    %37 = vector.shape_cast %36 : vector<128xf32> to vector<128x1xf32>
    %38 = vector.broadcast %37 : vector<128x1xf32> to vector<128x16xf32>
    %39 = arith.subf %35, %38 : vector<128x16xf32>
    %40 = math.exp %39 : vector<128x16xf32>
    %cst_29 = arith.constant dense<0.000000e+00> : vector<128xf32>
    %41 = vector.multi_reduction <add>, %40, %cst_29 [1] : vector<128x16xf32> to vector<128xf32>
    %42 = vector.shape_cast %41 : vector<128xf32> to vector<128x1xf32>
    %43 = tpu.reciprocal %42 {approx = true} : vector<128x1xf32> -> vector<128x1xf32>
    %44 = vector.broadcast %43 : vector<128x1xf32> to vector<128x16xf32>
    %45 = arith.mulf %40, %44 : vector<128x16xf32>
    %46 = arith.truncf %45 : vector<128x16xf32> to vector<128x16xbf16>
    %47 = arith.truncf %27 : vector<16x128xf32> to vector<16x128xbf16>
    %cst_30 = arith.constant dense<0.000000e+00> : vector<128x128xf32>
    %48 = tpu.matmul %46, %47, %cst_30 {dimension_numbers = #tpu.dot_dimension_numbers<[1], [0], [0], [1], [0, 0, 1, 1], [], []>} : vector<128x16xbf16>, vector<16x128xbf16>, vector<128x128xf32> -> vector<128x128xf32>
    %49 = arith.mulf %48, %6 : vector<128x128xf32>
    %50 = vector.extract_strided_slice %49 {offsets = [0, 0], sizes = [16, 128], strides = [1, 1]} : vector<128x128xf32> to vector<16x128xf32>
    %51 = vector.extract_strided_slice %49 {offsets = [16, 0], sizes = [16, 128], strides = [1, 1]} : vector<128x128xf32> to vector<16x128xf32>
    %52 = arith.addf %50, %51 : vector<16x128xf32>
    %53 = vector.extract_strided_slice %49 {offsets = [32, 0], sizes = [16, 128], strides = [1, 1]} : vector<128x128xf32> to vector<16x128xf32>
    %54 = arith.addf %52, %53 : vector<16x128xf32>
    %55 = vector.extract_strided_slice %49 {offsets = [48, 0], sizes = [16, 128], strides = [1, 1]} : vector<128x128xf32> to vector<16x128xf32>
    %56 = arith.addf %54, %55 : vector<16x128xf32>
    %57 = vector.extract_strided_slice %49 {offsets = [64, 0], sizes = [16, 128], strides = [1, 1]} : vector<128x128xf32> to vector<16x128xf32>
    %58 = arith.addf %56, %57 : vector<16x128xf32>
    %59 = vector.extract_strided_slice %49 {offsets = [80, 0], sizes = [16, 128], strides = [1, 1]} : vector<128x128xf32> to vector<16x128xf32>
    %60 = arith.addf %58, %59 : vector<16x128xf32>
    %61 = vector.extract_strided_slice %49 {offsets = [96, 0], sizes = [16, 128], strides = [1, 1]} : vector<128x128xf32> to vector<16x128xf32>
    %62 = arith.addf %60, %61 : vector<16x128xf32>
    %63 = vector.extract_strided_slice %49 {offsets = [112, 0], sizes = [16, 128], strides = [1, 1]} : vector<128x128xf32> to vector<16x128xf32>
    %64 = arith.addf %62, %63 : vector<16x128xf32>
    %65 = arith.truncf %64 : vector<16x128xf32> to vector<16x128xbf16>
    %c0_31 = arith.constant 0 : index
    %c0_32 = arith.constant 0 : index
    %c0_33 = arith.constant 0 : index
    %c0_34 = arith.constant 0 : index
    %66 = vector.load %arg9[%c0_31, %c0_32, %c0_33, %c0_34] : memref<1x3x128x128xbf16, #tpu.memory_space<vmem>>, vector<1x1x128x128xbf16>
    %67 = vector.shape_cast %66 : vector<1x1x128x128xbf16> to vector<128x128xbf16>
    %cst_35 = arith.constant dense<0.000000e+00> : vector<16x128xf32>
    %68 = tpu.matmul %65, %67, %cst_35 {dimension_numbers = #tpu.dot_dimension_numbers<[1], [0], [0], [1], [0, 0, 1, 1], [], []>} : vector<16x128xbf16>, vector<128x128xbf16>, vector<16x128xf32> -> vector<16x128xf32>
    %69 = vector.extract_strided_slice %16 {offsets = [0, 0], sizes = [1, 128], strides = [1, 1]} : vector<3x128xf32> to vector<1x128xf32>
    %70 = vector.broadcast %69 : vector<1x128xf32> to vector<16x128xf32>
    %71 = arith.addf %68, %70 : vector<16x128xf32>
    %72 = arith.addf %71, %3 : vector<16x128xf32>
    %cst_36 = arith.constant dense<0.000000e+00> : vector<16xf32>
    %73 = vector.multi_reduction <add>, %72, %cst_36 [1] : vector<16x128xf32> to vector<16xf32>
    %74 = vector.shape_cast %73 : vector<16xf32> to vector<16x1xf32>
    %cst_37 = arith.constant 1.562500e-02 : f32
    %75 = vector.broadcast %cst_37 : f32 to vector<16x1xf32>
    %76 = arith.mulf %74, %75 : vector<16x1xf32>
    %77 = vector.broadcast %76 : vector<16x1xf32> to vector<16x128xf32>
    %78 = arith.subf %72, %77 : vector<16x128xf32>
    %79 = arith.mulf %78, %78 : vector<16x128xf32>
    %cst_38 = arith.constant dense<0.000000e+00> : vector<16xf32>
    %80 = vector.multi_reduction <add>, %79, %cst_38 [1] : vector<16x128xf32> to vector<16xf32>
    %81 = vector.shape_cast %80 : vector<16xf32> to vector<16x1xf32>
    %cst_39 = arith.constant 6.400000e+01 : f32
    %82 = vector.broadcast %cst_39 : f32 to vector<16x1xf32>
    %83 = arith.mulf %82, %76 : vector<16x1xf32>
    %84 = arith.mulf %83, %76 : vector<16x1xf32>
    %85 = arith.subf %81, %84 : vector<16x1xf32>
    %cst_40 = arith.constant 1.562500e-02 : f32
    %86 = vector.broadcast %cst_40 : f32 to vector<16x1xf32>
    %87 = arith.mulf %85, %86 : vector<16x1xf32>
    %cst_41 = arith.constant 0.000000e+00 : f32
    %88 = vector.broadcast %cst_41 : f32 to vector<16x1xf32>
    %89 = arith.maximumf %87, %88 : vector<16x1xf32>
    %cst_42 = arith.constant 9.99999974E-6 : f32
    %90 = vector.broadcast %cst_42 : f32 to vector<16x1xf32>
    %91 = arith.addf %89, %90 : vector<16x1xf32>
    %92 = math.rsqrt %91 : vector<16x1xf32>
    %93 = vector.broadcast %92 : vector<16x1xf32> to vector<16x128xf32>
    %94 = arith.mulf %78, %93 : vector<16x128xf32>
    %95 = vector.extract_strided_slice %12 {offsets = [0, 0], sizes = [1, 128], strides = [1, 1]} : vector<3x128xf32> to vector<1x128xf32>
    %96 = vector.broadcast %95 : vector<1x128xf32> to vector<16x128xf32>
    %97 = arith.mulf %94, %96 : vector<16x128xf32>
    %98 = vector.extract_strided_slice %14 {offsets = [0, 0], sizes = [1, 128], strides = [1, 1]} : vector<3x128xf32> to vector<1x128xf32>
    %99 = vector.broadcast %98 : vector<1x128xf32> to vector<16x128xf32>
    %100 = arith.addf %97, %99 : vector<16x128xf32>
    %c0_43 = arith.constant 0 : index
    %c0_44 = arith.constant 0 : index
    %c0_45 = arith.constant 0 : index
    %101 = vector.load %arg7[%c0_43, %c0_44, %c0_45] : memref<1x128x256xbf16, #tpu.memory_space<vmem>>, vector<1x128x256xbf16>
    %102 = vector.shape_cast %101 : vector<1x128x256xbf16> to vector<128x256xbf16>
    %cst_46 = arith.constant dense<0.000000e+00> : vector<16x256xf32>
    %103 = tpu.matmul %5, %102, %cst_46 {dimension_numbers = #tpu.dot_dimension_numbers<[1], [0], [0], [1], [0, 0, 1, 1], [], []>} : vector<16x128xbf16>, vector<128x256xbf16>, vector<16x256xf32> -> vector<16x256xf32>
    %c0_47 = arith.constant 0 : index
    %c0_48 = arith.constant 0 : index
    %c0_49 = arith.constant 0 : index
    %104 = vector.load %arg8[%c0_47, %c0_48, %c0_49] : memref<1x1x256xf32, #tpu.memory_space<vmem>>, vector<1x1x256xf32>
    %105 = vector.shape_cast %104 : vector<1x1x256xf32> to vector<1x256xf32>
    %106 = vector.broadcast %105 : vector<1x256xf32> to vector<16x256xf32>
    %107 = arith.addf %103, %106 : vector<16x256xf32>
    %108 = arith.truncf %100 : vector<16x128xf32> to vector<16x128xbf16>
    %c0_50 = arith.constant 0 : index
    %c1_51 = arith.constant 1 : index
    %c0_52 = arith.constant 0 : index
    %c0_53 = arith.constant 0 : index
    %109 = vector.load %arg9[%c0_50, %c1_51, %c0_52, %c0_53] : memref<1x3x128x128xbf16, #tpu.memory_space<vmem>>, vector<1x1x128x128xbf16>
    %110 = vector.shape_cast %109 : vector<1x1x128x128xbf16> to vector<128x128xbf16>
    %cst_54 = arith.constant dense<0.000000e+00> : vector<16x128xf32>
    %111 = tpu.matmul %108, %110, %cst_54 {dimension_numbers = #tpu.dot_dimension_numbers<[1], [0], [0], [1], [0, 0, 1, 1], [], []>} : vector<16x128xbf16>, vector<128x128xbf16>, vector<16x128xf32> -> vector<16x128xf32>
    %112 = vector.extract_strided_slice %16 {offsets = [1, 0], sizes = [1, 128], strides = [1, 1]} : vector<3x128xf32> to vector<1x128xf32>
    %113 = vector.broadcast %112 : vector<1x128xf32> to vector<16x128xf32>
    %114 = arith.addf %111, %113 : vector<16x128xf32>
    %115 = vector.extract_strided_slice %107 {offsets = [0, 0], sizes = [16, 128], strides = [1, 1]} : vector<16x256xf32> to vector<16x128xf32>
    %116 = vector.extract_strided_slice %107 {offsets = [0, 128], sizes = [16, 128], strides = [1, 1]} : vector<16x256xf32> to vector<16x128xf32>
    %117 = tpu.concatenate %115, %115, %115, %115, %115, %115, %115, %115 in 0 : vector<16x128xf32>, vector<16x128xf32>, vector<16x128xf32>, vector<16x128xf32>, vector<16x128xf32>, vector<16x128xf32>, vector<16x128xf32>, vector<16x128xf32> -> vector<128x128xf32>
    %118 = arith.mulf %117, %6 : vector<128x128xf32>
    %119 = arith.truncf %118 : vector<128x128xf32> to vector<128x128xbf16>
    %120 = arith.truncf %114 : vector<16x128xf32> to vector<16x128xbf16>
    %cst_55 = arith.constant dense<0.000000e+00> : vector<128x16xf32>
    %121 = tpu.matmul %119, %120, %cst_55 {dimension_numbers = #tpu.dot_dimension_numbers<[1], [1], [0], [0], [0, 0, 1, 0], [], []>} : vector<128x128xbf16>, vector<16x128xbf16>, vector<128x16xf32> -> vector<128x16xf32>
    %cst_56 = arith.constant 0.353553385 : f32
    %122 = vector.broadcast %cst_56 : f32 to vector<128x16xf32>
    %123 = arith.mulf %121, %122 : vector<128x16xf32>
    %124 = arith.addf %123, %10 : vector<128x16xf32>
    %cst_57 = arith.constant dense<0xFF800000> : vector<128xf32>
    %125 = vector.multi_reduction <maximumf>, %124, %cst_57 [1] : vector<128x16xf32> to vector<128xf32>
    %126 = vector.shape_cast %125 : vector<128xf32> to vector<128x1xf32>
    %127 = vector.broadcast %126 : vector<128x1xf32> to vector<128x16xf32>
    %128 = arith.subf %124, %127 : vector<128x16xf32>
    %129 = math.exp %128 : vector<128x16xf32>
    %cst_58 = arith.constant dense<0.000000e+00> : vector<128xf32>
    %130 = vector.multi_reduction <add>, %129, %cst_58 [1] : vector<128x16xf32> to vector<128xf32>
    %131 = vector.shape_cast %130 : vector<128xf32> to vector<128x1xf32>
    %132 = tpu.reciprocal %131 {approx = true} : vector<128x1xf32> -> vector<128x1xf32>
    %133 = vector.broadcast %132 : vector<128x1xf32> to vector<128x16xf32>
    %134 = arith.mulf %129, %133 : vector<128x16xf32>
    %135 = arith.truncf %134 : vector<128x16xf32> to vector<128x16xbf16>
    %136 = arith.truncf %116 : vector<16x128xf32> to vector<16x128xbf16>
    %cst_59 = arith.constant dense<0.000000e+00> : vector<128x128xf32>
    %137 = tpu.matmul %135, %136, %cst_59 {dimension_numbers = #tpu.dot_dimension_numbers<[1], [0], [0], [1], [0, 0, 1, 1], [], []>} : vector<128x16xbf16>, vector<16x128xbf16>, vector<128x128xf32> -> vector<128x128xf32>
    %138 = arith.mulf %137, %6 : vector<128x128xf32>
    %139 = vector.extract_strided_slice %138 {offsets = [0, 0], sizes = [16, 128], strides = [1, 1]} : vector<128x128xf32> to vector<16x128xf32>
    %140 = vector.extract_strided_slice %138 {offsets = [16, 0], sizes = [16, 128], strides = [1, 1]} : vector<128x128xf32> to vector<16x128xf32>
    %141 = arith.addf %139, %140 : vector<16x128xf32>
    %142 = vector.extract_strided_slice %138 {offsets = [32, 0], sizes = [16, 128], strides = [1, 1]} : vector<128x128xf32> to vector<16x128xf32>
    %143 = arith.addf %141, %142 : vector<16x128xf32>
    %144 = vector.extract_strided_slice %138 {offsets = [48, 0], sizes = [16, 128], strides = [1, 1]} : vector<128x128xf32> to vector<16x128xf32>
    %145 = arith.addf %143, %144 : vector<16x128xf32>
    %146 = vector.extract_strided_slice %138 {offsets = [64, 0], sizes = [16, 128], strides = [1, 1]} : vector<128x128xf32> to vector<16x128xf32>
    %147 = arith.addf %145, %146 : vector<16x128xf32>
    %148 = vector.extract_strided_slice %138 {offsets = [80, 0], sizes = [16, 128], strides = [1, 1]} : vector<128x128xf32> to vector<16x128xf32>
    %149 = arith.addf %147, %148 : vector<16x128xf32>
    %150 = vector.extract_strided_slice %138 {offsets = [96, 0], sizes = [16, 128], strides = [1, 1]} : vector<128x128xf32> to vector<16x128xf32>
    %151 = arith.addf %149, %150 : vector<16x128xf32>
    %152 = vector.extract_strided_slice %138 {offsets = [112, 0], sizes = [16, 128], strides = [1, 1]} : vector<128x128xf32> to vector<16x128xf32>
    %153 = arith.addf %151, %152 : vector<16x128xf32>
    %154 = arith.truncf %153 : vector<16x128xf32> to vector<16x128xbf16>
    %c0_60 = arith.constant 0 : index
    %c2 = arith.constant 2 : index
    %c0_61 = arith.constant 0 : index
    %c0_62 = arith.constant 0 : index
    %155 = vector.load %arg9[%c0_60, %c2, %c0_61, %c0_62] : memref<1x3x128x128xbf16, #tpu.memory_space<vmem>>, vector<1x1x128x128xbf16>
    %156 = vector.shape_cast %155 : vector<1x1x128x128xbf16> to vector<128x128xbf16>
    %cst_63 = arith.constant dense<0.000000e+00> : vector<16x128xf32>
    %157 = tpu.matmul %154, %156, %cst_63 {dimension_numbers = #tpu.dot_dimension_numbers<[1], [0], [0], [1], [0, 0, 1, 1], [], []>} : vector<16x128xbf16>, vector<128x128xbf16>, vector<16x128xf32> -> vector<16x128xf32>
    %158 = vector.extract_strided_slice %16 {offsets = [2, 0], sizes = [1, 128], strides = [1, 1]} : vector<3x128xf32> to vector<1x128xf32>
    %159 = vector.broadcast %158 : vector<1x128xf32> to vector<16x128xf32>
    %160 = arith.addf %157, %159 : vector<16x128xf32>
    %161 = arith.addf %160, %100 : vector<16x128xf32>
    %cst_64 = arith.constant dense<0.000000e+00> : vector<16xf32>
    %162 = vector.multi_reduction <add>, %161, %cst_64 [1] : vector<16x128xf32> to vector<16xf32>
    %163 = vector.shape_cast %162 : vector<16xf32> to vector<16x1xf32>
    %cst_65 = arith.constant 1.562500e-02 : f32
    %164 = vector.broadcast %cst_65 : f32 to vector<16x1xf32>
    %165 = arith.mulf %163, %164 : vector<16x1xf32>
    %166 = vector.broadcast %165 : vector<16x1xf32> to vector<16x128xf32>
    %167 = arith.subf %161, %166 : vector<16x128xf32>
    %168 = arith.mulf %167, %167 : vector<16x128xf32>
    %cst_66 = arith.constant dense<0.000000e+00> : vector<16xf32>
    %169 = vector.multi_reduction <add>, %168, %cst_66 [1] : vector<16x128xf32> to vector<16xf32>
    %170 = vector.shape_cast %169 : vector<16xf32> to vector<16x1xf32>
    %cst_67 = arith.constant 6.400000e+01 : f32
    %171 = vector.broadcast %cst_67 : f32 to vector<16x1xf32>
    %172 = arith.mulf %171, %165 : vector<16x1xf32>
    %173 = arith.mulf %172, %165 : vector<16x1xf32>
    %174 = arith.subf %170, %173 : vector<16x1xf32>
    %cst_68 = arith.constant 1.562500e-02 : f32
    %175 = vector.broadcast %cst_68 : f32 to vector<16x1xf32>
    %176 = arith.mulf %174, %175 : vector<16x1xf32>
    %cst_69 = arith.constant 0.000000e+00 : f32
    %177 = vector.broadcast %cst_69 : f32 to vector<16x1xf32>
    %178 = arith.maximumf %176, %177 : vector<16x1xf32>
    %cst_70 = arith.constant 9.99999974E-6 : f32
    %179 = vector.broadcast %cst_70 : f32 to vector<16x1xf32>
    %180 = arith.addf %178, %179 : vector<16x1xf32>
    %181 = math.rsqrt %180 : vector<16x1xf32>
    %182 = vector.broadcast %181 : vector<16x1xf32> to vector<16x128xf32>
    %183 = arith.mulf %167, %182 : vector<16x128xf32>
    %184 = vector.extract_strided_slice %12 {offsets = [1, 0], sizes = [1, 128], strides = [1, 1]} : vector<3x128xf32> to vector<1x128xf32>
    %185 = vector.broadcast %184 : vector<1x128xf32> to vector<16x128xf32>
    %186 = arith.mulf %183, %185 : vector<16x128xf32>
    %187 = vector.extract_strided_slice %14 {offsets = [1, 0], sizes = [1, 128], strides = [1, 1]} : vector<3x128xf32> to vector<1x128xf32>
    %188 = vector.broadcast %187 : vector<1x128xf32> to vector<16x128xf32>
    %189 = arith.addf %186, %188 : vector<16x128xf32>
    %190 = arith.truncf %189 : vector<16x128xf32> to vector<16x128xbf16>
    %c0_71 = arith.constant 0 : index
    %c0_72 = arith.constant 0 : index
    %c0_73 = arith.constant 0 : index
    %191 = vector.load %arg13[%c0_71, %c0_72, %c0_73] : memref<1x128x256xbf16, #tpu.memory_space<vmem>>, vector<1x128x256xbf16>
    %192 = vector.shape_cast %191 : vector<1x128x256xbf16> to vector<128x256xbf16>
    %cst_74 = arith.constant dense<0.000000e+00> : vector<16x256xf32>
    %193 = tpu.matmul %190, %192, %cst_74 {dimension_numbers = #tpu.dot_dimension_numbers<[1], [0], [0], [1], [0, 0, 1, 1], [], []>} : vector<16x128xbf16>, vector<128x256xbf16>, vector<16x256xf32> -> vector<16x256xf32>
    %c0_75 = arith.constant 0 : index
    %c0_76 = arith.constant 0 : index
    %c0_77 = arith.constant 0 : index
    %194 = vector.load %arg14[%c0_75, %c0_76, %c0_77] : memref<1x1x256xf32, #tpu.memory_space<vmem>>, vector<1x1x256xf32>
    %195 = vector.shape_cast %194 : vector<1x1x256xf32> to vector<1x256xf32>
    %196 = vector.broadcast %195 : vector<1x256xf32> to vector<16x256xf32>
    %197 = arith.addf %193, %196 : vector<16x256xf32>
    %cst_78 = arith.constant 0.000000e+00 : f32
    %198 = vector.broadcast %cst_78 : f32 to vector<16x256xf32>
    %199 = arith.maximumf %197, %198 : vector<16x256xf32>
    %200 = arith.truncf %199 : vector<16x256xf32> to vector<16x256xbf16>
    %c0_79 = arith.constant 0 : index
    %c0_80 = arith.constant 0 : index
    %c0_81 = arith.constant 0 : index
    %201 = vector.load %arg15[%c0_79, %c0_80, %c0_81] : memref<1x256x128xbf16, #tpu.memory_space<vmem>>, vector<1x256x128xbf16>
    %202 = vector.shape_cast %201 : vector<1x256x128xbf16> to vector<256x128xbf16>
    %cst_82 = arith.constant dense<0.000000e+00> : vector<16x128xf32>
    %203 = tpu.matmul %200, %202, %cst_82 {dimension_numbers = #tpu.dot_dimension_numbers<[1], [0], [0], [1], [0, 0, 1, 1], [], []>} : vector<16x256xbf16>, vector<256x128xbf16>, vector<16x128xf32> -> vector<16x128xf32>
    %c0_83 = arith.constant 0 : index
    %c0_84 = arith.constant 0 : index
    %c0_85 = arith.constant 0 : index
    %204 = vector.load %arg16[%c0_83, %c0_84, %c0_85] : memref<1x1x128xf32, #tpu.memory_space<vmem>>, vector<1x1x128xf32>
    %205 = vector.shape_cast %204 : vector<1x1x128xf32> to vector<1x128xf32>
    %206 = vector.broadcast %205 : vector<1x128xf32> to vector<16x128xf32>
    %207 = arith.addf %203, %206 : vector<16x128xf32>
    %208 = arith.addf %207, %189 : vector<16x128xf32>
    %cst_86 = arith.constant dense<0.000000e+00> : vector<16xf32>
    %209 = vector.multi_reduction <add>, %208, %cst_86 [1] : vector<16x128xf32> to vector<16xf32>
    %210 = vector.shape_cast %209 : vector<16xf32> to vector<16x1xf32>
    %cst_87 = arith.constant 1.562500e-02 : f32
    %211 = vector.broadcast %cst_87 : f32 to vector<16x1xf32>
    %212 = arith.mulf %210, %211 : vector<16x1xf32>
    %213 = vector.broadcast %212 : vector<16x1xf32> to vector<16x128xf32>
    %214 = arith.subf %208, %213 : vector<16x128xf32>
    %215 = arith.mulf %214, %214 : vector<16x128xf32>
    %cst_88 = arith.constant dense<0.000000e+00> : vector<16xf32>
    %216 = vector.multi_reduction <add>, %215, %cst_88 [1] : vector<16x128xf32> to vector<16xf32>
    %217 = vector.shape_cast %216 : vector<16xf32> to vector<16x1xf32>
    %cst_89 = arith.constant 6.400000e+01 : f32
    %218 = vector.broadcast %cst_89 : f32 to vector<16x1xf32>
    %219 = arith.mulf %218, %212 : vector<16x1xf32>
    %220 = arith.mulf %219, %212 : vector<16x1xf32>
    %221 = arith.subf %217, %220 : vector<16x1xf32>
    %cst_90 = arith.constant 1.562500e-02 : f32
    %222 = vector.broadcast %cst_90 : f32 to vector<16x1xf32>
    %223 = arith.mulf %221, %222 : vector<16x1xf32>
    %cst_91 = arith.constant 0.000000e+00 : f32
    %224 = vector.broadcast %cst_91 : f32 to vector<16x1xf32>
    %225 = arith.maximumf %223, %224 : vector<16x1xf32>
    %cst_92 = arith.constant 9.99999974E-6 : f32
    %226 = vector.broadcast %cst_92 : f32 to vector<16x1xf32>
    %227 = arith.addf %225, %226 : vector<16x1xf32>
    %228 = math.rsqrt %227 : vector<16x1xf32>
    %229 = vector.broadcast %228 : vector<16x1xf32> to vector<16x128xf32>
    %230 = arith.mulf %214, %229 : vector<16x128xf32>
    %231 = vector.extract_strided_slice %12 {offsets = [2, 0], sizes = [1, 128], strides = [1, 1]} : vector<3x128xf32> to vector<1x128xf32>
    %232 = vector.broadcast %231 : vector<1x128xf32> to vector<16x128xf32>
    %233 = arith.mulf %230, %232 : vector<16x128xf32>
    %234 = vector.extract_strided_slice %14 {offsets = [2, 0], sizes = [1, 128], strides = [1, 1]} : vector<3x128xf32> to vector<1x128xf32>
    %235 = vector.broadcast %234 : vector<1x128xf32> to vector<16x128xf32>
    %236 = arith.addf %233, %235 : vector<16x128xf32>
    %c0_93 = arith.constant 0 : index
    %c0_94 = arith.constant 0 : index
    %237 = vector.load %arg20[%c0_93, %c0_94] : memref<16x128xf32, #tpu.memory_space<vmem>>, vector<16x128xf32>
    tpu.vector_store %arg20[%c0_93, %c0_94], %236 {strides = array<i32>} : memref<16x128xf32, #tpu.memory_space<vmem>>, vector<16x128xf32>,
    %c1_i32 = arith.constant 1 : i32
    %238 = arith.cmpi eq, %arg0, %c1_i32 : i32
    %239 = arith.extui %238 : i1 to i32
    %c0_i32_95 = arith.constant 0 : i32
    %240 = arith.cmpi ne, %239, %c0_i32_95 : i32
    scf.if %240 {
      %241 = arith.truncf %236 : vector<16x128xf32> to vector<16x128xbf16>
      %c0_96 = arith.constant 0 : index
      %c0_97 = arith.constant 0 : index
      %242 = vector.load %arg17[%c0_96, %c0_97] : memref<128x128xbf16, #tpu.memory_space<vmem>>, vector<128x128xbf16>
      %cst_98 = arith.constant dense<0.000000e+00> : vector<16x128xf32>
      %243 = tpu.matmul %241, %242, %cst_98 {dimension_numbers = #tpu.dot_dimension_numbers<[1], [0], [0], [1], [0, 0, 1, 1], [], []>} : vector<16x128xbf16>, vector<128x128xbf16>, vector<16x128xf32> -> vector<16x128xf32>
      %c0_99 = arith.constant 0 : index
      %c0_100 = arith.constant 0 : index
      %244 = vector.load %arg18[%c0_99, %c0_100] : memref<1x128xf32, #tpu.memory_space<vmem>>, vector<1x128xf32>
      %245 = vector.broadcast %244 : vector<1x128xf32> to vector<16x128xf32>
      %246 = arith.addf %243, %245 : vector<16x128xf32>
      %247 = vector.extract_strided_slice %246 {offsets = [0, 0], sizes = [8, 128], strides = [1, 1]} : vector<16x128xf32> to vector<8x128xf32>
      %248 = vector.extract_strided_slice %246 {offsets = [8, 0], sizes = [8, 128], strides = [1, 1]} : vector<16x128xf32> to vector<8x128xf32>
      %249 = arith.maximumf %247, %248 : vector<8x128xf32>
      %250 = arith.subf %247, %249 : vector<8x128xf32>
      %251 = math.exp %250 : vector<8x128xf32>
      %252 = arith.subf %248, %249 : vector<8x128xf32>
      %253 = math.exp %252 : vector<8x128xf32>
      %254 = arith.addf %251, %253 : vector<8x128xf32>
      %255 = arith.divf %251, %254 : vector<8x128xf32>
      %c0_101 = arith.constant 0 : index
      %c0_102 = arith.constant 0 : index
      %c0_103 = arith.constant 0 : index
      %256 = vector.load %arg19[%c0_101, %c0_102, %c0_103] : memref<2x8x128xf32, #tpu.memory_space<vmem>>, vector<1x8x128xf32>
      %257 = vector.shape_cast %256 : vector<1x8x128xf32> to vector<8x128xf32>
      %258 = vector.shape_cast %255 : vector<8x128xf32> to vector<1x8x128xf32>
      tpu.vector_store %arg19[%c0_101, %c0_102, %c0_103], %258 {strides = array<i32>} : memref<2x8x128xf32, #tpu.memory_space<vmem>>, vector<1x8x128xf32>,
      %259 = arith.divf %253, %254 : vector<8x128xf32>
      %c1_104 = arith.constant 1 : index
      %c0_105 = arith.constant 0 : index
      %c0_106 = arith.constant 0 : index
      %260 = vector.load %arg19[%c1_104, %c0_105, %c0_106] : memref<2x8x128xf32, #tpu.memory_space<vmem>>, vector<1x8x128xf32>
      %261 = vector.shape_cast %260 : vector<1x8x128xf32> to vector<8x128xf32>
      %262 = vector.shape_cast %259 : vector<8x128xf32> to vector<1x8x128xf32>
      tpu.vector_store %arg19[%c1_104, %c0_105, %c0_106], %262 {strides = array<i32>} : memref<2x8x128xf32, #tpu.memory_space<vmem>>, vector<1x8x128xf32>,
    } else {
    }
    return
  }
  func.func @transform_0(%arg0: i32) -> (i32, i32) {
    %c0_i32 = arith.constant 0 : i32
    %c0_i32_0 = arith.constant 0 : i32
    %c0_i32_1 = arith.constant 0 : i32
    return %c0_i32, %c0_i32_0 : i32, i32
  }
  func.func @transform_1(%arg0: i32) -> (i32, i32) {
    %c0_i32 = arith.constant 0 : i32
    %c0_i32_0 = arith.constant 0 : i32
    %c0_i32_1 = arith.constant 0 : i32
    return %c0_i32, %c0_i32_0 : i32, i32
  }
  func.func @transform_2(%arg0: i32) -> (i32, i32) {
    %c0_i32 = arith.constant 0 : i32
    %c0_i32_0 = arith.constant 0 : i32
    %c0_i32_1 = arith.constant 0 : i32
    return %c0_i32, %c0_i32_0 : i32, i32
  }
  func.func @transform_3(%arg0: i32) -> (i32, i32, i32) {
    %c0_i32 = arith.constant 0 : i32
    %c0_i32_0 = arith.constant 0 : i32
    %c0_i32_1 = arith.constant 0 : i32
    %c0_i32_2 = arith.constant 0 : i32
    return %c0_i32, %c0_i32_0, %c0_i32_1 : i32, i32, i32
  }
  func.func @transform_4(%arg0: i32) -> (i32, i32, i32) {
    %c0_i32 = arith.constant 0 : i32
    %c0_i32_0 = arith.constant 0 : i32
    %c0_i32_1 = arith.constant 0 : i32
    return %arg0, %c0_i32, %c0_i32_0 : i32, i32, i32
  }
  func.func @transform_5(%arg0: i32) -> (i32, i32, i32) {
    %c0_i32 = arith.constant 0 : i32
    %c0_i32_0 = arith.constant 0 : i32
    %c0_i32_1 = arith.constant 0 : i32
    return %arg0, %c0_i32, %c0_i32_0 : i32, i32, i32
  }
  func.func @transform_6(%arg0: i32) -> (i32, i32, i32) {
    %c0_i32 = arith.constant 0 : i32
    %c0_i32_0 = arith.constant 0 : i32
    %c0_i32_1 = arith.constant 0 : i32
    return %arg0, %c0_i32, %c0_i32_0 : i32, i32, i32
  }
  func.func @transform_7(%arg0: i32) -> (i32, i32, i32) {
    %c0_i32 = arith.constant 0 : i32
    %c0_i32_0 = arith.constant 0 : i32
    %c0_i32_1 = arith.constant 0 : i32
    return %arg0, %c0_i32, %c0_i32_0 : i32, i32, i32
  }
  func.func @transform_8(%arg0: i32) -> (i32, i32, i32, i32) {
    %c0_i32 = arith.constant 0 : i32
    %c0_i32_0 = arith.constant 0 : i32
    %c0_i32_1 = arith.constant 0 : i32
    %c0_i32_2 = arith.constant 0 : i32
    return %arg0, %c0_i32, %c0_i32_0, %c0_i32_1 : i32, i32, i32, i32
  }
  func.func @transform_9(%arg0: i32) -> (i32, i32, i32) {
    %c0_i32 = arith.constant 0 : i32
    %c0_i32_0 = arith.constant 0 : i32
    %c0_i32_1 = arith.constant 0 : i32
    return %arg0, %c0_i32, %c0_i32_0 : i32, i32, i32
  }
  func.func @transform_10(%arg0: i32) -> (i32, i32, i32) {
    %c0_i32 = arith.constant 0 : i32
    %c0_i32_0 = arith.constant 0 : i32
    %c0_i32_1 = arith.constant 0 : i32
    return %arg0, %c0_i32, %c0_i32_0 : i32, i32, i32
  }
  func.func @transform_11(%arg0: i32) -> (i32, i32, i32) {
    %c0_i32 = arith.constant 0 : i32
    %c0_i32_0 = arith.constant 0 : i32
    %c0_i32_1 = arith.constant 0 : i32
    return %arg0, %c0_i32, %c0_i32_0 : i32, i32, i32
  }
  func.func @transform_12(%arg0: i32) -> (i32, i32, i32) {
    %c0_i32 = arith.constant 0 : i32
    %c0_i32_0 = arith.constant 0 : i32
    %c0_i32_1 = arith.constant 0 : i32
    return %arg0, %c0_i32, %c0_i32_0 : i32, i32, i32
  }
  func.func @transform_13(%arg0: i32) -> (i32, i32, i32) {
    %c0_i32 = arith.constant 0 : i32
    %c0_i32_0 = arith.constant 0 : i32
    %c0_i32_1 = arith.constant 0 : i32
    return %arg0, %c0_i32, %c0_i32_0 : i32, i32, i32
  }
  func.func @transform_14(%arg0: i32) -> (i32, i32, i32) {
    %c0_i32 = arith.constant 0 : i32
    %c0_i32_0 = arith.constant 0 : i32
    %c0_i32_1 = arith.constant 0 : i32
    return %arg0, %c0_i32, %c0_i32_0 : i32, i32, i32
  }
  func.func @transform_15(%arg0: i32) -> (i32, i32, i32) {
    %c0_i32 = arith.constant 0 : i32
    %c0_i32_0 = arith.constant 0 : i32
    %c0_i32_1 = arith.constant 0 : i32
    return %arg0, %c0_i32, %c0_i32_0 : i32, i32, i32
  }
  func.func @transform_16(%arg0: i32) -> (i32, i32) {
    %c0_i32 = arith.constant 0 : i32
    %c0_i32_0 = arith.constant 0 : i32
    %c0_i32_1 = arith.constant 0 : i32
    return %c0_i32, %c0_i32_0 : i32, i32
  }
  func.func @transform_17(%arg0: i32) -> (i32, i32) {
    %c0_i32 = arith.constant 0 : i32
    %c0_i32_0 = arith.constant 0 : i32
    %c0_i32_1 = arith.constant 0 : i32
    return %c0_i32, %c0_i32_0 : i32, i32
  }
  func.func @transform_18(%arg0: i32) -> (i32, i32, i32) {
    %c0_i32 = arith.constant 0 : i32
    %c0_i32_0 = arith.constant 0 : i32
    %c0_i32_1 = arith.constant 0 : i32
    %c0_i32_2 = arith.constant 0 : i32
    return %c0_i32, %c0_i32_0, %c0_i32_1 : i32, i32, i32
  }
}

</mosaic_0001>

<llo_original>
// kernel: tpu_custom_call.1
$region0: #{tpu_custom_call.1}
  #allocation0 [shape = 'u32[]', space=smem, size = 0x4, offset = 0x4, fixed_abs, tag = 'smem constant byte address 0x4 - core index']
  #allocation1 [shape = 'u32[144,128]{1,0:T(1,128)}', space=vmem, size = 0x12000, scoped, tag = 'internal scratch']
  #allocation2 [shape = 'f32[16,128]{1,0:T(8,128)}', space=vmem, size = 0x2000, scoped, tag = 'scratch operand']
  %s0 = inlined_call_operand.vmem [shape: f32[16,128], index: 0, kind: input, shape index: {}]
  %s1 = inlined_call_operand.hbm [shape: f32[16,128], index: 1, kind: input, shape index: {}]
  %s2 = inlined_call_operand.hbm [shape: f32[128,128], index: 2, kind: input, shape index: {}]
  %s3 = inlined_call_operand.vmem [shape: f32[2,128,16], index: 3, kind: input, shape index: {}]
  %s4 = inlined_call_operand.hbm [shape: bf16[2,128,384], index: 4, kind: input, shape index: {}]
  %s5 = inlined_call_operand.hbm [shape: f32[2,1,384], index: 5, kind: input, shape index: {}]
  %s6 = inlined_call_operand.vmem [shape: bf16[2,128,256], index: 6, kind: input, shape index: {}]
  %s7 = inlined_call_operand.hbm [shape: f32[2,1,256], index: 7, kind: input, shape index: {}]
  %s8 = inlined_call_operand.hbm [shape: bf16[2,3,128,128], index: 8, kind: input, shape index: {}]
  %s9 = inlined_call_operand.vmem [shape: f32[2,3,128], index: 9, kind: input, shape index: {}]
  %s10 = inlined_call_operand.vmem [shape: f32[2,3,128], index: 10, kind: input, shape index: {}]
  %s11 = inlined_call_operand.vmem [shape: f32[2,3,128], index: 11, kind: input, shape index: {}]
  %s12 = inlined_call_operand.hbm [shape: bf16[2,128,256], index: 12, kind: input, shape index: {}]
  %s13 = inlined_call_operand.hbm [shape: f32[2,1,256], index: 13, kind: input, shape index: {}]
  %s14 = inlined_call_operand.hbm [shape: bf16[2,256,128], index: 14, kind: input, shape index: {}]
  %s15 = inlined_call_operand.vmem [shape: f32[2,1,128], index: 15, kind: input, shape index: {}]
  %s16 = inlined_call_operand.vmem [shape: bf16[128,128], index: 16, kind: input, shape index: {}]
  %s17 = inlined_call_operand.vmem [shape: f32[1,128], index: 17, kind: input, shape index: {}]
  %s18 = inlined_call_operand.hbm [shape: f32[2,8,128], index: 18, kind: output, shape index: {}]
  %s19 = sld [smem:[#allocation0]]
  $region149: #{tpu_custom_call.1} parent=0
    _
  %s21 = ssub.s32 1, %s19
  %s22 = scalar_select 0, %s21, %s19
  $region1: #{tpu_custom_call.1} parent=0
    #allocation3 [shape = 'u8[8192]{0}', space=vmem, size = 0x2000, scoped, tag = 'input window, operand 1, single buffered']
    #allocation4 [shape = 's32[2]{0}', space=sflag, size = 0x8, scoped, tag = 'scoped memory for tpu_custom_call.1']
    #allocation5 [shape = 's32[2]{0}', space=sflag, size = 0x8, scoped, tag = 'scoped memory for tpu_custom_call.1']
    #allocation6 [shape = 'u8[65536]{0}', space=vmem, size = 0x10000, scoped, tag = 'input window, operand 2, single buffered']
    #allocation7 [shape = 's32[1]{0}', space=sflag, size = 0x4, scoped, tag = 'scoped memory for tpu_custom_call.1']
    #allocation8 [shape = 'u8[196608]{0}', space=vmem, size = 0x30000, scoped, tag = 'input window, operand 4']
    #allocation9 [shape = 'u8[3072]{0}', space=vmem, size = 0xc00, scoped, tag = 'input window, operand 5']
    #allocation10 [shape = 'u8[2048]{0}', space=vmem, size = 0x800, scoped, tag = 'input window, operand 7']
    #allocation11 [shape = 'u8[196608]{0}', space=vmem, size = 0x30000, scoped, tag = 'input window, operand 8']
    #allocation12 [shape = 'u8[131072]{0}', space=vmem, size = 0x20000, scoped, tag = 'input window, operand 12']
    #allocation13 [shape = 'u8[2048]{0}', space=vmem, size = 0x800, scoped, tag = 'input window, operand 13']
    #allocation14 [shape = 'u8[131072]{0}', space=vmem, size = 0x20000, scoped, tag = 'input window, operand 14']
    #allocation15 [shape = 'u8[8192]{0}', space=vmem, size = 0x2000, scoped, tag = 'output window, operand 0, single buffered']
    %23 = vsyncpa [#allocation4], 0
    %24 = vsyncpa [#allocation7], 0
    %25 = vsyncpa [#allocation5], 0
    loop: start=0, step=1, limit=4
    $region2: #{tpu_custom_call.1} parent=1 // loop_pre_header
      _
    $region3: #{tpu_custom_call.1} parent=1 // loop_header
      %s27 = sphi 0, %s31
      %p28 = scmp.ge.s32.totalorder %s27, 4
      %s35 = sphi 0, %s35
      %s37 = sphi 0, %s35
      %s38 = sphi 0, %s37
      %s52 = sphi 0, %s38
      %s56 = sphi 0, %s56
      %s58 = sphi 0, %s56
      %s59 = sphi 0, %s58
      %s73 = sphi 0, %s59
      %s77 = sphi 0, %s77
      %s79 = sphi 0, %s77
      %s80 = sphi 0, %s79
      %s94 = sphi 0, %s80
      %s98 = sphi 0, %s98
      %s100 = sphi 0, %s98
      %s101 = sphi 0, %s100
      %s115 = sphi 0, %s101
      %s121 = sphi 0, %s123
      %s124 = sphi 0, %s121
      %s125 = sphi 0, %s124
      %s141 = sphi 0, %s125
      %s147 = sphi 0, %s149
      %s150 = sphi 0, %s147
      %s151 = sphi 0, %s150
      %s167 = sphi 0, %s151
      %s173 = sphi 0, %s175
      %s176 = sphi 0, %s173
      %s177 = sphi 0, %s176
      %s193 = sphi 0, %s177
      %s199 = sphi 0, %s201
      %s202 = sphi 0, %s199
      %s203 = sphi 0, %s202
      %s219 = sphi 0, %s203
      %s225 = sphi 0, %s227
      %s228 = sphi 0, %s225
      %s229 = sphi 0, %s228
      %s245 = sphi 0, %s229
      %s251 = sphi 0, %s253
      %s254 = sphi 0, %s251
      %s255 = sphi 0, %s254
      %s271 = sphi 0, %s255
      %s277 = sphi 0, %s279
      %s280 = sphi 0, %s277
      %s281 = sphi 0, %s280
      %s297 = sphi 0, %s281
      %s303 = sphi 0, %s305
      %s306 = sphi 0, %s303
      %s307 = sphi 0, %s306
      %s323 = sphi 0, %s307
      %s329 = sphi 0, %s331
      %s332 = sphi 0, %s329
      %s333 = sphi 0, %s332
      %s349 = sphi 0, %s333
      %s355 = sphi 0, %s357
      %s358 = sphi 0, %s355
      %s359 = sphi 0, %s358
      %s375 = sphi 0, %s359
      %s381 = sphi 0, %s383
      %s384 = sphi 0, %s381
      %s385 = sphi 0, %s384
      %s401 = sphi 0, %s385
      %s407 = sphi 0, %s409
      %s410 = sphi 0, %s407
      %s411 = sphi 0, %s410
      %s427 = sphi 0, %s411
      %s431 = sphi 0, %s431
      %s433 = sphi 0, %s431
      %s434 = sphi 0, %s433
      %s448 = sphi 0, %s434
      %s452 = sphi 0, %s452
      %s454 = sphi 0, %s452
      %s455 = sphi 0, %s454
      %s469 = sphi 0, %s455
      %s473 = sphi 0, %s473
      %s475 = sphi 0, %s473
      %s476 = sphi 0, %s475
      %s490 = sphi 0, %s476
    $region4: #{tpu_custom_call.1} parent=1 // loop_header_branch
      %30 = sbr.rel (%p28) target = $region8
    $region5: #{tpu_custom_call.1} parent=1 // loop_body
      %s32 = ssub.s32 %s27, 1
      %s33 = ssub.s32 %s27, 2
      %s34 = sadd.s32 %s27, 1
      %s36 = sadd.s32 %s35, 1
      %p39 = scmp.eq.s32.totalorder %s27, 1
      %p40 = scmp.ne.s32.totalorder %s35, %s37
      %p41 = scmp.eq.s32.totalorder %s27, 0
      %p42 = por %p40, %p41
      %p43 = scmp.ne.s32.totalorder %s35, %s37
      %p44 = scmp.eq.s32.totalorder %s32, 1
      %p45 = por %p43, %p44
      %p46 = scmp.ne.s32.totalorder %s37, %s38
      %p47 = scmp.eq.s32.totalorder %s32, 0
      %p48 = por %p46, %p47
      %p49 = scmp.ne.s32.totalorder %s37, %s38
      %p50 = scmp.eq.s32.totalorder %s33, 1
      %p51 = por %p49, %p50
      %p53 = scmp.ne.s32.totalorder %s38, %s52
      %p54 = scmp.eq.s32.totalorder %s33, 0
      %p55 = por %p53, %p54
      %s57 = sadd.s32 %s56, 1
      %p60 = scmp.eq.s32.totalorder %s27, 1
      %p61 = scmp.ne.s32.totalorder %s56, %s58
      %p62 = scmp.eq.s32.totalorder %s27, 0
      %p63 = por %p61, %p62
      %p64 = scmp.ne.s32.totalorder %s56, %s58
      %p65 = scmp.eq.s32.totalorder %s32, 1
      %p66 = por %p64, %p65
      %p67 = scmp.ne.s32.totalorder %s58, %s59
      %p68 = scmp.eq.s32.totalorder %s32, 0
      %p69 = por %p67, %p68
      %p70 = scmp.ne.s32.totalorder %s58, %s59
      %p71 = scmp.eq.s32.totalorder %s33, 1
      %p72 = por %p70, %p71
      %p74 = scmp.ne.s32.totalorder %s59, %s73
      %p75 = scmp.eq.s32.totalorder %s33, 0
      %p76 = por %p74, %p75
      %s78 = sadd.s32 %s77, 1
      %p81 = scmp.eq.s32.totalorder %s27, 1
      %p82 = scmp.ne.s32.totalorder %s77, %s79
      %p83 = scmp.eq.s32.totalorder %s27, 0
      %p84 = por %p82, %p83
      %p85 = scmp.ne.s32.totalorder %s77, %s79
      %p86 = scmp.eq.s32.totalorder %s32, 1
      %p87 = por %p85, %p86
      %p88 = scmp.ne.s32.totalorder %s79, %s80
      %p89 = scmp.eq.s32.totalorder %s32, 0
      %p90 = por %p88, %p89
      %p91 = scmp.ne.s32.totalorder %s79, %s80
      %p92 = scmp.eq.s32.totalorder %s33, 1
      %p93 = por %p91, %p92
      %p95 = scmp.ne.s32.totalorder %s80, %s94
      %p96 = scmp.eq.s32.totalorder %s33, 0
      %p97 = por %p95, %p96
      %s99 = sadd.s32 %s98, 1
      %p102 = scmp.eq.s32.totalorder %s27, 1
      %p103 = scmp.ne.s32.totalorder %s98, %s100
      %p104 = scmp.eq.s32.totalorder %s27, 0
      %p105 = por %p103, %p104
      %p106 = scmp.ne.s32.totalorder %s98, %s100
      %p107 = scmp.eq.s32.totalorder %s32, 1
      %p108 = por %p106, %p107
      %p109 = scmp.ne.s32.totalorder %s100, %s101
      %p110 = scmp.eq.s32.totalorder %s32, 0
      %p111 = por %p109, %p110
      %p112 = scmp.ne.s32.totalorder %s100, %s101
      %p113 = scmp.eq.s32.totalorder %s33, 1
      %p114 = por %p112, %p113
      %p116 = scmp.ne.s32.totalorder %s101, %s115
      %p117 = scmp.eq.s32.totalorder %s33, 0
      %p118 = por %p116, %p117
      %s119 = ssub.s32 %s27, %s34
      %p120 = scmp.eq.s32.totalorder %s119, 0
      %s122 = sadd.s32 %s121, 1
      %s123 = scalar_select %p120, %s121, %s122
      %p126 = pneg %p120
      %p127 = scmp.eq.s32.totalorder %s27, 1
      %p128 = por %p126, %p127
      %p129 = scmp.ne.s32.totalorder %s121, %s124
      %p130 = scmp.eq.s32.totalorder %s27, 0
      %p131 = por %p129, %p130
      %p132 = scmp.ne.s32.totalorder %s121, %s124
      %p133 = scmp.eq.s32.totalorder %s32, 1
      %p134 = por %p132, %p133
      %p135 = scmp.ne.s32.totalorder %s124, %s125
      %p136 = scmp.eq.s32.totalorder %s32, 0
      %p137 = por %p135, %p136
      %p138 = scmp.ne.s32.totalorder %s124, %s125
      %p139 = scmp.eq.s32.totalorder %s33, 1
      %p140 = por %p138, %p139
      %p142 = scmp.ne.s32.totalorder %s125, %s141
      %p143 = scmp.eq.s32.totalorder %s33, 0
      %p144 = por %p142, %p143
      %s145 = ssub.s32 %s27, %s34
      %p146 = scmp.eq.s32.totalorder %s145, 0
      %s148 = sadd.s32 %s147, 1
      %s149 = scalar_select %p146, %s147, %s148
      %p152 = pneg %p146
      %p153 = scmp.eq.s32.totalorder %s27, 1
      %p154 = por %p152, %p153
      %p155 = scmp.ne.s32.totalorder %s147, %s150
      %p156 = scmp.eq.s32.totalorder %s27, 0
      %p157 = por %p155, %p156
      %p158 = scmp.ne.s32.totalorder %s147, %s150
      %p159 = scmp.eq.s32.totalorder %s32, 1
      %p160 = por %p158, %p159
      %p161 = scmp.ne.s32.totalorder %s150, %s151
      %p162 = scmp.eq.s32.totalorder %s32, 0
      %p163 = por %p161, %p162
      %p164 = scmp.ne.s32.totalorder %s150, %s151
      %p165 = scmp.eq.s32.totalorder %s33, 1
      %p166 = por %p164, %p165
      %p168 = scmp.ne.s32.totalorder %s151, %s167
      %p169 = scmp.eq.s32.totalorder %s33, 0
      %p170 = por %p168, %p169
      %s171 = ssub.s32 %s27, %s34
      %p172 = scmp.eq.s32.totalorder %s171, 0
      %s174 = sadd.s32 %s173, 1
      %s175 = scalar_select %p172, %s173, %s174
      %p178 = pneg %p172
      %p179 = scmp.eq.s32.totalorder %s27, 1
      %p180 = por %p178, %p179
      %p181 = scmp.ne.s32.totalorder %s173, %s176
      %p182 = scmp.eq.s32.totalorder %s27, 0
      %p183 = por %p181, %p182
      %p184 = scmp.ne.s32.totalorder %s173, %s176
      %p185 = scmp.eq.s32.totalorder %s32, 1
      %p186 = por %p184, %p185
      %p187 = scmp.ne.s32.totalorder %s176, %s177
      %p188 = scmp.eq.s32.totalorder %s32, 0
      %p189 = por %p187, %p188
      %p190 = scmp.ne.s32.totalorder %s176, %s177
      %p191 = scmp.eq.s32.totalorder %s33, 1
      %p192 = por %p190, %p191
      %p194 = scmp.ne.s32.totalorder %s177, %s193
      %p195 = scmp.eq.s32.totalorder %s33, 0
      %p196 = por %p194, %p195
      %s197 = ssub.s32 %s27, %s34
      %p198 = scmp.eq.s32.totalorder %s197, 0
      %s200 = sadd.s32 %s199, 1
      %s201 = scalar_select %p198, %s199, %s200
      %p204 = pneg %p198
      %p205 = scmp.eq.s32.totalorder %s27, 1
      %p206 = por %p204, %p205
      %p207 = scmp.ne.s32.totalorder %s199, %s202
      %p208 = scmp.eq.s32.totalorder %s27, 0
      %p209 = por %p207, %p208
      %p210 = scmp.ne.s32.totalorder %s199, %s202
      %p211 = scmp.eq.s32.totalorder %s32, 1
      %p212 = por %p210, %p211
      %p213 = scmp.ne.s32.totalorder %s202, %s203
      %p214 = scmp.eq.s32.totalorder %s32, 0
      %p215 = por %p213, %p214
      %p216 = scmp.ne.s32.totalorder %s202, %s203
      %p217 = scmp.eq.s32.totalorder %s33, 1
      %p218 = por %p216, %p217
      %p220 = scmp.ne.s32.totalorder %s203, %s219
      %p221 = scmp.eq.s32.totalorder %s33, 0
      %p222 = por %p220, %p221
      %s223 = ssub.s32 %s27, %s34
      %p224 = scmp.eq.s32.totalorder %s223, 0
      %s226 = sadd.s32 %s225, 1
      %s227 = scalar_select %p224, %s225, %s226
      %p230 = pneg %p224
      %p231 = scmp.eq.s32.totalorder %s27, 1
      %p232 = por %p230, %p231
      %p233 = scmp.ne.s32.totalorder %s225, %s228
      %p234 = scmp.eq.s32.totalorder %s27, 0
      %p235 = por %p233, %p234
      %p236 = scmp.ne.s32.totalorder %s225, %s228
      %p237 = scmp.eq.s32.totalorder %s32, 1
      %p238 = por %p236, %p237
      %p239 = scmp.ne.s32.totalorder %s228, %s229
      %p240 = scmp.eq.s32.totalorder %s32, 0
      %p241 = por %p239, %p240
      %p242 = scmp.ne.s32.totalorder %s228, %s229
      %p243 = scmp.eq.s32.totalorder %s33, 1
      %p244 = por %p242, %p243
      %p246 = scmp.ne.s32.totalorder %s229, %s245
      %p247 = scmp.eq.s32.totalorder %s33, 0
      %p248 = por %p246, %p247
      %s249 = ssub.s32 %s27, %s34
      %p250 = scmp.eq.s32.totalorder %s249, 0
      %s252 = sadd.s32 %s251, 1
      %s253 = scalar_select %p250, %s251, %s252
      %p256 = pneg %p250
      %p257 = scmp.eq.s32.totalorder %s27, 1
      %p258 = por %p256, %p257
      %p259 = scmp.ne.s32.totalorder %s251, %s254
      %p260 = scmp.eq.s32.totalorder %s27, 0
      %p261 = por %p259, %p260
      %p262 = scmp.ne.s32.totalorder %s251, %s254
      %p263 = scmp.eq.s32.totalorder %s32, 1
      %p264 = por %p262, %p263
      %p265 = scmp.ne.s32.totalorder %s254, %s255
      %p266 = scmp.eq.s32.totalorder %s32, 0
      %p267 = por %p265, %p266
      %p268 = scmp.ne.s32.totalorder %s254, %s255
      %p269 = scmp.eq.s32.totalorder %s33, 1
      %p270 = por %p268, %p269
      %p272 = scmp.ne.s32.totalorder %s255, %s271
      %p273 = scmp.eq.s32.totalorder %s33, 0
      %p274 = por %p272, %p273
      %s275 = ssub.s32 %s27, %s34
      %p276 = scmp.eq.s32.totalorder %s275, 0
      %s278 = sadd.s32 %s277, 1
      %s279 = scalar_select %p276, %s277, %s278
      %p282 = pneg %p276
      %p283 = scmp.eq.s32.totalorder %s27, 1
      %p284 = por %p282, %p283
      %p285 = scmp.ne.s32.totalorder %s277, %s280
      %p286 = scmp.eq.s32.totalorder %s27, 0
      %p287 = por %p285, %p286
      %p288 = scmp.ne.s32.totalorder %s277, %s280
      %p289 = scmp.eq.s32.totalorder %s32, 1
      %p290 = por %p288, %p289
      %p291 = scmp.ne.s32.totalorder %s280, %s281
      %p292 = scmp.eq.s32.totalorder %s32, 0
      %p293 = por %p291, %p292
      %p294 = scmp.ne.s32.totalorder %s280, %s281
      %p295 = scmp.eq.s32.totalorder %s33, 1
      %p296 = por %p294, %p295
      %p298 = scmp.ne.s32.totalorder %s281, %s297
      %p299 = scmp.eq.s32.totalorder %s33, 0
      %p300 = por %p298, %p299
      %s301 = ssub.s32 %s27, %s34
      %p302 = scmp.eq.s32.totalorder %s301, 0
      %s304 = sadd.s32 %s303, 1
      %s305 = scalar_select %p302, %s303, %s304
      %p308 = pneg %p302
      %p309 = scmp.eq.s32.totalorder %s27, 1
      %p310 = por %p308, %p309
      %p311 = scmp.ne.s32.totalorder %s303, %s306
      %p312 = scmp.eq.s32.totalorder %s27, 0
      %p313 = por %p311, %p312
      %p314 = scmp.ne.s32.totalorder %s303, %s306
      %p315 = scmp.eq.s32.totalorder %s32, 1
      %p316 = por %p314, %p315
      %p317 = scmp.ne.s32.totalorder %s306, %s307
      %p318 = scmp.eq.s32.totalorder %s32, 0
      %p319 = por %p317, %p318
      %p320 = scmp.ne.s32.totalorder %s306, %s307
      %p321 = scmp.eq.s32.totalorder %s33, 1
      %p322 = por %p320, %p321
      %p324 = scmp.ne.s32.totalorder %s307, %s323
      %p325 = scmp.eq.s32.totalorder %s33, 0
      %p326 = por %p324, %p325
      %s327 = ssub.s32 %s27, %s34
      %p328 = scmp.eq.s32.totalorder %s327, 0
      %s330 = sadd.s32 %s329, 1
      %s331 = scalar_select %p328, %s329, %s330
      %p334 = pneg %p328
      %p335 = scmp.eq.s32.totalorder %s27, 1
      %p336 = por %p334, %p335
      %p337 = scmp.ne.s32.totalorder %s329, %s332
      %p338 = scmp.eq.s32.totalorder %s27, 0
      %p339 = por %p337, %p338
      %p340 = scmp.ne.s32.totalorder %s329, %s332
      %p341 = scmp.eq.s32.totalorder %s32, 1
      %p342 = por %p340, %p341
      %p343 = scmp.ne.s32.totalorder %s332, %s333
      %p344 = scmp.eq.s32.totalorder %s32, 0
      %p345 = por %p343, %p344
      %p346 = scmp.ne.s32.totalorder %s332, %s333
      %p347 = scmp.eq.s32.totalorder %s33, 1
      %p348 = por %p346, %p347
      %p350 = scmp.ne.s32.totalorder %s333, %s349
      %p351 = scmp.eq.s32.totalorder %s33, 0
      %p352 = por %p350, %p351
      %s353 = ssub.s32 %s27, %s34
      %p354 = scmp.eq.s32.totalorder %s353, 0
      %s356 = sadd.s32 %s355, 1
      %s357 = scalar_select %p354, %s355, %s356
      %p360 = pneg %p354
      %p361 = scmp.eq.s32.totalorder %s27, 1
      %p362 = por %p360, %p361
      %p363 = scmp.ne.s32.totalorder %s355, %s358
      %p364 = scmp.eq.s32.totalorder %s27, 0
      %p365 = por %p363, %p364
      %p366 = scmp.ne.s32.totalorder %s355, %s358
      %p367 = scmp.eq.s32.totalorder %s32, 1
      %p368 = por %p366, %p367
      %p369 = scmp.ne.s32.totalorder %s358, %s359
      %p370 = scmp.eq.s32.totalorder %s32, 0
      %p371 = por %p369, %p370
      %p372 = scmp.ne.s32.totalorder %s358, %s359
      %p373 = scmp.eq.s32.totalorder %s33, 1
      %p374 = por %p372, %p373
      %p376 = scmp.ne.s32.totalorder %s359, %s375
      %p377 = scmp.eq.s32.totalorder %s33, 0
      %p378 = por %p376, %p377
      %s379 = ssub.s32 %s27, %s34
      %p380 = scmp.eq.s32.totalorder %s379, 0
      %s382 = sadd.s32 %s381, 1
      %s383 = scalar_select %p380, %s381, %s382
      %p386 = pneg %p380
      %p387 = scmp.eq.s32.totalorder %s27, 1
      %p388 = por %p386, %p387
      %p389 = scmp.ne.s32.totalorder %s381, %s384
      %p390 = scmp.eq.s32.totalorder %s27, 0
      %p391 = por %p389, %p390
      %p392 = scmp.ne.s32.totalorder %s381, %s384
      %p393 = scmp.eq.s32.totalorder %s32, 1
      %p394 = por %p392, %p393
      %p395 = scmp.ne.s32.totalorder %s384, %s385
      %p396 = scmp.eq.s32.totalorder %s32, 0
      %p397 = por %p395, %p396
      %p398 = scmp.ne.s32.totalorder %s384, %s385
      %p399 = scmp.eq.s32.totalorder %s33, 1
      %p400 = por %p398, %p399
      %p402 = scmp.ne.s32.totalorder %s385, %s401
      %p403 = scmp.eq.s32.totalorder %s33, 0
      %p404 = por %p402, %p403
      %s405 = ssub.s32 %s27, %s34
      %p406 = scmp.eq.s32.totalorder %s405, 0
      %s408 = sadd.s32 %s407, 1
      %s409 = scalar_select %p406, %s407, %s408
      %p412 = pneg %p406
      %p413 = scmp.eq.s32.totalorder %s27, 1
      %p414 = por %p412, %p413
      %p415 = scmp.ne.s32.totalorder %s407, %s410
      %p416 = scmp.eq.s32.totalorder %s27, 0
      %p417 = por %p415, %p416
      %p418 = scmp.ne.s32.totalorder %s407, %s410
      %p419 = scmp.eq.s32.totalorder %s32, 1
      %p420 = por %p418, %p419
      %p421 = scmp.ne.s32.totalorder %s410, %s411
      %p422 = scmp.eq.s32.totalorder %s32, 0
      %p423 = por %p421, %p422
      %p424 = scmp.ne.s32.totalorder %s410, %s411
      %p425 = scmp.eq.s32.totalorder %s33, 1
      %p426 = por %p424, %p425
      %p428 = scmp.ne.s32.totalorder %s411, %s427
      %p429 = scmp.eq.s32.totalorder %s33, 0
      %p430 = por %p428, %p429
      %s432 = sadd.s32 %s431, 1
      %p435 = scmp.eq.s32.totalorder %s27, 1
      %p436 = scmp.ne.s32.totalorder %s431, %s433
      %p437 = scmp.eq.s32.totalorder %s27, 0
      %p438 = por %p436, %p437
      %p439 = scmp.ne.s32.totalorder %s431, %s433
      %p440 = scmp.eq.s32.totalorder %s32, 1
      %p441 = por %p439, %p440
      %p442 = scmp.ne.s32.totalorder %s433, %s434
      %p443 = scmp.eq.s32.totalorder %s32, 0
      %p444 = por %p442, %p443
      %p445 = scmp.ne.s32.totalorder %s433, %s434
      %p446 = scmp.eq.s32.totalorder %s33, 1
      %p447 = por %p445, %p446
      %p449 = scmp.ne.s32.totalorder %s434, %s448
      %p450 = scmp.eq.s32.totalorder %s33, 0
      %p451 = por %p449, %p450
      %s453 = sadd.s32 %s452, 1
      %p456 = scmp.eq.s32.totalorder %s27, 1
      %p457 = scmp.ne.s32.totalorder %s452, %s454
      %p458 = scmp.eq.s32.totalorder %s27, 0
      %p459 = por %p457, %p458
      %p460 = scmp.ne.s32.totalorder %s452, %s454
      %p461 = scmp.eq.s32.totalorder %s32, 1
      %p462 = por %p460, %p461
      %p463 = scmp.ne.s32.totalorder %s454, %s455
      %p464 = scmp.eq.s32.totalorder %s32, 0
      %p465 = por %p463, %p464
      %p466 = scmp.ne.s32.totalorder %s454, %s455
      %p467 = scmp.eq.s32.totalorder %s33, 1
      %p468 = por %p466, %p467
      %p470 = scmp.ne.s32.totalorder %s455, %s469
      %p471 = scmp.eq.s32.totalorder %s33, 0
      %p472 = por %p470, %p471
      %s474 = sadd.s32 %s473, 1
      %p477 = scmp.eq.s32.totalorder %s27, 1
      %p478 = scmp.ne.s32.totalorder %s473, %s475
      %p479 = scmp.eq.s32.totalorder %s27, 0
      %p480 = por %p478, %p479
      %p481 = scmp.ne.s32.totalorder %s473, %s475
      %p482 = scmp.eq.s32.totalorder %s32, 1
      %p483 = por %p481, %p482
      %p484 = scmp.ne.s32.totalorder %s475, %s476
      %p485 = scmp.eq.s32.totalorder %s32, 0
      %p486 = por %p484, %p485
      %p487 = scmp.ne.s32.totalorder %s475, %s476
      %p488 = scmp.eq.s32.totalorder %s33, 1
      %p489 = por %p487, %p488
      %p491 = scmp.ne.s32.totalorder %s476, %s490
      %p492 = scmp.eq.s32.totalorder %s33, 0
      %p493 = por %p491, %p492
      %p494 = scmp.le.s32.totalorder 1, %s27
      %p495 = scmp.lt.s32.totalorder %s27, 3
      %p496 = pnand %p494, %p495
      %p497 = pneg %p496
      // Predicated region
      $region9: #{tpu_custom_call.1} parent=5 // pred_check
        _
      $region10: #{tpu_custom_call.1} parent=5 // pred_check_branch
        %499 = sbr.rel (%p496) target = $region12
      $region11: #{tpu_custom_call.1} parent=5 // pred_region
        %s500 = ssub.s32 %s27, 1
        // Predicated region
        $region13: #{tpu_custom_call.1} parent=11 // pred_check
          %p501 = pneg %p48
        $region14: #{tpu_custom_call.1} parent=11 // pred_check_branch
          %503 = sbr.rel (%p501) target = $region16
        $region15: #{tpu_custom_call.1} parent=11 // pred_region
          _
        $region16: #{tpu_custom_call.1} parent=11 // pred_fallthru
          _
        // Predicated region
        $region17: #{tpu_custom_call.1} parent=11 // pred_check
          %p504 = pneg %p69
        $region18: #{tpu_custom_call.1} parent=11 // pred_check_branch
          %506 = sbr.rel (%p504) target = $region20
        $region19: #{tpu_custom_call.1} parent=11 // pred_region
          %s508 = ssub.s32 256, 256
          %509 = vsyncadd [#allocation4], %s508
          %s510 = sshll.u32 [#allocation3], 4
          %s511 = int_to_ptr.vmem [resolvable:$true] %s510
          %516 = dma.hbm_to_vmem [thread:$0]  %s1, 256, %s511, [#allocation4], 128, 128, 8
        $region20: #{tpu_custom_call.1} parent=11 // pred_fallthru
          _
        // Predicated region
        $region21: #{tpu_custom_call.1} parent=11 // pred_check
          %p517 = pneg %p90
        $region22: #{tpu_custom_call.1} parent=11 // pred_check_branch
          %519 = sbr.rel (%p517) target = $region24
        $region23: #{tpu_custom_call.1} parent=11 // pred_region
          %s521 = ssub.s32 2048, 2048
          %522 = vsyncadd [#allocation7], %s521
          %s523 = sshll.u32 [#allocation6], 4
          %s524 = int_to_ptr.vmem [resolvable:$true] %s523
          %529 = dma.hbm_to_vmem [thread:$0]  %s2, 2048, %s524, [#allocation7], 128, 128, 8
        $region24: #{tpu_custom_call.1} parent=11 // pred_fallthru
          _
        // Predicated region
        $region25: #{tpu_custom_call.1} parent=11 // pred_check
          %p530 = pneg %p111
        $region26: #{tpu_custom_call.1} parent=11 // pred_check_branch
          %532 = sbr.rel (%p530) target = $region28
        $region27: #{tpu_custom_call.1} parent=11 // pred_region
          _
        $region28: #{tpu_custom_call.1} parent=11 // pred_fallthru
          _
        // Predicated region
        $region29: #{tpu_custom_call.1} parent=11 // pred_check
          %p533 = pneg %p444
        $region30: #{tpu_custom_call.1} parent=11 // pred_check_branch
          %535 = sbr.rel (%p533) target = $region32
        $region31: #{tpu_custom_call.1} parent=11 // pred_region
          _
        $region32: #{tpu_custom_call.1} parent=11 // pred_fallthru
          _
        // Predicated region
        $region33: #{tpu_custom_call.1} parent=11 // pred_check
          %p536 = pneg %p465
        $region34: #{tpu_custom_call.1} parent=11 // pred_check_branch
          %538 = sbr.rel (%p536) target = $region36
        $region35: #{tpu_custom_call.1} parent=11 // pred_region
          _
        $region36: #{tpu_custom_call.1} parent=11 // pred_fallthru
          _
      $region12: #{tpu_custom_call.1} parent=5 // pred_fallthru
        _
      %p539 = scmp.lt.s32.totalorder %s27, 2
      // Predicated region
      $region37: #{tpu_custom_call.1} parent=5 // pred_check
        %p540 = pneg %p539
      $region38: #{tpu_custom_call.1} parent=5 // pred_check_branch
        %542 = sbr.rel (%p540) target = $region40
      $region39: #{tpu_custom_call.1} parent=5 // pred_region
        // Predicated region
        $region41: #{tpu_custom_call.1} parent=39 // pred_check
          %p543 = pneg %p131
        $region42: #{tpu_custom_call.1} parent=39 // pred_check_branch
          %545 = sbr.rel (%p543) target = $region44
        $region43: #{tpu_custom_call.1} parent=39 // pred_region
          %s546 = sand.u32 %s27, 1
          %s547 = scalar_lea.sflag [#allocation4], %s546
          %s548 = sand.u32 %s121, 1
          %s549 = smul.addr %s548, 192
          %s550 = scalar_lea.vmem [#allocation8], %s549
          %s552 = ssub.s32 3072, 3072
          %553 = vsyncadd %s547, %s552
          %s554 = smul.addr %s27, 48
          %s555 = smul.addr %s554, 64
          %s556 = scalar_lea.hbm %s4, %s555
          %s557 = sshll.u32 %s550, 4
          %s558 = int_to_ptr.vmem [resolvable:$true] %s557
          %563 = dma.hbm_to_vmem [thread:$0]  %s556, 3072, %s558, %s547, 192, 192, 12
        $region44: #{tpu_custom_call.1} parent=39 // pred_fallthru
          _
        // Predicated region
        $region45: #{tpu_custom_call.1} parent=39 // pred_check
          %p564 = pneg %p157
        $region46: #{tpu_custom_call.1} parent=39 // pred_check_branch
          %566 = sbr.rel (%p564) target = $region48
        $region47: #{tpu_custom_call.1} parent=39 // pred_region
          %s567 = sand.u32 %s27, 1
          %s568 = scalar_lea.sflag [#allocation4], %s567
          %s569 = sand.u32 %s147, 1
          %s570 = smul.addr %s569, 3
          %s571 = scalar_lea.vmem [#allocation9], %s570
          %s573 = ssub.s32 48, 48
          %574 = vsyncadd %s568, %s573
          %s575 = smul.addr %s27, 3
          %s576 = smul.addr %s575, 16
          %s577 = scalar_lea.hbm %s5, %s576
          %s579 = sshll.u32 %s571, 4
          %s580 = int_to_ptr.vmem [resolvable:$true] %s579
          %582 = dma.hbm_to_vmem [thread:$0]  %s577, 48, %s580, %s568
        $region48: #{tpu_custom_call.1} parent=39 // pred_fallthru
          _
        // Predicated region
        $region49: #{tpu_custom_call.1} parent=39 // pred_check
          %p583 = pneg %p183
        $region50: #{tpu_custom_call.1} parent=39 // pred_check_branch
          %585 = sbr.rel (%p583) target = $region52
        $region51: #{tpu_custom_call.1} parent=39 // pred_region
          %p586 = scmp.lt.s32.totalorder %s27, 1
          %s587 = scalar_select %p586, %s27, 1
          %s588 = smul.addr %s587, 32
          %s589 = smul.addr %s588, 4
          %s590 = scalar_lea.vmem %s6, %s589
        $region52: #{tpu_custom_call.1} parent=39 // pred_fallthru
          _
        // Predicated region
        $region53: #{tpu_custom_call.1} parent=39 // pred_check
          %p591 = pneg %p209
        $region54: #{tpu_custom_call.1} parent=39 // pred_check_branch
          %593 = sbr.rel (%p591) target = $region56
        $region55: #{tpu_custom_call.1} parent=39 // pred_region
          %s594 = sand.u32 %s27, 1
          %s595 = scalar_lea.sflag [#allocation4], %s594
          %s596 = sand.u32 %s199, 1
          %s597 = smul.addr %s596, 2
          %s598 = scalar_lea.vmem [#allocation10], %s597
          %s600 = ssub.s32 32, 32
          %601 = vsyncadd %s595, %s600
          %s602 = smul.addr %s27, 2
          %s603 = smul.addr %s602, 16
          %s604 = scalar_lea.hbm %s7, %s603
          %s606 = sshll.u32 %s598, 4
          %s607 = int_to_ptr.vmem [resolvable:$true] %s606
          %609 = dma.hbm_to_vmem [thread:$0]  %s604, 32, %s607, %s595
        $region56: #{tpu_custom_call.1} parent=39 // pred_fallthru
          _
        // Predicated region
        $region57: #{tpu_custom_call.1} parent=39 // pred_check
          %p610 = pneg %p235
        $region58: #{tpu_custom_call.1} parent=39 // pred_check_branch
          %612 = sbr.rel (%p610) target = $region60
        $region59: #{tpu_custom_call.1} parent=39 // pred_region
          %s613 = sand.u32 %s27, 1
          %s614 = scalar_lea.sflag [#allocation4], %s613
          %s615 = sand.u32 %s225, 1
          %s616 = smul.addr %s615, 192
          %s617 = scalar_lea.vmem [#allocation11], %s616
          %s619 = ssub.s32 3072, 3072
          %620 = vsyncadd %s614, %s619
          %s621 = smul.addr %s27, 48
          %s622 = smul.addr %s621, 64
          %s623 = scalar_lea.hbm %s8, %s622
          %s624 = sshll.u32 %s617, 4
          %s625 = int_to_ptr.vmem [resolvable:$true] %s624
          %630 = dma.hbm_to_vmem [thread:$0]  %s623, 3072, %s625, %s614, 64, 64, 4
        $region60: #{tpu_custom_call.1} parent=39 // pred_fallthru
          _
        // Predicated region
        $region61: #{tpu_custom_call.1} parent=39 // pred_check
          %p631 = pneg %p261
        $region62: #{tpu_custom_call.1} parent=39 // pred_check_branch
          %633 = sbr.rel (%p631) target = $region64
        $region63: #{tpu_custom_call.1} parent=39 // pred_region
          %p634 = scmp.lt.s32.totalorder %s27, 1
          %s635 = scalar_select %p634, %s27, 1
          %s636 = smul.addr %s635, 4
          %s637 = scalar_lea.vmem %s9, %s636
        $region64: #{tpu_custom_call.1} parent=39 // pred_fallthru
          _
        // Predicated region
        $region65: #{tpu_custom_call.1} parent=39 // pred_check
          %p638 = pneg %p287
        $region66: #{tpu_custom_call.1} parent=39 // pred_check_branch
          %640 = sbr.rel (%p638) target = $region68
        $region67: #{tpu_custom_call.1} parent=39 // pred_region
          %p641 = scmp.lt.s32.totalorder %s27, 1
          %s642 = scalar_select %p641, %s27, 1
          %s643 = smul.addr %s642, 4
          %s644 = scalar_lea.vmem %s10, %s643
        $region68: #{tpu_custom_call.1} parent=39 // pred_fallthru
          _
        // Predicated region
        $region69: #{tpu_custom_call.1} parent=39 // pred_check
          %p645 = pneg %p313
        $region70: #{tpu_custom_call.1} parent=39 // pred_check_branch
          %647 = sbr.rel (%p645) target = $region72
        $region71: #{tpu_custom_call.1} parent=39 // pred_region
          %p648 = scmp.lt.s32.totalorder %s27, 1
          %s649 = scalar_select %p648, %s27, 1
          %s650 = smul.addr %s649, 4
          %s651 = scalar_lea.vmem %s11, %s650
        $region72: #{tpu_custom_call.1} parent=39 // pred_fallthru
          _
        // Predicated region
        $region73: #{tpu_custom_call.1} parent=39 // pred_check
          %p652 = pneg %p339
        $region74: #{tpu_custom_call.1} parent=39 // pred_check_branch
          %654 = sbr.rel (%p652) target = $region76
        $region75: #{tpu_custom_call.1} parent=39 // pred_region
          %s655 = sand.u32 %s27, 1
          %s656 = scalar_lea.sflag [#allocation4], %s655
          %s657 = sand.u32 %s329, 1
          %s658 = smul.addr %s657, 128
          %s659 = scalar_lea.vmem [#allocation12], %s658
          %s661 = ssub.s32 2048, 2048
          %662 = vsyncadd %s656, %s661
          %s663 = smul.addr %s27, 32
          %s664 = smul.addr %s663, 64
          %s665 = scalar_lea.hbm %s12, %s664
          %s666 = sshll.u32 %s659, 4
          %s667 = int_to_ptr.vmem [resolvable:$true] %s666
          %672 = dma.hbm_to_vmem [thread:$0]  %s665, 2048, %s667, %s656, 128, 128, 8
        $region76: #{tpu_custom_call.1} parent=39 // pred_fallthru
          _
        // Predicated region
        $region77: #{tpu_custom_call.1} parent=39 // pred_check
          %p673 = pneg %p365
        $region78: #{tpu_custom_call.1} parent=39 // pred_check_branch
          %675 = sbr.rel (%p673) target = $region80
        $region79: #{tpu_custom_call.1} parent=39 // pred_region
          %s676 = sand.u32 %s27, 1
          %s677 = scalar_lea.sflag [#allocation4], %s676
          %s678 = sand.u32 %s355, 1
          %s679 = smul.addr %s678, 2
          %s680 = scalar_lea.vmem [#allocation13], %s679
          %s682 = ssub.s32 32, 32
          %683 = vsyncadd %s677, %s682
          %s684 = smul.addr %s27, 2
          %s685 = smul.addr %s684, 16
          %s686 = scalar_lea.hbm %s13, %s685
          %s688 = sshll.u32 %s680, 4
          %s689 = int_to_ptr.vmem [resolvable:$true] %s688
          %691 = dma.hbm_to_vmem [thread:$0]  %s686, 32, %s689, %s677
        $region80: #{tpu_custom_call.1} parent=39 // pred_fallthru
          _
        // Predicated region
        $region81: #{tpu_custom_call.1} parent=39 // pred_check
          %p692 = pneg %p391
        $region82: #{tpu_custom_call.1} parent=39 // pred_check_branch
          %694 = sbr.rel (%p692) target = $region84
        $region83: #{tpu_custom_call.1} parent=39 // pred_region
          %s695 = sand.u32 %s27, 1
          %s696 = scalar_lea.sflag [#allocation4], %s695
          %s697 = sand.u32 %s381, 1
          %s698 = smul.addr %s697, 128
          %s699 = scalar_lea.vmem [#allocation14], %s698
          %s701 = ssub.s32 2048, 2048
          %702 = vsyncadd %s696, %s701
          %s703 = smul.addr %s27, 32
          %s704 = smul.addr %s703, 64
          %s705 = scalar_lea.hbm %s14, %s704
          %s706 = sshll.u32 %s699, 4
          %s707 = int_to_ptr.vmem [resolvable:$true] %s706
          %712 = dma.hbm_to_vmem [thread:$0]  %s705, 2048, %s707, %s696, 64, 64, 4
        $region84: #{tpu_custom_call.1} parent=39 // pred_fallthru
          _
        // Predicated region
        $region85: #{tpu_custom_call.1} parent=39 // pred_check
          %p713 = pneg %p417
        $region86: #{tpu_custom_call.1} parent=39 // pred_check_branch
          %715 = sbr.rel (%p713) target = $region88
        $region87: #{tpu_custom_call.1} parent=39 // pred_region
          %p716 = scmp.lt.s32.totalorder %s27, 1
          %s717 = scalar_select %p716, %s27, 1
          %s718 = scalar_lea.vmem %s15, %s717
        $region88: #{tpu_custom_call.1} parent=39 // pred_fallthru
          _
      $region40: #{tpu_custom_call.1} parent=5 // pred_fallthru
        _
      %p719 = scmp.le.s32.totalorder 1, %s27
      %p720 = scmp.lt.s32.totalorder %s27, 3
      %p721 = pnand %p719, %p720
      %p722 = pneg %p721
      // Predicated region
      $region89: #{tpu_custom_call.1} parent=5 // pred_check
        _
      $region90: #{tpu_custom_call.1} parent=5 // pred_check_branch
        %724 = sbr.rel (%p721) target = $region92
      $region91: #{tpu_custom_call.1} parent=5 // pred_region
        %s725 = ssub.s32 %s27, 1
        // Predicated region
        $region93: #{tpu_custom_call.1} parent=91 // pred_check
          %p726 = pneg %p69
        $region94: #{tpu_custom_call.1} parent=91 // pred_check_branch
          %728 = sbr.rel (%p726) target = $region96
        $region95: #{tpu_custom_call.1} parent=91 // pred_region
          %729 = dma.done [#allocation4], 256
        $region96: #{tpu_custom_call.1} parent=91 // pred_fallthru
          _
        // Predicated region
        $region97: #{tpu_custom_call.1} parent=91 // pred_check
          %p730 = pneg %p90
        $region98: #{tpu_custom_call.1} parent=91 // pred_check_branch
          %732 = sbr.rel (%p730) target = $region100
        $region99: #{tpu_custom_call.1} parent=91 // pred_region
          %733 = dma.done [#allocation7], 2048
        $region100: #{tpu_custom_call.1} parent=91 // pred_fallthru
          _
        %s734 = sand.u32 %s32, 1
        %s735 = scalar_lea.sflag [#allocation4], %s734
        %s736 = sand.u32 %s124, 1
        %s737 = smul.addr %s736, 192
        %s738 = scalar_lea.vmem [#allocation8], %s737
        // Predicated region
        $region101: #{tpu_custom_call.1} parent=91 // pred_check
          %p739 = pneg %p137
        $region102: #{tpu_custom_call.1} parent=91 // pred_check_branch
          %741 = sbr.rel (%p739) target = $region104
        $region103: #{tpu_custom_call.1} parent=91 // pred_region
          %742 = dma.done %s735, 3072
        $region104: #{tpu_custom_call.1} parent=91 // pred_fallthru
          _
        %s743 = sand.u32 %s32, 1
        %s744 = scalar_lea.sflag [#allocation4], %s743
        %s745 = sand.u32 %s150, 1
        %s746 = smul.addr %s745, 3
        %s747 = scalar_lea.vmem [#allocation9], %s746
        // Predicated region
        $region105: #{tpu_custom_call.1} parent=91 // pred_check
          %p748 = pneg %p163
        $region106: #{tpu_custom_call.1} parent=91 // pred_check_branch
          %750 = sbr.rel (%p748) target = $region108
        $region107: #{tpu_custom_call.1} parent=91 // pred_region
          %751 = dma.done %s744, 48
        $region108: #{tpu_custom_call.1} parent=91 // pred_fallthru
          _
        %s752 = sand.u32 %s32, 1
        %s753 = scalar_lea.sflag [#allocation4], %s752
        %s754 = sand.u32 %s202, 1
        %s755 = smul.addr %s754, 2
        %s756 = scalar_lea.vmem [#allocation10], %s755
        // Predicated region
        $region109: #{tpu_custom_call.1} parent=91 // pred_check
          %p757 = pneg %p215
        $region110: #{tpu_custom_call.1} parent=91 // pred_check_branch
          %759 = sbr.rel (%p757) target = $region112
        $region111: #{tpu_custom_call.1} parent=91 // pred_region
          %760 = dma.done %s753, 32
        $region112: #{tpu_custom_call.1} parent=91 // pred_fallthru
          _
        %s761 = sand.u32 %s32, 1
        %s762 = scalar_lea.sflag [#allocation4], %s761
        %s763 = sand.u32 %s228, 1
        %s764 = smul.addr %s763, 192
        %s765 = scalar_lea.vmem [#allocation11], %s764
        // Predicated region
        $region113: #{tpu_custom_call.1} parent=91 // pred_check
          %p766 = pneg %p241
        $region114: #{tpu_custom_call.1} parent=91 // pred_check_branch
          %768 = sbr.rel (%p766) target = $region116
        $region115: #{tpu_custom_call.1} parent=91 // pred_region
          %769 = dma.done %s762, 3072
        $region116: #{tpu_custom_call.1} parent=91 // pred_fallthru
          _
        %s770 = sand.u32 %s32, 1
        %s771 = scalar_lea.sflag [#allocation4], %s770
        %s772 = sand.u32 %s332, 1
        %s773 = smul.addr %s772, 128
        %s774 = scalar_lea.vmem [#allocation12], %s773
        // Predicated region
        $region117: #{tpu_custom_call.1} parent=91 // pred_check
          %p775 = pneg %p345
        $region118: #{tpu_custom_call.1} parent=91 // pred_check_branch
          %777 = sbr.rel (%p775) target = $region120
        $region119: #{tpu_custom_call.1} parent=91 // pred_region
          %778 = dma.done %s771, 2048
        $region120: #{tpu_custom_call.1} parent=91 // pred_fallthru
          _
        %s779 = sand.u32 %s32, 1
        %s780 = scalar_lea.sflag [#allocation4], %s779
        %s781 = sand.u32 %s358, 1
        %s782 = smul.addr %s781, 2
        %s783 = scalar_lea.vmem [#allocation13], %s782
        // Predicated region
        $region121: #{tpu_custom_call.1} parent=91 // pred_check
          %p784 = pneg %p371
        $region122: #{tpu_custom_call.1} parent=91 // pred_check_branch
          %786 = sbr.rel (%p784) target = $region124
        $region123: #{tpu_custom_call.1} parent=91 // pred_region
          %787 = dma.done %s780, 32
        $region124: #{tpu_custom_call.1} parent=91 // pred_fallthru
          _
        %s788 = sand.u32 %s32, 1
        %s789 = scalar_lea.sflag [#allocation4], %s788
        %s790 = sand.u32 %s384, 1
        %s791 = smul.addr %s790, 128
        %s792 = scalar_lea.vmem [#allocation14], %s791
        // Predicated region
        $region125: #{tpu_custom_call.1} parent=91 // pred_check
          %p793 = pneg %p397
        $region126: #{tpu_custom_call.1} parent=91 // pred_check_branch
          %795 = sbr.rel (%p793) target = $region128
        $region127: #{tpu_custom_call.1} parent=91 // pred_region
          %796 = dma.done %s789, 2048
        $region128: #{tpu_custom_call.1} parent=91 // pred_fallthru
          _
        %p797 = pneg %p48
        %p798 = pneg %p45
        %p799 = pneg %p69
        %p800 = pneg %p66
        %p801 = pneg %p90
        %p802 = pneg %p87
        %p803 = pneg %p111
        %p804 = pneg %p108
        %s805 = sand.u32 %s32, 1
        %s806 = scalar_lea.sflag [#allocation4], %s805
        %s807 = sand.u32 %s124, 1
        %s808 = smul.addr %s807, 192
        %s809 = scalar_lea.vmem [#allocation8], %s808
        %p810 = pneg %p137
        %p811 = pneg %p134
        %s812 = sand.u32 %s32, 1
        %s813 = scalar_lea.sflag [#allocation4], %s812
        %s814 = sand.u32 %s150, 1
        %s815 = smul.addr %s814, 3
        %s816 = scalar_lea.vmem [#allocation9], %s815
        %p817 = pneg %p163
        %p818 = pneg %p160
        %p819 = scmp.lt.s32.totalorder %s32, 1
        %s820 = scalar_select %p819, %s32, 1
        %s821 = smul.addr %s820, 32
        %s822 = smul.addr %s821, 4
        %s823 = scalar_lea.vmem %s6, %s822
        %p824 = pneg %p189
        %p825 = pneg %p186
        %s826 = sand.u32 %s32, 1
        %s827 = scalar_lea.sflag [#allocation4], %s826
        %s828 = sand.u32 %s202, 1
        %s829 = smul.addr %s828, 2
        %s830 = scalar_lea.vmem [#allocation10], %s829
        %p831 = pneg %p215
        %p832 = pneg %p212
        %s833 = sand.u32 %s32, 1
        %s834 = scalar_lea.sflag [#allocation4], %s833
        %s835 = sand.u32 %s228, 1
        %s836 = smul.addr %s835, 192
        %s837 = scalar_lea.vmem [#allocation11], %s836
        %p838 = pneg %p241
        %p839 = pneg %p238
        %p840 = scmp.lt.s32.totalorder %s32, 1
        %s841 = scalar_select %p840, %s32, 1
        %s842 = smul.addr %s841, 4
        %s843 = scalar_lea.vmem %s9, %s842
        %p844 = pneg %p267
        %p845 = pneg %p264
        %p846 = scmp.lt.s32.totalorder %s32, 1
        %s847 = scalar_select %p846, %s32, 1
        %s848 = smul.addr %s847, 4
        %s849 = scalar_lea.vmem %s10, %s848
        %p850 = pneg %p293
        %p851 = pneg %p290
        %p852 = scmp.lt.s32.totalorder %s32, 1
        %s853 = scalar_select %p852, %s32, 1
        %s854 = smul.addr %s853, 4
        %s855 = scalar_lea.vmem %s11, %s854
        %p856 = pneg %p319
        %p857 = pneg %p316
        %s858 = sand.u32 %s32, 1
        %s859 = scalar_lea.sflag [#allocation4], %s858
        %s860 = sand.u32 %s332, 1
        %s861 = smul.addr %s860, 128
        %s862 = scalar_lea.vmem [#allocation12], %s861
        %p863 = pneg %p345
        %p864 = pneg %p342
        %s865 = sand.u32 %s32, 1
        %s866 = scalar_lea.sflag [#allocation4], %s865
        %s867 = sand.u32 %s358, 1
        %s868 = smul.addr %s867, 2
        %s869 = scalar_lea.vmem [#allocation13], %s868
        %p870 = pneg %p371
        %p871 = pneg %p368
        %s872 = sand.u32 %s32, 1
        %s873 = scalar_lea.sflag [#allocation4], %s872
        %s874 = sand.u32 %s384, 1
        %s875 = smul.addr %s874, 128
        %s876 = scalar_lea.vmem [#allocation14], %s875
        %p877 = pneg %p397
        %p878 = pneg %p394
        %p879 = scmp.lt.s32.totalorder %s32, 1
        %s880 = scalar_select %p879, %s32, 1
        %s881 = scalar_lea.vmem %s15, %s880
        %p882 = pneg %p423
        %p883 = pneg %p420
        %p884 = pneg %p444
        %p885 = pneg %p441
        %p886 = pneg %p465
        %p887 = pneg %p462
        %p888 = pneg %p486
        %p889 = pneg %p483
        %p890 = scmp.lt.s32.totalorder %s32, 1
        %s891 = scalar_select %p890, %s32, 1
        %s892 = smul.addr %s891, 32
        %s893 = smul.addr %s892, 4
        %s894 = scalar_lea.vmem %s6, %s893
        %p895 = scmp.lt.s32.totalorder %s32, 1
        %s896 = scalar_select %p895, %s32, 1
        %s897 = smul.addr %s896, 4
        %s898 = scalar_lea.vmem %s9, %s897
        %p899 = scmp.lt.s32.totalorder %s32, 1
        %s900 = scalar_select %p899, %s32, 1
        %s901 = smul.addr %s900, 4
        %s902 = scalar_lea.vmem %s10, %s901
        %p903 = scmp.lt.s32.totalorder %s32, 1
        %s904 = scalar_select %p903, %s32, 1
        %s905 = smul.addr %s904, 4
        %s906 = scalar_lea.vmem %s11, %s905
        %p907 = scmp.lt.s32.totalorder %s32, 1
        %s908 = scalar_select %p907, %s32, 1
        %s909 = scalar_lea.vmem %s15, %s908
        %p911 = scmp.eq.s32.totalorder %s32, 0
        // Predicated region
        $region129: #{tpu_custom_call.1} parent=91 // pred_check
          %p912 = pneg %p911
        $region130: #{tpu_custom_call.1} parent=91 // pred_check_branch
          %914 = sbr.rel (%p912) target = $region132
        $region131: #{tpu_custom_call.1} parent=91 // pred_region
          %v915 = vld [vmem:[%s0] sm:$0xff]
          %v916 = vld [vmem:[%s0 + $0x8] sm:$0xff]
          %917 = vst [vmem:[#allocation2] sm:$0xff] %v915
          %918 = vst [vmem:[#allocation2 + $0x8] sm:$0xff] %v916
        $region132: #{tpu_custom_call.1} parent=91 // pred_fallthru
          _
        %v919 = vld [vmem:[#allocation2] sm:$0xff]
        %v920 = vld [vmem:[#allocation2 + $0x8] sm:$0xff]
        %v921 = vld [vmem:[#allocation3] sm:$0xff]
        %v922 = vld [vmem:[#allocation3 + $0x8] sm:$0xff]
        %v923 = vpack.c.bf16 %v922, %v921
        %v924 = vld [vmem:[#allocation6] sm:$0xff]
        %v925 = vld [vmem:[#allocation6 + $0x8] sm:$0xff]
        %v926 = vld [vmem:[#allocation6 + $0x10] sm:$0xff]
        %v927 = vld [vmem:[#allocation6 + $0x18] sm:$0xff]
        %v928 = vld [vmem:[#allocation6 + $0x20] sm:$0xff]
        %v929 = vld [vmem:[#allocation6 + $0x28] sm:$0xff]
        %v930 = vld [vmem:[#allocation6 + $0x30] sm:$0xff]
        %v931 = vld [vmem:[#allocation6 + $0x38] sm:$0xff]
        %v932 = vld [vmem:[#allocation6 + $0x40] sm:$0xff]
        %v933 = vld [vmem:[#allocation6 + $0x48] sm:$0xff]
        %v934 = vld [vmem:[#allocation6 + $0x50] sm:$0xff]
        %v935 = vld [vmem:[#allocation6 + $0x58] sm:$0xff]
        %v936 = vld [vmem:[#allocation6 + $0x60] sm:$0xff]
        %v937 = vld [vmem:[#allocation6 + $0x68] sm:$0xff]
        %v938 = vld [vmem:[#allocation6 + $0x70] sm:$0xff]
        %v939 = vld [vmem:[#allocation6 + $0x78] sm:$0xff]
        %v940 = vld [vmem:[%s3] sm:$0xff]
        %v941 = vld [vmem:[%s3 + $0x8] sm:$0xff]
        %v942 = vld [vmem:[%s3 + $0x10] sm:$0xff]
        %v943 = vld [vmem:[%s3 + $0x18] sm:$0xff]
        %v944 = vld [vmem:[%s3 + $0x20] sm:$0xff]
        %v945 = vld [vmem:[%s3 + $0x28] sm:$0xff]
        %v946 = vld [vmem:[%s3 + $0x30] sm:$0xff]
        %v947 = vld [vmem:[%s3 + $0x38] sm:$0xff]
        %v948 = vld [vmem:[%s3 + $0x40] sm:$0xff]
        %v949 = vld [vmem:[%s3 + $0x48] sm:$0xff]
        %v950 = vld [vmem:[%s3 + $0x50] sm:$0xff]
        %v951 = vld [vmem:[%s3 + $0x58] sm:$0xff]
        %v952 = vld [vmem:[%s3 + $0x60] sm:$0xff]
        %v953 = vld [vmem:[%s3 + $0x68] sm:$0xff]
        %v954 = vld [vmem:[%s3 + $0x70] sm:$0xff]
        %v955 = vld [vmem:[%s3 + $0x78] sm:$0xff]
        %s956 = scalar_lea.vmem %s3, 128
        %v957 = vld [vmem:[%s956] sm:$0xff]
        %v958 = vld [vmem:[%s956 + $0x8] sm:$0xff]
        %v959 = vld [vmem:[%s956 + $0x10] sm:$0xff]
        %v960 = vld [vmem:[%s956 + $0x18] sm:$0xff]
        %v961 = vld [vmem:[%s956 + $0x20] sm:$0xff]
        %v962 = vld [vmem:[%s956 + $0x28] sm:$0xff]
        %v963 = vld [vmem:[%s956 + $0x30] sm:$0xff]
        %v964 = vld [vmem:[%s956 + $0x38] sm:$0xff]
        %v965 = vld [vmem:[%s956 + $0x40] sm:$0xff]
        %v966 = vld [vmem:[%s956 + $0x48] sm:$0xff]
        %v967 = vld [vmem:[%s956 + $0x50] sm:$0xff]
        %v968 = vld [vmem:[%s956 + $0x58] sm:$0xff]
        %v969 = vld [vmem:[%s956 + $0x60] sm:$0xff]
        %v970 = vld [vmem:[%s956 + $0x68] sm:$0xff]
        %v971 = vld [vmem:[%s956 + $0x70] sm:$0xff]
        %v972 = vld [vmem:[%s956 + $0x78] sm:$0xff]
        %v973 = vld [vmem:[%s902] sm:$0x7]
        %v974 = vld [vmem:[%s906] sm:$0x7]
        %v975 = vld [vmem:[%s898] sm:$0x7]
        %v976 = vpack.c.bf16 %v920, %v919
        %v977 = vld [vmem:[%s738] sm:$0xff]
        %v978 = vld [vmem:[%s738 + $0x8] sm:$0xf]
        %v979 = vld [vmem:[%s738 + $0xc] sm:$0xff]
        %v980 = vld [vmem:[%s738 + $0x14] sm:$0xf]
        %v981 = vld [vmem:[%s738 + $0x18] sm:$0xff]
        %v982 = vld [vmem:[%s738 + $0x20] sm:$0xf]
        %v983 = vld [vmem:[%s738 + $0x24] sm:$0xff]
        %v984 = vld [vmem:[%s738 + $0x2c] sm:$0xf]
        %v985 = vld [vmem:[%s738 + $0x30] sm:$0xff]
        %v986 = vld [vmem:[%s738 + $0x38] sm:$0xf]
        %v987 = vld [vmem:[%s738 + $0x3c] sm:$0xff]
        %v988 = vld [vmem:[%s738 + $0x44] sm:$0xf]
        %v989 = vld [vmem:[%s738 + $0x48] sm:$0xff]
        %v990 = vld [vmem:[%s738 + $0x50] sm:$0xf]
        %v991 = vld [vmem:[%s738 + $0x54] sm:$0xff]
        %v992 = vld [vmem:[%s738 + $0x5c] sm:$0xf]
        %v993 = vld [vmem:[%s738 + $0x60] sm:$0xff]
        %v994 = vld [vmem:[%s738 + $0x68] sm:$0xf]
        %v995 = vld [vmem:[%s738 + $0x6c] sm:$0xff]
        %v996 = vld [vmem:[%s738 + $0x74] sm:$0xf]
        %v997 = vld [vmem:[%s738 + $0x78] sm:$0xff]
        %v998 = vld [vmem:[%s738 + $0x80] sm:$0xf]
        %v999 = vld [vmem:[%s738 + $0x84] sm:$0xff]
        %v1000 = vld [vmem:[%s738 + $0x8c] sm:$0xf]
        %v1001 = vld [vmem:[%s738 + $0x90] sm:$0xff]
        %v1002 = vld [vmem:[%s738 + $0x98] sm:$0xf]
        %v1003 = vld [vmem:[%s738 + $0x9c] sm:$0xff]
        %v1004 = vld [vmem:[%s738 + $0xa4] sm:$0xf]
        %v1005 = vld [vmem:[%s738 + $0xa8] sm:$0xff]
        %v1006 = vld [vmem:[%s738 + $0xb0] sm:$0xf]
        %v1007 = vld [vmem:[%s738 + $0xb4] sm:$0xff]
        %v1008 = vld [vmem:[%s738 + $0xbc] sm:$0xf]
        %v1009 = vld [vmem:[%s747] sm:$0x7]
        %v1011 = vlaneseq
        %v1012 = vshrl.u32 %v1011, 7
        %v1013 = vsub.s32 0, %v1012
        %v1014 = vrot.slane %v1009, %v1013
        %v1015 = vlaneseq
        %v1016 = vshrl.u32 %v1015, 7
        %v1017 = vsub.s32 1, %v1016
        %v1018 = vrot.slane %v1009, %v1017
        %v1019 = vlaneseq
        %v1020 = vshrl.u32 %v1019, 7
        %v1021 = vsub.s32 2, %v1020
        %v1022 = vrot.slane %v1009, %v1021
        %v1058 = vunpack.c.l.b16 %v977
        %v1059 = vunpack.c.h.b16 %v977
        %v1060 = vunpack.c.l.b16 %v978
        %v1061 = vunpack.c.l.b16 %v979
        %v1062 = vunpack.c.h.b16 %v979
        %v1063 = vunpack.c.l.b16 %v980
        %v1064 = vunpack.c.l.b16 %v981
        %v1065 = vunpack.c.h.b16 %v981
        %v1066 = vunpack.c.l.b16 %v982
        %v1067 = vunpack.c.l.b16 %v983
        %v1068 = vunpack.c.h.b16 %v983
        %v1069 = vunpack.c.l.b16 %v984
        %v1070 = vunpack.c.l.b16 %v985
        %v1071 = vunpack.c.h.b16 %v985
        %v1072 = vunpack.c.l.b16 %v986
        %v1073 = vunpack.c.l.b16 %v987
        %v1074 = vunpack.c.h.b16 %v987
        %v1075 = vunpack.c.l.b16 %v988
        %v1076 = vunpack.c.l.b16 %v989
        %v1077 = vunpack.c.h.b16 %v989
        %v1078 = vunpack.c.l.b16 %v990
        %v1079 = vunpack.c.l.b16 %v991
        %v1080 = vunpack.c.h.b16 %v991
        %v1081 = vunpack.c.l.b16 %v992
        %v1082 = vunpack.c.l.b16 %v993
        %v1083 = vunpack.c.h.b16 %v993
        %v1084 = vunpack.c.l.b16 %v994
        %v1085 = vunpack.c.l.b16 %v995
        %v1086 = vunpack.c.h.b16 %v995
        %v1087 = vunpack.c.l.b16 %v996
        %v1088 = vunpack.c.l.b16 %v997
        %v1089 = vunpack.c.h.b16 %v997
        %v1090 = vunpack.c.l.b16 %v998
        %v1091 = vunpack.c.l.b16 %v999
        %v1092 = vunpack.c.h.b16 %v999
        %v1093 = vunpack.c.l.b16 %v1000
        %v1094 = vunpack.c.l.b16 %v1001
        %v1095 = vunpack.c.h.b16 %v1001
        %v1096 = vunpack.c.l.b16 %v1002
        %v1097 = vunpack.c.l.b16 %v1003
        %v1098 = vunpack.c.h.b16 %v1003
        %v1099 = vunpack.c.l.b16 %v1004
        %v1100 = vunpack.c.l.b16 %v1005
        %v1101 = vunpack.c.h.b16 %v1005
        %v1102 = vunpack.c.l.b16 %v1006
        %v1103 = vunpack.c.l.b16 %v1007
        %v1104 = vunpack.c.h.b16 %v1007
        %v1105 = vunpack.c.l.b16 %v1008
        %v1106 = vpack.c.b16 %v1061, %v1058
        %v1107 = vpack.c.b16 %v1062, %v1059
        %v1108 = vpack.c.b16 %v1063, %v1060
        %v1109 = vpack.c.b16 %v1067, %v1064
        %v1110 = vpack.c.b16 %v1068, %v1065
        %v1111 = vpack.c.b16 %v1069, %v1066
        %v1112 = vpack.c.b16 %v1073, %v1070
        %v1113 = vpack.c.b16 %v1074, %v1071
        %v1114 = vpack.c.b16 %v1075, %v1072
        %v1115 = vpack.c.b16 %v1079, %v1076
        %v1116 = vpack.c.b16 %v1080, %v1077
        %v1117 = vpack.c.b16 %v1081, %v1078
        %v1118 = vpack.c.b16 %v1085, %v1082
        %v1119 = vpack.c.b16 %v1086, %v1083
        %v1120 = vpack.c.b16 %v1087, %v1084
        %v1121 = vpack.c.b16 %v1091, %v1088
        %v1122 = vpack.c.b16 %v1092, %v1089
        %v1123 = vpack.c.b16 %v1093, %v1090
        %v1124 = vpack.c.b16 %v1097, %v1094
        %v1125 = vpack.c.b16 %v1098, %v1095
        %v1126 = vpack.c.b16 %v1099, %v1096
        %v1127 = vpack.c.b16 %v1103, %v1100
        %v1128 = vpack.c.b16 %v1104, %v1101
        %v1129 = vpack.c.b16 %v1105, %v1102
        %1154 = vmatprep.subr.bf16.mxu0 %v1128
        %1155 = vmatpush1.bf16.msra.mxu0 %v1127
        %1156 = vmatprep.subr.bf16.mxu0 %v1125
        %1157 = vmatpush1.bf16.msra.mxu0 %v1124
        %1158 = vmatprep.subr.bf16.mxu0 %v1122
        %1159 = vmatpush1.bf16.msra.mxu0 %v1121
        %1160 = vmatprep.subr.bf16.mxu0 %v1119
        %1161 = vmatpush1.bf16.msra.mxu0 %v1118
        %1162 = vmatprep.subr.bf16.mxu0 %v1116
        %1163 = vmatpush1.bf16.msra.mxu0 %v1115
        %1164 = vmatprep.subr.bf16.mxu0 %v1113
        %1165 = vmatpush1.bf16.msra.mxu0 %v1112
        %1166 = vmatprep.subr.bf16.mxu0 %v1110
        %1167 = vmatpush1.bf16.msra.mxu0 %v1109
        %1168 = vmatprep.subr.bf16.mxu0 %v1107
        %1169 = vmatpush1.bf16.msra.mxu0 %v1106
        %1170 = vmatprep.subr.bf16.mxu0 0
        %1171 = vmatpush2.bf16.msra.mxu0 0
        %1172 = vmatprep.subr.bf16.mxu0 0
        %1173 = vmatpush2.bf16.msra.mxu0 0
        %1174 = vmatprep.subr.bf16.mxu0 0
        %1175 = vmatpush2.bf16.msra.mxu0 0
        %1176 = vmatprep.subr.bf16.mxu0 0
        %1177 = vmatpush2.bf16.msra.mxu0 0
        %1178 = vmatprep.subr.bf16.mxu0 0
        %1179 = vmatpush2.bf16.msra.mxu0 0
        %1180 = vmatprep.subr.bf16.mxu0 0
        %1181 = vmatpush2.bf16.msra.mxu0 0
        %1182 = vmatprep.subr.bf16.mxu0 0
        %1183 = vmatpush2.bf16.msra.mxu0 0
        %1184 = vmatprep.subr.bf16.mxu0 0
        %1185 = vmatpush2.bf16.msra.mxu0 0
        %1186 = vmatprep.mubr.bf16.mxu0 0
        %1187 = vmatmul.mubr.bf16.gmra.mxu0 %v976
        %v1188 = vpop.f32.mrf.mxu0
        %v1189 = vadd.f32 %v1014, %v1188
        %v1190 = vpop.f32.mrf.mxu0
        %v1191 = vadd.f32 %v1018, %v1190
        %v1192 = vpop.f32.mrf.mxu0
        %v1193 = vadd.f32 %v1014, %v1192
        %v1194 = vpop.f32.mrf.mxu0
        %v1195 = vadd.f32 %v1018, %v1194
        %1196 = vdwg.mxu0
        %1197 = vmatprep.subr.bf16.mxu0 0
        %1198 = vmatpush1.bf16.msra.mxu0 %v1129
        %1199 = vmatprep.subr.bf16.mxu0 0
        %1200 = vmatpush1.bf16.msra.mxu0 %v1126
        %1201 = vmatprep.subr.bf16.mxu0 0
        %1202 = vmatpush1.bf16.msra.mxu0 %v1123
        %1203 = vmatprep.subr.bf16.mxu0 0
        %1204 = vmatpush1.bf16.msra.mxu0 %v1120
        %1205 = vmatprep.subr.bf16.mxu0 0
        %1206 = vmatpush1.bf16.msra.mxu0 %v1117
        %1207 = vmatprep.subr.bf16.mxu0 0
        %1208 = vmatpush1.bf16.msra.mxu0 %v1114
        %1209 = vmatprep.subr.bf16.mxu0 0
        %1210 = vmatpush1.bf16.msra.mxu0 %v1111
        %1211 = vmatprep.subr.bf16.mxu0 0
        %1212 = vmatpush1.bf16.msra.mxu0 %v1108
        %1213 = vmatprep.subr.bf16.mxu0 0
        %1214 = vmatpush2.bf16.msra.mxu0 0
        %1215 = vmatprep.subr.bf16.mxu0 0
        %1216 = vmatpush2.bf16.msra.mxu0 0
        %1217 = vmatprep.subr.bf16.mxu0 0
        %1218 = vmatpush2.bf16.msra.mxu0 0
        %1219 = vmatprep.subr.bf16.mxu0 0
        %1220 = vmatpush2.bf16.msra.mxu0 0
        %1221 = vmatprep.subr.bf16.mxu0 0
        %1222 = vmatpush2.bf16.msra.mxu0 0
        %1223 = vmatprep.subr.bf16.mxu0 0
        %1224 = vmatpush2.bf16.msra.mxu0 0
        %1225 = vmatprep.subr.bf16.mxu0 0
        %1226 = vmatpush2.bf16.msra.mxu0 0
        %1227 = vmatprep.subr.bf16.mxu0 0
        %1228 = vmatpush2.bf16.msra.mxu0 0
        %1229 = vmatprep.mubr.bf16.mxu0 0
        %1230 = vmatmul.mubr.bf16.gmra.mxu0 %v976
        %v1231 = vpop.f32.mrf.mxu0
        %v1232 = vadd.f32 %v1022, %v1231
        %v1233 = vpop.f32.mrf.mxu0
        %v1234 = vpop.f32.mrf.mxu0
        %v1235 = vadd.f32 %v1022, %v1234
        %v1236 = vpop.f32.mrf.mxu0
        %1237 = vdwg.mxu0
        %v1238 = vmul.f32 %v1189, %v924
        %v1239 = vmul.f32 %v1193, %v925
        %v1240 = vmul.f32 %v1189, %v926
        %v1241 = vmul.f32 %v1193, %v927
        %v1242 = vmul.f32 %v1189, %v928
        %v1243 = vmul.f32 %v1193, %v929
        %v1244 = vmul.f32 %v1189, %v930
        %v1245 = vmul.f32 %v1193, %v931
        %v1246 = vmul.f32 %v1189, %v932
        %v1247 = vmul.f32 %v1193, %v933
        %v1248 = vmul.f32 %v1189, %v934
        %v1249 = vmul.f32 %v1193, %v935
        %v1250 = vmul.f32 %v1189, %v936
        %v1251 = vmul.f32 %v1193, %v937
        %v1252 = vmul.f32 %v1189, %v938
        %v1253 = vmul.f32 %v1193, %v939
        %v1254 = vpack.c.bf16 %v1239, %v1238
        %v1255 = vpack.c.bf16 %v1241, %v1240
        %v1256 = vpack.c.bf16 %v1243, %v1242
        %v1257 = vpack.c.bf16 %v1245, %v1244
        %v1258 = vpack.c.bf16 %v1247, %v1246
        %v1259 = vpack.c.bf16 %v1249, %v1248
        %v1260 = vpack.c.bf16 %v1251, %v1250
        %v1261 = vpack.c.bf16 %v1253, %v1252
        %v1262 = vpack.c.bf16 %v1195, %v1191
        %1263 = vmatprep.subr.bf16.mxu0 0
        %1264 = vmatpush1.bf16.xpose.msra.mxu0 0
        %1265 = vmatprep.subr.bf16.mxu0 0
        %1266 = vmatpush1.bf16.xpose.msra.mxu0 0
        %1267 = vmatprep.subr.bf16.mxu0 0
        %1268 = vmatpush1.bf16.xpose.msra.mxu0 0
        %1269 = vmatprep.subr.bf16.mxu0 0
        %1270 = vmatpush1.bf16.xpose.msra.mxu0 0
        %1271 = vmatprep.subr.bf16.mxu0 0
        %1272 = vmatpush1.bf16.xpose.msra.mxu0 0
        %1273 = vmatprep.subr.bf16.mxu0 0
        %1274 = vmatpush1.bf16.xpose.msra.mxu0 0
        %1275 = vmatprep.subr.bf16.mxu0 0
        %1276 = vmatpush1.bf16.xpose.msra.mxu0 0
        %1277 = vmatprep.subr.bf16.mxu0 0
        %1278 = vmatpush1.bf16.xpose.msra.mxu0 %v1262
        %1279 = vmatprep.subr.bf16.mxu0 0
        %1280 = vmatpush2.bf16.xpose.msra.mxu0 0
        %1281 = vmatprep.subr.bf16.mxu0 0
        %1282 = vmatpush2.bf16.xpose.msra.mxu0 0
        %1283 = vmatprep.subr.bf16.mxu0 0
        %1284 = vmatpush2.bf16.xpose.msra.mxu0 0
        %1285 = vmatprep.subr.bf16.mxu0 0
        %1286 = vmatpush2.bf16.xpose.msra.mxu0 0
        %1287 = vmatprep.subr.bf16.mxu0 0
        %1288 = vmatpush2.bf16.xpose.msra.mxu0 0
        %1289 = vmatprep.subr.bf16.mxu0 0
        %1290 = vmatpush2.bf16.xpose.msra.mxu0 0
        %1291 = vmatprep.subr.bf16.mxu0 0
        %1292 = vmatpush2.bf16.xpose.msra.mxu0 0
        %1293 = vmatprep.subr.bf16.mxu0 0
        %1294 = vmatpush2.bf16.xpose.msra.mxu0 0
        %1295 = vmatprep.mubr.bf16.mxu0 0
        %1296 = vmatmul.mubr.bf16.gmra.mxu0 %v1254
        %v1297 = vpop.f32.mrf.mxu0
        %v1298 = vadd.f32 0.0, %v1297
        %v1299 = vpop.f32.mrf.mxu0
        %v1300 = vpop.f32.mrf.mxu0
        %v1301 = vadd.f32 0.0, %v1300
        %v1302 = vpop.f32.mrf.mxu0
        %1303 = vmatprep.mubr.bf16.mxu0 0
        %1304 = vmatmul.mubr.bf16.gmra.mxu0 %v1255
        %v1305 = vpop.f32.mrf.mxu0
        %v1306 = vadd.f32 0.0, %v1305
        %v1307 = vpop.f32.mrf.mxu0
        %v1308 = vpop.f32.mrf.mxu0
        %v1309 = vadd.f32 0.0, %v1308
        %v1310 = vpop.f32.mrf.mxu0
        %1311 = vmatprep.mubr.bf16.mxu0 0
        %1312 = vmatmul.mubr.bf16.gmra.mxu0 %v1256
        %v1313 = vpop.f32.mrf.mxu0
        %v1314 = vadd.f32 0.0, %v1313
        %v1315 = vpop.f32.mrf.mxu0
        %v1316 = vpop.f32.mrf.mxu0
        %v1317 = vadd.f32 0.0, %v1316
        %v1318 = vpop.f32.mrf.mxu0
        %1319 = vmatprep.mubr.bf16.mxu0 0
        %1320 = vmatmul.mubr.bf16.gmra.mxu0 %v1257
        %v1321 = vpop.f32.mrf.mxu0
        %v1322 = vadd.f32 0.0, %v1321
        %v1323 = vpop.f32.mrf.mxu0
        %v1324 = vpop.f32.mrf.mxu0
        %v1325 = vadd.f32 0.0, %v1324
        %v1326 = vpop.f32.mrf.mxu0
        %1327 = vmatprep.mubr.bf16.mxu0 0
        %1328 = vmatmul.mubr.bf16.gmra.mxu0 %v1258
        %v1329 = vpop.f32.mrf.mxu0
        %v1330 = vadd.f32 0.0, %v1329
        %v1331 = vpop.f32.mrf.mxu0
        %v1332 = vpop.f32.mrf.mxu0
        %v1333 = vadd.f32 0.0, %v1332
        %v1334 = vpop.f32.mrf.mxu0
        %1335 = vmatprep.mubr.bf16.mxu0 0
        %1336 = vmatmul.mubr.bf16.gmra.mxu0 %v1259
        %v1337 = vpop.f32.mrf.mxu0
        %v1338 = vadd.f32 0.0, %v1337
        %v1339 = vpop.f32.mrf.mxu0
        %v1340 = vpop.f32.mrf.mxu0
        %v1341 = vadd.f32 0.0, %v1340
        %v1342 = vpop.f32.mrf.mxu0
        %1343 = vmatprep.mubr.bf16.mxu0 0
        %1344 = vmatmul.mubr.bf16.gmra.mxu0 %v1260
        %v1345 = vpop.f32.mrf.mxu0
        %v1346 = vadd.f32 0.0, %v1345
        %v1347 = vpop.f32.mrf.mxu0
        %v1348 = vpop.f32.mrf.mxu0
        %v1349 = vadd.f32 0.0, %v1348
        %v1350 = vpop.f32.mrf.mxu0
        %1351 = vmatprep.mubr.bf16.mxu0 0
        %1352 = vmatmul.mubr.bf16.gmra.mxu0 %v1261
        %v1353 = vpop.f32.mrf.mxu0
        %v1354 = vadd.f32 0.0, %v1353
        %v1355 = vpop.f32.mrf.mxu0
        %v1356 = vpop.f32.mrf.mxu0
        %v1357 = vadd.f32 0.0, %v1356
        %v1358 = vpop.f32.mrf.mxu0
        %1359 = vdwg.mxu0
        %v1360 = vmul.f32 %v1298, 0.35355338
        %v1361 = vmul.f32 %v1301, 0.35355338
        %v1362 = vmul.f32 %v1306, 0.35355338
        %v1363 = vmul.f32 %v1309, 0.35355338
        %v1364 = vmul.f32 %v1314, 0.35355338
        %v1365 = vmul.f32 %v1317, 0.35355338
        %v1366 = vmul.f32 %v1322, 0.35355338
        %v1367 = vmul.f32 %v1325, 0.35355338
        %v1368 = vmul.f32 %v1330, 0.35355338
        %v1369 = vmul.f32 %v1333, 0.35355338
        %v1370 = vmul.f32 %v1338, 0.35355338
        %v1371 = vmul.f32 %v1341, 0.35355338
        %v1372 = vmul.f32 %v1346, 0.35355338
        %v1373 = vmul.f32 %v1349, 0.35355338
        %v1374 = vmul.f32 %v1354, 0.35355338
        %v1375 = vmul.f32 %v1357, 0.35355338
        %v1376 = vadd.f32 %v1360, %v940
        %v1377 = vadd.f32 %v1361, %v941
        %v1378 = vadd.f32 %v1362, %v942
        %v1379 = vadd.f32 %v1363, %v943
        %v1380 = vadd.f32 %v1364, %v944
        %v1381 = vadd.f32 %v1365, %v945
        %v1382 = vadd.f32 %v1366, %v946
        %v1383 = vadd.f32 %v1367, %v947
        %v1384 = vadd.f32 %v1368, %v948
        %v1385 = vadd.f32 %v1369, %v949
        %v1386 = vadd.f32 %v1370, %v950
        %v1387 = vadd.f32 %v1371, %v951
        %v1388 = vadd.f32 %v1372, %v952
        %v1389 = vadd.f32 %v1373, %v953
        %v1390 = vadd.f32 %v1374, %v954
        %v1391 = vadd.f32 %v1375, %v955
        %vm1392 = vcmask 130048
        %v1393 = vsel %vm1392, %v1376, -inf
        %1394 = vmax.xlane.f32.xlu0 %v1393
        %v1395 = vpop.xlane.xlu0 %1394
        %v1396 = vsel %vm1392, %v1377, -inf
        %1397 = vmax.xlane.f32.xlu0 %v1396
        %v1398 = vpop.xlane.xlu0 %1397
        %v1399 = vsel %vm1392, %v1378, -inf
        %1400 = vmax.xlane.f32.xlu0 %v1399
        %v1401 = vpop.xlane.xlu0 %1400
        %v1402 = vsel %vm1392, %v1379, -inf
        %1403 = vmax.xlane.f32.xlu0 %v1402
        %v1404 = vpop.xlane.xlu0 %1403
        %v1405 = vsel %vm1392, %v1380, -inf
        %1406 = vmax.xlane.f32.xlu0 %v1405
        %v1407 = vpop.xlane.xlu0 %1406
        %v1408 = vsel %vm1392, %v1381, -inf
        %1409 = vmax.xlane.f32.xlu0 %v1408
        %v1410 = vpop.xlane.xlu0 %1409
        %v1411 = vsel %vm1392, %v1382, -inf
        %1412 = vmax.xlane.f32.xlu0 %v1411
        %v1413 = vpop.xlane.xlu0 %1412
        %v1414 = vsel %vm1392, %v1383, -inf
        %1415 = vmax.xlane.f32.xlu0 %v1414
        %v1416 = vpop.xlane.xlu0 %1415
        %v1417 = vsel %vm1392, %v1384, -inf
        %1418 = vmax.xlane.f32.xlu0 %v1417
        %v1419 = vpop.xlane.xlu0 %1418
        %v1420 = vsel %vm1392, %v1385, -inf
        %1421 = vmax.xlane.f32.xlu0 %v1420
        %v1422 = vpop.xlane.xlu0 %1421
        %v1423 = vsel %vm1392, %v1386, -inf
        %1424 = vmax.xlane.f32.xlu0 %v1423
        %v1425 = vpop.xlane.xlu0 %1424
        %v1426 = vsel %vm1392, %v1387, -inf
        %1427 = vmax.xlane.f32.xlu0 %v1426
        %v1428 = vpop.xlane.xlu0 %1427
        %v1429 = vsel %vm1392, %v1388, -inf
        %1430 = vmax.xlane.f32.xlu0 %v1429
        %v1431 = vpop.xlane.xlu0 %1430
        %v1432 = vsel %vm1392, %v1389, -inf
        %1433 = vmax.xlane.f32.xlu0 %v1432
        %v1434 = vpop.xlane.xlu0 %1433
        %v1435 = vsel %vm1392, %v1390, -inf
        %1436 = vmax.xlane.f32.xlu0 %v1435
        %v1437 = vpop.xlane.xlu0 %1436
        %v1438 = vsel %vm1392, %v1391, -inf
        %1439 = vmax.xlane.f32.xlu0 %v1438
        %v1440 = vpop.xlane.xlu0 %1439
        %v1441 = vsub.f32 %v1376, %v1395
        %v1442 = vsub.f32 %v1377, %v1398
        %v1443 = vsub.f32 %v1378, %v1401
        %v1444 = vsub.f32 %v1379, %v1404
        %v1445 = vsub.f32 %v1380, %v1407
        %v1446 = vsub.f32 %v1381, %v1410
        %v1447 = vsub.f32 %v1382, %v1413
        %v1448 = vsub.f32 %v1383, %v1416
        %v1449 = vsub.f32 %v1384, %v1419
        %v1450 = vsub.f32 %v1385, %v1422
        %v1451 = vsub.f32 %v1386, %v1425
        %v1452 = vsub.f32 %v1387, %v1428
        %v1453 = vsub.f32 %v1388, %v1431
        %v1454 = vsub.f32 %v1389, %v1434
        %v1455 = vsub.f32 %v1390, %v1437
        %v1456 = vsub.f32 %v1391, %v1440
        %v1457 = vmul.f32 %v1441, 1.442695
        %v1458 = vpow.pop %v1457
        %v1459 = vmul.f32 %v1442, 1.442695
        %v1460 = vpow.pop %v1459
        %v1461 = vmul.f32 %v1443, 1.442695
        %v1462 = vpow.pop %v1461
        %v1463 = vmul.f32 %v1444, 1.442695
        %v1464 = vpow.pop %v1463
        %v1465 = vmul.f32 %v1445, 1.442695
        %v1466 = vpow.pop %v1465
        %v1467 = vmul.f32 %v1446, 1.442695
        %v1468 = vpow.pop %v1467
        %v1469 = vmul.f32 %v1447, 1.442695
        %v1470 = vpow.pop %v1469
        %v1471 = vmul.f32 %v1448, 1.442695
        %v1472 = vpow.pop %v1471
        %v1473 = vmul.f32 %v1449, 1.442695
        %v1474 = vpow.pop %v1473
        %v1475 = vmul.f32 %v1450, 1.442695
        %v1476 = vpow.pop %v1475
        %v1477 = vmul.f32 %v1451, 1.442695
        %v1478 = vpow.pop %v1477
        %v1479 = vmul.f32 %v1452, 1.442695
        %v1480 = vpow.pop %v1479
        %v1481 = vmul.f32 %v1453, 1.442695
        %v1482 = vpow.pop %v1481
        %v1483 = vmul.f32 %v1454, 1.442695
        %v1484 = vpow.pop %v1483
        %v1485 = vmul.f32 %v1455, 1.442695
        %v1486 = vpow.pop %v1485
        %v1487 = vmul.f32 %v1456, 1.442695
        %v1488 = vpow.pop %v1487
        %v1489 = vsel %vm1392, %v1458, 0.0
        %1490 = vadd.xlane.f32.xlu0 %v1489
        %v1491 = vpop.xlane.xlu0 %1490
        %v1492 = vsel %vm1392, %v1460, 0.0
        %1493 = vadd.xlane.f32.xlu0 %v1492
        %v1494 = vpop.xlane.xlu0 %1493
        %v1495 = vsel %vm1392, %v1462, 0.0
        %1496 = vadd.xlane.f32.xlu0 %v1495
        %v1497 = vpop.xlane.xlu0 %1496
        %v1498 = vsel %vm1392, %v1464, 0.0
        %1499 = vadd.xlane.f32.xlu0 %v1498
        %v1500 = vpop.xlane.xlu0 %1499
        %v1501 = vsel %vm1392, %v1466, 0.0
        %1502 = vadd.xlane.f32.xlu0 %v1501
        %v1503 = vpop.xlane.xlu0 %1502
        %v1504 = vsel %vm1392, %v1468, 0.0
        %1505 = vadd.xlane.f32.xlu0 %v1504
        %v1506 = vpop.xlane.xlu0 %1505
        %v1507 = vsel %vm1392, %v1470, 0.0
        %1508 = vadd.xlane.f32.xlu0 %v1507
        %v1509 = vpop.xlane.xlu0 %1508
        %v1510 = vsel %vm1392, %v1472, 0.0
        %1511 = vadd.xlane.f32.xlu0 %v1510
        %v1512 = vpop.xlane.xlu0 %1511
        %v1513 = vsel %vm1392, %v1474, 0.0
        %1514 = vadd.xlane.f32.xlu0 %v1513
        %v1515 = vpop.xlane.xlu0 %1514
        %v1516 = vsel %vm1392, %v1476, 0.0
        %1517 = vadd.xlane.f32.xlu0 %v1516
        %v1518 = vpop.xlane.xlu0 %1517
        %v1519 = vsel %vm1392, %v1478, 0.0
        %1520 = vadd.xlane.f32.xlu0 %v1519
        %v1521 = vpop.xlane.xlu0 %1520
        %v1522 = vsel %vm1392, %v1480, 0.0
        %1523 = vadd.xlane.f32.xlu0 %v1522
        %v1524 = vpop.xlane.xlu0 %1523
        %v1525 = vsel %vm1392, %v1482, 0.0
        %1526 = vadd.xlane.f32.xlu0 %v1525
        %v1527 = vpop.xlane.xlu0 %1526
        %v1528 = vsel %vm1392, %v1484, 0.0
        %1529 = vadd.xlane.f32.xlu0 %v1528
        %v1530 = vpop.xlane.xlu0 %1529
        %v1531 = vsel %vm1392, %v1486, 0.0
        %1532 = vadd.xlane.f32.xlu0 %v1531
        %v1533 = vpop.xlane.xlu0 %1532
        %v1534 = vsel %vm1392, %v1488, 0.0
        %1535 = vadd.xlane.f32.xlu0 %v1534
        %v1536 = vpop.xlane.xlu0 %1535
        %v1537 = vrcp.pop %v1491
        %v1538 = vrcp.pop %v1494
        %v1539 = vrcp.pop %v1497
        %v1540 = vrcp.pop %v1500
        %v1541 = vrcp.pop %v1503
        %v1542 = vrcp.pop %v1506
        %v1543 = vrcp.pop %v1509
        %v1544 = vrcp.pop %v1512
        %v1545 = vrcp.pop %v1515
        %v1546 = vrcp.pop %v1518
        %v1547 = vrcp.pop %v1521
        %v1548 = vrcp.pop %v1524
        %v1549 = vrcp.pop %v1527
        %v1550 = vrcp.pop %v1530
        %v1551 = vrcp.pop %v1533
        %v1552 = vrcp.pop %v1536
        %v1553 = vmul.f32 %v1458, %v1537
        %v1554 = vmul.f32 %v1460, %v1538
        %v1555 = vmul.f32 %v1462, %v1539
        %v1556 = vmul.f32 %v1464, %v1540
        %v1557 = vmul.f32 %v1466, %v1541
        %v1558 = vmul.f32 %v1468, %v1542
        %v1559 = vmul.f32 %v1470, %v1543
        %v1560 = vmul.f32 %v1472, %v1544
        %v1561 = vmul.f32 %v1474, %v1545
        %v1562 = vmul.f32 %v1476, %v1546
        %v1563 = vmul.f32 %v1478, %v1547
        %v1564 = vmul.f32 %v1480, %v1548
        %v1565 = vmul.f32 %v1482, %v1549
        %v1566 = vmul.f32 %v1484, %v1550
        %v1567 = vmul.f32 %v1486, %v1551
        %v1568 = vmul.f32 %v1488, %v1552
        %v1569 = vpack.c.bf16 %v1554, %v1553
        %v1570 = vpack.c.bf16 %v1556, %v1555
        %v1571 = vpack.c.bf16 %v1558, %v1557
        %v1572 = vpack.c.bf16 %v1560, %v1559
        %v1573 = vpack.c.bf16 %v1562, %v1561
        %v1574 = vpack.c.bf16 %v1564, %v1563
        %v1575 = vpack.c.bf16 %v1566, %v1565
        %v1576 = vpack.c.bf16 %v1568, %v1567
        %v1577 = vpack.c.bf16 %v1235, %v1232
        %v1579 = vsel %vm1392, %v1569, 0
        %v1582 = vsel %vm1392, %v1570, 0
        %v1585 = vsel %vm1392, %v1571, 0
        %v1588 = vsel %vm1392, %v1572, 0
        %v1591 = vsel %vm1392, %v1573, 0
        %v1594 = vsel %vm1392, %v1574, 0
        %v1597 = vsel %vm1392, %v1575, 0
        %v1600 = vsel %vm1392, %v1576, 0
        %1602 = vmatprep.subr.bf16.mxu0 0
        %1603 = vmatpush1.bf16.msra.mxu0 0
        %1604 = vmatprep.subr.bf16.mxu0 0
        %1605 = vmatpush1.bf16.msra.mxu0 0
        %1606 = vmatprep.subr.bf16.mxu0 0
        %1607 = vmatpush1.bf16.msra.mxu0 0
        %1608 = vmatprep.subr.bf16.mxu0 0
        %1609 = vmatpush1.bf16.msra.mxu0 0
        %1610 = vmatprep.subr.bf16.mxu0 0
        %1611 = vmatpush1.bf16.msra.mxu0 0
        %1612 = vmatprep.subr.bf16.mxu0 0
        %1613 = vmatpush1.bf16.msra.mxu0 0
        %1614 = vmatprep.subr.bf16.mxu0 0
        %1615 = vmatpush1.bf16.msra.mxu0 0
        %1616 = vmatprep.subr.bf16.mxu0 0
        %1617 = vmatpush1.bf16.msra.mxu0 %v1577
        %1618 = vmatprep.subr.bf16.mxu0 0
        %1619 = vmatpush2.bf16.msra.mxu0 0
        %1620 = vmatprep.subr.bf16.mxu0 0
        %1621 = vmatpush2.bf16.msra.mxu0 0
        %1622 = vmatprep.subr.bf16.mxu0 0
        %1623 = vmatpush2.bf16.msra.mxu0 0
        %1624 = vmatprep.subr.bf16.mxu0 0
        %1625 = vmatpush2.bf16.msra.mxu0 0
        %1626 = vmatprep.subr.bf16.mxu0 0
        %1627 = vmatpush2.bf16.msra.mxu0 0
        %1628 = vmatprep.subr.bf16.mxu0 0
        %1629 = vmatpush2.bf16.msra.mxu0 0
        %1630 = vmatprep.subr.bf16.mxu0 0
        %1631 = vmatpush2.bf16.msra.mxu0 0
        %1632 = vmatprep.subr.bf16.mxu0 0
        %1633 = vmatpush2.bf16.msra.mxu0 0
        %1634 = vmatprep.mubr.bf16.mxu0 0
        %1635 = vmatmul.mubr.bf16.gmra.mxu0 %v1579
        %v1636 = vpop.f32.mrf.mxu0
        %v1637 = vadd.f32 0.0, %v1636
        %v1638 = vpop.f32.mrf.mxu0
        %v1639 = vpop.f32.mrf.mxu0
        %v1640 = vadd.f32 0.0, %v1639
        %v1641 = vpop.f32.mrf.mxu0
        %1642 = vmatprep.mubr.bf16.mxu0 0
        %1643 = vmatmul.mubr.bf16.gmra.mxu0 %v1582
        %v1644 = vpop.f32.mrf.mxu0
        %v1645 = vadd.f32 0.0, %v1644
        %v1646 = vpop.f32.mrf.mxu0
        %v1647 = vpop.f32.mrf.mxu0
        %v1648 = vadd.f32 0.0, %v1647
        %v1649 = vpop.f32.mrf.mxu0
        %1650 = vmatprep.mubr.bf16.mxu0 0
        %1651 = vmatmul.mubr.bf16.gmra.mxu0 %v1585
        %v1652 = vpop.f32.mrf.mxu0
        %v1653 = vadd.f32 0.0, %v1652
        %v1654 = vpop.f32.mrf.mxu0
        %v1655 = vpop.f32.mrf.mxu0
        %v1656 = vadd.f32 0.0, %v1655
        %v1657 = vpop.f32.mrf.mxu0
        %1658 = vmatprep.mubr.bf16.mxu0 0
        %1659 = vmatmul.mubr.bf16.gmra.mxu0 %v1588
        %v1660 = vpop.f32.mrf.mxu0
        %v1661 = vadd.f32 0.0, %v1660
        %v1662 = vpop.f32.mrf.mxu0
        %v1663 = vpop.f32.mrf.mxu0
        %v1664 = vadd.f32 0.0, %v1663
        %v1665 = vpop.f32.mrf.mxu0
        %1666 = vmatprep.mubr.bf16.mxu0 0
        %1667 = vmatmul.mubr.bf16.gmra.mxu0 %v1591
        %v1668 = vpop.f32.mrf.mxu0
        %v1669 = vadd.f32 0.0, %v1668
        %v1670 = vpop.f32.mrf.mxu0
        %v1671 = vpop.f32.mrf.mxu0
        %v1672 = vadd.f32 0.0, %v1671
        %v1673 = vpop.f32.mrf.mxu0
        %1674 = vmatprep.mubr.bf16.mxu0 0
        %1675 = vmatmul.mubr.bf16.gmra.mxu0 %v1594
        %v1676 = vpop.f32.mrf.mxu0
        %v1677 = vadd.f32 0.0, %v1676
        %v1678 = vpop.f32.mrf.mxu0
        %v1679 = vpop.f32.mrf.mxu0
        %v1680 = vadd.f32 0.0, %v1679
        %v1681 = vpop.f32.mrf.mxu0
        %1682 = vmatprep.mubr.bf16.mxu0 0
        %1683 = vmatmul.mubr.bf16.gmra.mxu0 %v1597
        %v1684 = vpop.f32.mrf.mxu0
        %v1685 = vadd.f32 0.0, %v1684
        %v1686 = vpop.f32.mrf.mxu0
        %v1687 = vpop.f32.mrf.mxu0
        %v1688 = vadd.f32 0.0, %v1687
        %v1689 = vpop.f32.mrf.mxu0
        %1690 = vmatprep.mubr.bf16.mxu0 0
        %1691 = vmatmul.mubr.bf16.gmra.mxu0 %v1600
        %v1692 = vpop.f32.mrf.mxu0
        %v1693 = vadd.f32 0.0, %v1692
        %v1694 = vpop.f32.mrf.mxu0
        %v1695 = vpop.f32.mrf.mxu0
        %v1696 = vadd.f32 0.0, %v1695
        %v1697 = vpop.f32.mrf.mxu0
        %1698 = vdwg.mxu0
        %v1699 = vmul.f32 %v1637, %v924
        %v1700 = vmul.f32 %v1640, %v925
        %v1701 = vmul.f32 %v1645, %v926
        %v1702 = vmul.f32 %v1648, %v927
        %v1703 = vmul.f32 %v1653, %v928
        %v1704 = vmul.f32 %v1656, %v929
        %v1705 = vmul.f32 %v1661, %v930
        %v1706 = vmul.f32 %v1664, %v931
        %v1707 = vmul.f32 %v1669, %v932
        %v1708 = vmul.f32 %v1672, %v933
        %v1709 = vmul.f32 %v1677, %v934
        %v1710 = vmul.f32 %v1680, %v935
        %v1711 = vmul.f32 %v1685, %v936
        %v1712 = vmul.f32 %v1688, %v937
        %v1713 = vmul.f32 %v1693, %v938
        %v1714 = vmul.f32 %v1696, %v939
        %v1715 = vadd.f32 %v1699, %v1701
        %v1716 = vadd.f32 %v1700, %v1702
        %v1717 = vadd.f32 %v1715, %v1703
        %v1718 = vadd.f32 %v1716, %v1704
        %v1719 = vadd.f32 %v1717, %v1705
        %v1720 = vadd.f32 %v1718, %v1706
        %v1721 = vadd.f32 %v1719, %v1707
        %v1722 = vadd.f32 %v1720, %v1708
        %v1723 = vadd.f32 %v1721, %v1709
        %v1724 = vadd.f32 %v1722, %v1710
        %v1725 = vadd.f32 %v1723, %v1711
        %v1726 = vadd.f32 %v1724, %v1712
        %v1727 = vadd.f32 %v1725, %v1713
        %v1728 = vadd.f32 %v1726, %v1714
        %v1729 = vpack.c.bf16 %v1728, %v1727
        %v1730 = vld [vmem:[%s765] sm:$0xf]
        %v1731 = vld [vmem:[%s765 + $0x4] sm:$0xf]
        %v1732 = vld [vmem:[%s765 + $0x8] sm:$0xf]
        %v1733 = vld [vmem:[%s765 + $0xc] sm:$0xf]
        %v1734 = vld [vmem:[%s765 + $0x10] sm:$0xf]
        %v1735 = vld [vmem:[%s765 + $0x14] sm:$0xf]
        %v1736 = vld [vmem:[%s765 + $0x18] sm:$0xf]
        %v1737 = vld [vmem:[%s765 + $0x1c] sm:$0xf]
        %v1738 = vld [vmem:[%s765 + $0x20] sm:$0xf]
        %v1739 = vld [vmem:[%s765 + $0x24] sm:$0xf]
        %v1740 = vld [vmem:[%s765 + $0x28] sm:$0xf]
        %v1741 = vld [vmem:[%s765 + $0x2c] sm:$0xf]
        %v1742 = vld [vmem:[%s765 + $0x30] sm:$0xf]
        %v1743 = vld [vmem:[%s765 + $0x34] sm:$0xf]
        %v1744 = vld [vmem:[%s765 + $0x38] sm:$0xf]
        %v1745 = vld [vmem:[%s765 + $0x3c] sm:$0xf]
        %v1746 = vlaneseq
        %v1747 = vshrl.u32 %v1746, 7
        %v1748 = vsub.s32 0, %v1747
        %v1749 = vrot.slane %v975, %v1748
        %v1766 = vunpack.c.l.b16 %v1730
        %v1767 = vunpack.c.l.b16 %v1731
        %v1768 = vunpack.c.l.b16 %v1732
        %v1769 = vunpack.c.l.b16 %v1733
        %v1770 = vunpack.c.l.b16 %v1734
        %v1771 = vunpack.c.l.b16 %v1735
        %v1772 = vunpack.c.l.b16 %v1736
        %v1773 = vunpack.c.l.b16 %v1737
        %v1774 = vunpack.c.l.b16 %v1738
        %v1775 = vunpack.c.l.b16 %v1739
        %v1776 = vunpack.c.l.b16 %v1740
        %v1777 = vunpack.c.l.b16 %v1741
        %v1778 = vunpack.c.l.b16 %v1742
        %v1779 = vunpack.c.l.b16 %v1743
        %v1780 = vunpack.c.l.b16 %v1744
        %v1781 = vunpack.c.l.b16 %v1745
        %v1782 = vpack.c.b16 %v1767, %v1766
        %v1783 = vpack.c.b16 %v1769, %v1768
        %v1784 = vpack.c.b16 %v1771, %v1770
        %v1785 = vpack.c.b16 %v1773, %v1772
        %v1786 = vpack.c.b16 %v1775, %v1774
        %v1787 = vpack.c.b16 %v1777, %v1776
        %v1788 = vpack.c.b16 %v1779, %v1778
        %v1789 = vpack.c.b16 %v1781, %v1780
        %1798 = vmatprep.subr.bf16.mxu0 0
        %1799 = vmatpush1.bf16.msra.mxu0 %v1789
        %1800 = vmatprep.subr.bf16.mxu0 0
        %1801 = vmatpush1.bf16.msra.mxu0 %v1788
        %1802 = vmatprep.subr.bf16.mxu0 0
        %1803 = vmatpush1.bf16.msra.mxu0 %v1787
        %1804 = vmatprep.subr.bf16.mxu0 0
        %1805 = vmatpush1.bf16.msra.mxu0 %v1786
        %1806 = vmatprep.subr.bf16.mxu0 0
        %1807 = vmatpush1.bf16.msra.mxu0 %v1785
        %1808 = vmatprep.subr.bf16.mxu0 0
        %1809 = vmatpush1.bf16.msra.mxu0 %v1784
        %1810 = vmatprep.subr.bf16.mxu0 0
        %1811 = vmatpush1.bf16.msra.mxu0 %v1783
        %1812 = vmatprep.subr.bf16.mxu0 0
        %1813 = vmatpush1.bf16.msra.mxu0 %v1782
        %1814 = vmatprep.subr.bf16.mxu0 0
        %1815 = vmatpush2.bf16.msra.mxu0 0
        %1816 = vmatprep.subr.bf16.mxu0 0
        %1817 = vmatpush2.bf16.msra.mxu0 0
        %1818 = vmatprep.subr.bf16.mxu0 0
        %1819 = vmatpush2.bf16.msra.mxu0 0
        %1820 = vmatprep.subr.bf16.mxu0 0
        %1821 = vmatpush2.bf16.msra.mxu0 0
        %1822 = vmatprep.subr.bf16.mxu0 0
        %1823 = vmatpush2.bf16.msra.mxu0 0
        %1824 = vmatprep.subr.bf16.mxu0 0
        %1825 = vmatpush2.bf16.msra.mxu0 0
        %1826 = vmatprep.subr.bf16.mxu0 0
        %1827 = vmatpush2.bf16.msra.mxu0 0
        %1828 = vmatprep.subr.bf16.mxu0 0
        %1829 = vmatpush2.bf16.msra.mxu0 0
        %1830 = vmatprep.mubr.bf16.mxu0 0
        %1831 = vmatmul.mubr.bf16.gmra.mxu0 %v1729
        %v1832 = vpop.f32.mrf.mxu0
        %v1833 = vadd.f32 %v1749, %v1832
        %v1834 = vpop.f32.mrf.mxu0
        %v1835 = vpop.f32.mrf.mxu0
        %v1836 = vadd.f32 %v1749, %v1835
        %v1837 = vpop.f32.mrf.mxu0
        %1838 = vdwg.mxu0
        %v1839 = vadd.f32 %v1833, %v919
        %v1840 = vadd.f32 %v1836, %v920
        %1841 = vadd.xlane.f32.xlu0 %v1839
        %v1842 = vpop.xlane.xlu0 %1841
        %1843 = vadd.xlane.f32.xlu0 %v1840
        %v1844 = vpop.xlane.xlu0 %1843
        %v1845 = vmul.f32 %v1842, 0.015625
        %v1846 = vmul.f32 %v1844, 0.015625
        %v1847 = vsub.f32 %v1839, %v1845
        %v1848 = vsub.f32 %v1840, %v1846
        %v1849 = vmul.f32 %v1847, %v1847
        %v1850 = vmul.f32 %v1848, %v1848
        %1851 = vadd.xlane.f32.xlu0 %v1849
        %v1852 = vpop.xlane.xlu0 %1851
        %1853 = vadd.xlane.f32.xlu0 %v1850
        %v1854 = vpop.xlane.xlu0 %1853
        %v1855 = vmul.f32 %v1845, 64.0
        %v1856 = vmul.f32 %v1846, 64.0
        %v1857 = vmul.f32 %v1855, %v1845
        %v1858 = vmul.f32 %v1856, %v1846
        %v1859 = vsub.f32 %v1852, %v1857
        %v1860 = vsub.f32 %v1854, %v1858
        %v1861 = vmul.f32 %v1859, 0.015625
        %v1862 = vmul.f32 %v1860, 0.015625
        %v1863 = vmax.f32 %v1861, 0.0
        %v1864 = vmax.f32 %v1862, 0.0
        %v1865 = vadd.f32 %v1863, 1e-05
        %v1866 = vadd.f32 %v1864, 1e-05
        %v1867 = vrsqrt.pop %v1865
        %v1868 = vrsqrt.pop %v1866
        %v1869 = vmul.f32 %v1847, %v1867
        %v1870 = vmul.f32 %v1848, %v1868
        %v1871 = vlaneseq
        %v1872 = vshrl.u32 %v1871, 7
        %v1873 = vsub.s32 0, %v1872
        %v1874 = vrot.slane %v973, %v1873
        %v1875 = vmul.f32 %v1869, %v1874
        %v1876 = vmul.f32 %v1870, %v1874
        %v1877 = vlaneseq
        %v1878 = vshrl.u32 %v1877, 7
        %v1879 = vsub.s32 0, %v1878
        %v1880 = vrot.slane %v974, %v1879
        %v1881 = vadd.f32 %v1875, %v1880
        %v1882 = vadd.f32 %v1876, %v1880
        %v1883 = vld [vmem:[%s894] sm:$0xff]
        %v1884 = vld [vmem:[%s894 + $0x8] sm:$0xff]
        %v1885 = vld [vmem:[%s894 + $0x10] sm:$0xff]
        %v1886 = vld [vmem:[%s894 + $0x18] sm:$0xff]
        %v1887 = vld [vmem:[%s894 + $0x20] sm:$0xff]
        %v1888 = vld [vmem:[%s894 + $0x28] sm:$0xff]
        %v1889 = vld [vmem:[%s894 + $0x30] sm:$0xff]
        %v1890 = vld [vmem:[%s894 + $0x38] sm:$0xff]
        %v1891 = vld [vmem:[%s894 + $0x40] sm:$0xff]
        %v1892 = vld [vmem:[%s894 + $0x48] sm:$0xff]
        %v1893 = vld [vmem:[%s894 + $0x50] sm:$0xff]
        %v1894 = vld [vmem:[%s894 + $0x58] sm:$0xff]
        %v1895 = vld [vmem:[%s894 + $0x60] sm:$0xff]
        %v1896 = vld [vmem:[%s894 + $0x68] sm:$0xff]
        %v1897 = vld [vmem:[%s894 + $0x70] sm:$0xff]
        %v1898 = vld [vmem:[%s894 + $0x78] sm:$0xff]
        %v1899 = vld [vmem:[%s756] sm:$0x3]
        %v1901 = vlaneseq
        %v1902 = vshrl.u32 %v1901, 7
        %v1903 = vsub.s32 0, %v1902
        %v1904 = vrot.slane %v1899, %v1903
        %v1905 = vlaneseq
        %v1906 = vshrl.u32 %v1905, 7
        %v1907 = vsub.s32 1, %v1906
        %v1908 = vrot.slane %v1899, %v1907
        %v1927 = vunpack.c.l.b16 %v1883
        %v1928 = vunpack.c.h.b16 %v1883
        %v1929 = vunpack.c.l.b16 %v1884
        %v1930 = vunpack.c.h.b16 %v1884
        %v1931 = vunpack.c.l.b16 %v1885
        %v1932 = vunpack.c.h.b16 %v1885
        %v1933 = vunpack.c.l.b16 %v1886
        %v1934 = vunpack.c.h.b16 %v1886
        %v1935 = vunpack.c.l.b16 %v1887
        %v1936 = vunpack.c.h.b16 %v1887
        %v1937 = vunpack.c.l.b16 %v1888
        %v1938 = vunpack.c.h.b16 %v1888
        %v1939 = vunpack.c.l.b16 %v1889
        %v1940 = vunpack.c.h.b16 %v1889
        %v1941 = vunpack.c.l.b16 %v1890
        %v1942 = vunpack.c.h.b16 %v1890
        %v1943 = vunpack.c.l.b16 %v1891
        %v1944 = vunpack.c.h.b16 %v1891
        %v1945 = vunpack.c.l.b16 %v1892
        %v1946 = vunpack.c.h.b16 %v1892
        %v1947 = vunpack.c.l.b16 %v1893
        %v1948 = vunpack.c.h.b16 %v1893
        %v1949 = vunpack.c.l.b16 %v1894
        %v1950 = vunpack.c.h.b16 %v1894
        %v1951 = vunpack.c.l.b16 %v1895
        %v1952 = vunpack.c.h.b16 %v1895
        %v1953 = vunpack.c.l.b16 %v1896
        %v1954 = vunpack.c.h.b16 %v1896
        %v1955 = vunpack.c.l.b16 %v1897
        %v1956 = vunpack.c.h.b16 %v1897
        %v1957 = vunpack.c.l.b16 %v1898
        %v1958 = vunpack.c.h.b16 %v1898
        %v1959 = vpack.c.b16 %v1929, %v1927
        %v1960 = vpack.c.b16 %v1930, %v1928
        %v1961 = vpack.c.b16 %v1933, %v1931
        %v1962 = vpack.c.b16 %v1934, %v1932
        %v1963 = vpack.c.b16 %v1937, %v1935
        %v1964 = vpack.c.b16 %v1938, %v1936
        %v1965 = vpack.c.b16 %v1941, %v1939
        %v1966 = vpack.c.b16 %v1942, %v1940
        %v1967 = vpack.c.b16 %v1945, %v1943
        %v1968 = vpack.c.b16 %v1946, %v1944
        %v1969 = vpack.c.b16 %v1949, %v1947
        %v1970 = vpack.c.b16 %v1950, %v1948
        %v1971 = vpack.c.b16 %v1953, %v1951
        %v1972 = vpack.c.b16 %v1954, %v1952
        %v1973 = vpack.c.b16 %v1957, %v1955
        %v1974 = vpack.c.b16 %v1958, %v1956
        %1991 = vmatprep.subr.bf16.mxu0 %v1974
        %1992 = vmatpush1.bf16.msra.mxu0 %v1973
        %1993 = vmatprep.subr.bf16.mxu0 %v1972
        %1994 = vmatpush1.bf16.msra.mxu0 %v1971
        %1995 = vmatprep.subr.bf16.mxu0 %v1970
        %1996 = vmatpush1.bf16.msra.mxu0 %v1969
        %1997 = vmatprep.subr.bf16.mxu0 %v1968
        %1998 = vmatpush1.bf16.msra.mxu0 %v1967
        %1999 = vmatprep.subr.bf16.mxu0 %v1966
        %2000 = vmatpush1.bf16.msra.mxu0 %v1965
        %2001 = vmatprep.subr.bf16.mxu0 %v1964
        %2002 = vmatpush1.bf16.msra.mxu0 %v1963
        %2003 = vmatprep.subr.bf16.mxu0 %v1962
        %2004 = vmatpush1.bf16.msra.mxu0 %v1961
        %2005 = vmatprep.subr.bf16.mxu0 %v1960
        %2006 = vmatpush1.bf16.msra.mxu0 %v1959
        %2007 = vmatprep.subr.bf16.mxu0 0
        %2008 = vmatpush2.bf16.msra.mxu0 0
        %2009 = vmatprep.subr.bf16.mxu0 0
        %2010 = vmatpush2.bf16.msra.mxu0 0
        %2011 = vmatprep.subr.bf16.mxu0 0
        %2012 = vmatpush2.bf16.msra.mxu0 0
        %2013 = vmatprep.subr.bf16.mxu0 0
        %2014 = vmatpush2.bf16.msra.mxu0 0
        %2015 = vmatprep.subr.bf16.mxu0 0
        %2016 = vmatpush2.bf16.msra.mxu0 0
        %2017 = vmatprep.subr.bf16.mxu0 0
        %2018 = vmatpush2.bf16.msra.mxu0 0
        %2019 = vmatprep.subr.bf16.mxu0 0
        %2020 = vmatpush2.bf16.msra.mxu0 0
        %2021 = vmatprep.subr.bf16.mxu0 0
        %2022 = vmatpush2.bf16.msra.mxu0 0
        %2023 = vmatprep.mubr.bf16.mxu0 0
        %2024 = vmatmul.mubr.bf16.gmra.mxu0 %v923
        %v2025 = vpop.f32.mrf.mxu0
        %v2026 = vadd.f32 %v1904, %v2025
        %v2027 = vpop.f32.mrf.mxu0
        %v2028 = vadd.f32 %v1908, %v2027
        %v2029 = vpop.f32.mrf.mxu0
        %v2030 = vadd.f32 %v1904, %v2029
        %v2031 = vpop.f32.mrf.mxu0
        %v2032 = vadd.f32 %v1908, %v2031
        %2033 = vdwg.mxu0
        %v2034 = vpack.c.bf16 %v1882, %v1881
        %s2035 = scalar_lea.vmem %s765, 64 [#allocation11]
        %v2036 = vld [vmem:[%s2035] sm:$0xf]
        %v2037 = vld [vmem:[%s2035 + $0x4] sm:$0xf]
        %v2038 = vld [vmem:[%s2035 + $0x8] sm:$0xf]
        %v2039 = vld [vmem:[%s2035 + $0xc] sm:$0xf]
        %v2040 = vld [vmem:[%s2035 + $0x10] sm:$0xf]
        %v2041 = vld [vmem:[%s2035 + $0x14] sm:$0xf]
        %v2042 = vld [vmem:[%s2035 + $0x18] sm:$0xf]
        %v2043 = vld [vmem:[%s2035 + $0x1c] sm:$0xf]
        %v2044 = vld [vmem:[%s2035 + $0x20] sm:$0xf]
        %v2045 = vld [vmem:[%s2035 + $0x24] sm:$0xf]
        %v2046 = vld [vmem:[%s2035 + $0x28] sm:$0xf]
        %v2047 = vld [vmem:[%s2035 + $0x2c] sm:$0xf]
        %v2048 = vld [vmem:[%s2035 + $0x30] sm:$0xf]
        %v2049 = vld [vmem:[%s2035 + $0x34] sm:$0xf]
        %v2050 = vld [vmem:[%s2035 + $0x38] sm:$0xf]
        %v2051 = vld [vmem:[%s2035 + $0x3c] sm:$0xf]
        %v2052 = vlaneseq
        %v2053 = vshrl.u32 %v2052, 7
        %v2054 = vsub.s32 1, %v2053
        %v2055 = vrot.slane %v975, %v2054
        %v2072 = vunpack.c.l.b16 %v2036
        %v2073 = vunpack.c.l.b16 %v2037
        %v2074 = vunpack.c.l.b16 %v2038
        %v2075 = vunpack.c.l.b16 %v2039
        %v2076 = vunpack.c.l.b16 %v2040
        %v2077 = vunpack.c.l.b16 %v2041
        %v2078 = vunpack.c.l.b16 %v2042
        %v2079 = vunpack.c.l.b16 %v2043
        %v2080 = vunpack.c.l.b16 %v2044
        %v2081 = vunpack.c.l.b16 %v2045
        %v2082 = vunpack.c.l.b16 %v2046
        %v2083 = vunpack.c.l.b16 %v2047
        %v2084 = vunpack.c.l.b16 %v2048
        %v2085 = vunpack.c.l.b16 %v2049
        %v2086 = vunpack.c.l.b16 %v2050
        %v2087 = vunpack.c.l.b16 %v2051
        %v2088 = vpack.c.b16 %v2073, %v2072
        %v2089 = vpack.c.b16 %v2075, %v2074
        %v2090 = vpack.c.b16 %v2077, %v2076
        %v2091 = vpack.c.b16 %v2079, %v2078
        %v2092 = vpack.c.b16 %v2081, %v2080
        %v2093 = vpack.c.b16 %v2083, %v2082
        %v2094 = vpack.c.b16 %v2085, %v2084
        %v2095 = vpack.c.b16 %v2087, %v2086
        %2104 = vmatprep.subr.bf16.mxu0 0
        %2105 = vmatpush1.bf16.msra.mxu0 %v2095
        %2106 = vmatprep.subr.bf16.mxu0 0
        %2107 = vmatpush1.bf16.msra.mxu0 %v2094
        %2108 = vmatprep.subr.bf16.mxu0 0
        %2109 = vmatpush1.bf16.msra.mxu0 %v2093
        %2110 = vmatprep.subr.bf16.mxu0 0
        %2111 = vmatpush1.bf16.msra.mxu0 %v2092
        %2112 = vmatprep.subr.bf16.mxu0 0
        %2113 = vmatpush1.bf16.msra.mxu0 %v2091
        %2114 = vmatprep.subr.bf16.mxu0 0
        %2115 = vmatpush1.bf16.msra.mxu0 %v2090
        %2116 = vmatprep.subr.bf16.mxu0 0
        %2117 = vmatpush1.bf16.msra.mxu0 %v2089
        %2118 = vmatprep.subr.bf16.mxu0 0
        %2119 = vmatpush1.bf16.msra.mxu0 %v2088
        %2120 = vmatprep.subr.bf16.mxu0 0
        %2121 = vmatpush2.bf16.msra.mxu0 0
        %2122 = vmatprep.subr.bf16.mxu0 0
        %2123 = vmatpush2.bf16.msra.mxu0 0
        %2124 = vmatprep.subr.bf16.mxu0 0
        %2125 = vmatpush2.bf16.msra.mxu0 0
        %2126 = vmatprep.subr.bf16.mxu0 0
        %2127 = vmatpush2.bf16.msra.mxu0 0
        %2128 = vmatprep.subr.bf16.mxu0 0
        %2129 = vmatpush2.bf16.msra.mxu0 0
        %2130 = vmatprep.subr.bf16.mxu0 0
        %2131 = vmatpush2.bf16.msra.mxu0 0
        %2132 = vmatprep.subr.bf16.mxu0 0
        %2133 = vmatpush2.bf16.msra.mxu0 0
        %2134 = vmatprep.subr.bf16.mxu0 0
        %2135 = vmatpush2.bf16.msra.mxu0 0
        %2136 = vmatprep.mubr.bf16.mxu0 0
        %2137 = vmatmul.mubr.bf16.gmra.mxu0 %v2034
        %v2138 = vpop.f32.mrf.mxu0
        %v2139 = vadd.f32 %v2055, %v2138
        %v2140 = vpop.f32.mrf.mxu0
        %v2141 = vpop.f32.mrf.mxu0
        %v2142 = vadd.f32 %v2055, %v2141
        %v2143 = vpop.f32.mrf.mxu0
        %2144 = vdwg.mxu0
        %v2145 = vmul.f32 %v2026, %v924
        %v2146 = vmul.f32 %v2030, %v925
        %v2147 = vmul.f32 %v2026, %v926
        %v2148 = vmul.f32 %v2030, %v927
        %v2149 = vmul.f32 %v2026, %v928
        %v2150 = vmul.f32 %v2030, %v929
        %v2151 = vmul.f32 %v2026, %v930
        %v2152 = vmul.f32 %v2030, %v931
        %v2153 = vmul.f32 %v2026, %v932
        %v2154 = vmul.f32 %v2030, %v933
        %v2155 = vmul.f32 %v2026, %v934
        %v2156 = vmul.f32 %v2030, %v935
        %v2157 = vmul.f32 %v2026, %v936
        %v2158 = vmul.f32 %v2030, %v937
        %v2159 = vmul.f32 %v2026, %v938
        %v2160 = vmul.f32 %v2030, %v939
        %v2161 = vpack.c.bf16 %v2146, %v2145
        %v2162 = vpack.c.bf16 %v2148, %v2147
        %v2163 = vpack.c.bf16 %v2150, %v2149
        %v2164 = vpack.c.bf16 %v2152, %v2151
        %v2165 = vpack.c.bf16 %v2154, %v2153
        %v2166 = vpack.c.bf16 %v2156, %v2155
        %v2167 = vpack.c.bf16 %v2158, %v2157
        %v2168 = vpack.c.bf16 %v2160, %v2159
        %v2169 = vpack.c.bf16 %v2142, %v2139
        %2170 = vmatprep.subr.bf16.mxu0 0
        %2171 = vmatpush1.bf16.xpose.msra.mxu0 0
        %2172 = vmatprep.subr.bf16.mxu0 0
        %2173 = vmatpush1.bf16.xpose.msra.mxu0 0
        %2174 = vmatprep.subr.bf16.mxu0 0
        %2175 = vmatpush1.bf16.xpose.msra.mxu0 0
        %2176 = vmatprep.subr.bf16.mxu0 0
        %2177 = vmatpush1.bf16.xpose.msra.mxu0 0
        %2178 = vmatprep.subr.bf16.mxu0 0
        %2179 = vmatpush1.bf16.xpose.msra.mxu0 0
        %2180 = vmatprep.subr.bf16.mxu0 0
        %2181 = vmatpush1.bf16.xpose.msra.mxu0 0
        %2182 = vmatprep.subr.bf16.mxu0 0
        %2183 = vmatpush1.bf16.xpose.msra.mxu0 0
        %2184 = vmatprep.subr.bf16.mxu0 0
        %2185 = vmatpush1.bf16.xpose.msra.mxu0 %v2169
        %2186 = vmatprep.subr.bf16.mxu0 0
        %2187 = vmatpush2.bf16.xpose.msra.mxu0 0
        %2188 = vmatprep.subr.bf16.mxu0 0
        %2189 = vmatpush2.bf16.xpose.msra.mxu0 0
        %2190 = vmatprep.subr.bf16.mxu0 0
        %2191 = vmatpush2.bf16.xpose.msra.mxu0 0
        %2192 = vmatprep.subr.bf16.mxu0 0
        %2193 = vmatpush2.bf16.xpose.msra.mxu0 0
        %2194 = vmatprep.subr.bf16.mxu0 0
        %2195 = vmatpush2.bf16.xpose.msra.mxu0 0
        %2196 = vmatprep.subr.bf16.mxu0 0
        %2197 = vmatpush2.bf16.xpose.msra.mxu0 0
        %2198 = vmatprep.subr.bf16.mxu0 0
        %2199 = vmatpush2.bf16.xpose.msra.mxu0 0
        %2200 = vmatprep.subr.bf16.mxu0 0
        %2201 = vmatpush2.bf16.xpose.msra.mxu0 0
        %2202 = vmatprep.mubr.bf16.mxu0 0
        %2203 = vmatmul.mubr.bf16.gmra.mxu0 %v2161
        %v2204 = vpop.f32.mrf.mxu0
        %v2205 = vadd.f32 0.0, %v2204
        %v2206 = vpop.f32.mrf.mxu0
        %v2207 = vpop.f32.mrf.mxu0
        %v2208 = vadd.f32 0.0, %v2207
        %v2209 = vpop.f32.mrf.mxu0
        %2210 = vmatprep.mubr.bf16.mxu0 0
        %2211 = vmatmul.mubr.bf16.gmra.mxu0 %v2162
        %v2212 = vpop.f32.mrf.mxu0
        %v2213 = vadd.f32 0.0, %v2212
        %v2214 = vpop.f32.mrf.mxu0
        %v2215 = vpop.f32.mrf.mxu0
        %v2216 = vadd.f32 0.0, %v2215
        %v2217 = vpop.f32.mrf.mxu0
        %2218 = vmatprep.mubr.bf16.mxu0 0
        %2219 = vmatmul.mubr.bf16.gmra.mxu0 %v2163
        %v2220 = vpop.f32.mrf.mxu0
        %v2221 = vadd.f32 0.0, %v2220
        %v2222 = vpop.f32.mrf.mxu0
        %v2223 = vpop.f32.mrf.mxu0
        %v2224 = vadd.f32 0.0, %v2223
        %v2225 = vpop.f32.mrf.mxu0
        %2226 = vmatprep.mubr.bf16.mxu0 0
        %2227 = vmatmul.mubr.bf16.gmra.mxu0 %v2164
        %v2228 = vpop.f32.mrf.mxu0
        %v2229 = vadd.f32 0.0, %v2228
        %v2230 = vpop.f32.mrf.mxu0
        %v2231 = vpop.f32.mrf.mxu0
        %v2232 = vadd.f32 0.0, %v2231
        %v2233 = vpop.f32.mrf.mxu0
        %2234 = vmatprep.mubr.bf16.mxu0 0
        %2235 = vmatmul.mubr.bf16.gmra.mxu0 %v2165
        %v2236 = vpop.f32.mrf.mxu0
        %v2237 = vadd.f32 0.0, %v2236
        %v2238 = vpop.f32.mrf.mxu0
        %v2239 = vpop.f32.mrf.mxu0
        %v2240 = vadd.f32 0.0, %v2239
        %v2241 = vpop.f32.mrf.mxu0
        %2242 = vmatprep.mubr.bf16.mxu0 0
        %2243 = vmatmul.mubr.bf16.gmra.mxu0 %v2166
        %v2244 = vpop.f32.mrf.mxu0
        %v2245 = vadd.f32 0.0, %v2244
        %v2246 = vpop.f32.mrf.mxu0
        %v2247 = vpop.f32.mrf.mxu0
        %v2248 = vadd.f32 0.0, %v2247
        %v2249 = vpop.f32.mrf.mxu0
        %2250 = vmatprep.mubr.bf16.mxu0 0
        %2251 = vmatmul.mubr.bf16.gmra.mxu0 %v2167
        %v2252 = vpop.f32.mrf.mxu0
        %v2253 = vadd.f32 0.0, %v2252
        %v2254 = vpop.f32.mrf.mxu0
        %v2255 = vpop.f32.mrf.mxu0
        %v2256 = vadd.f32 0.0, %v2255
        %v2257 = vpop.f32.mrf.mxu0
        %2258 = vmatprep.mubr.bf16.mxu0 0
        %2259 = vmatmul.mubr.bf16.gmra.mxu0 %v2168
        %v2260 = vpop.f32.mrf.mxu0
        %v2261 = vadd.f32 0.0, %v2260
        %v2262 = vpop.f32.mrf.mxu0
        %v2263 = vpop.f32.mrf.mxu0
        %v2264 = vadd.f32 0.0, %v2263
        %v2265 = vpop.f32.mrf.mxu0
        %2266 = vdwg.mxu0
        %v2267 = vmul.f32 %v2205, 0.35355338
        %v2268 = vmul.f32 %v2208, 0.35355338
        %v2269 = vmul.f32 %v2213, 0.35355338
        %v2270 = vmul.f32 %v2216, 0.35355338
        %v2271 = vmul.f32 %v2221, 0.35355338
        %v2272 = vmul.f32 %v2224, 0.35355338
        %v2273 = vmul.f32 %v2229, 0.35355338
        %v2274 = vmul.f32 %v2232, 0.35355338
        %v2275 = vmul.f32 %v2237, 0.35355338
        %v2276 = vmul.f32 %v2240, 0.35355338
        %v2277 = vmul.f32 %v2245, 0.35355338
        %v2278 = vmul.f32 %v2248, 0.35355338
        %v2279 = vmul.f32 %v2253, 0.35355338
        %v2280 = vmul.f32 %v2256, 0.35355338
        %v2281 = vmul.f32 %v2261, 0.35355338
        %v2282 = vmul.f32 %v2264, 0.35355338
        %v2283 = vadd.f32 %v2267, %v957
        %v2284 = vadd.f32 %v2268, %v958
        %v2285 = vadd.f32 %v2269, %v959
        %v2286 = vadd.f32 %v2270, %v960
        %v2287 = vadd.f32 %v2271, %v961
        %v2288 = vadd.f32 %v2272, %v962
        %v2289 = vadd.f32 %v2273, %v963
        %v2290 = vadd.f32 %v2274, %v964
        %v2291 = vadd.f32 %v2275, %v965
        %v2292 = vadd.f32 %v2276, %v966
        %v2293 = vadd.f32 %v2277, %v967
        %v2294 = vadd.f32 %v2278, %v968
        %v2295 = vadd.f32 %v2279, %v969
        %v2296 = vadd.f32 %v2280, %v970
        %v2297 = vadd.f32 %v2281, %v971
        %v2298 = vadd.f32 %v2282, %v972
        %v2299 = vsel %vm1392, %v2283, -inf
        %2300 = vmax.xlane.f32.xlu0 %v2299
        %v2301 = vpop.xlane.xlu0 %2300
        %v2302 = vsel %vm1392, %v2284, -inf
        %2303 = vmax.xlane.f32.xlu0 %v2302
        %v2304 = vpop.xlane.xlu0 %2303
        %v2305 = vsel %vm1392, %v2285, -inf
        %2306 = vmax.xlane.f32.xlu0 %v2305
        %v2307 = vpop.xlane.xlu0 %2306
        %v2308 = vsel %vm1392, %v2286, -inf
        %2309 = vmax.xlane.f32.xlu0 %v2308
        %v2310 = vpop.xlane.xlu0 %2309
        %v2311 = vsel %vm1392, %v2287, -inf
        %2312 = vmax.xlane.f32.xlu0 %v2311
        %v2313 = vpop.xlane.xlu0 %2312
        %v2314 = vsel %vm1392, %v2288, -inf
        %2315 = vmax.xlane.f32.xlu0 %v2314
        %v2316 = vpop.xlane.xlu0 %2315
        %v2317 = vsel %vm1392, %v2289, -inf
        %2318 = vmax.xlane.f32.xlu0 %v2317
        %v2319 = vpop.xlane.xlu0 %2318
        %v2320 = vsel %vm1392, %v2290, -inf
        %2321 = vmax.xlane.f32.xlu0 %v2320
        %v2322 = vpop.xlane.xlu0 %2321
        %v2323 = vsel %vm1392, %v2291, -inf
        %2324 = vmax.xlane.f32.xlu0 %v2323
        %v2325 = vpop.xlane.xlu0 %2324
        %v2326 = vsel %vm1392, %v2292, -inf
        %2327 = vmax.xlane.f32.xlu0 %v2326
        %v2328 = vpop.xlane.xlu0 %2327
        %v2329 = vsel %vm1392, %v2293, -inf
        %2330 = vmax.xlane.f32.xlu0 %v2329
        %v2331 = vpop.xlane.xlu0 %2330
        %v2332 = vsel %vm1392, %v2294, -inf
        %2333 = vmax.xlane.f32.xlu0 %v2332
        %v2334 = vpop.xlane.xlu0 %2333
        %v2335 = vsel %vm1392, %v2295, -inf
        %2336 = vmax.xlane.f32.xlu0 %v2335
        %v2337 = vpop.xlane.xlu0 %2336
        %v2338 = vsel %vm1392, %v2296, -inf
        %2339 = vmax.xlane.f32.xlu0 %v2338
        %v2340 = vpop.xlane.xlu0 %2339
        %v2341 = vsel %vm1392, %v2297, -inf
        %2342 = vmax.xlane.f32.xlu0 %v2341
        %v2343 = vpop.xlane.xlu0 %2342
        %v2344 = vsel %vm1392, %v2298, -inf
        %2345 = vmax.xlane.f32.xlu0 %v2344
        %v2346 = vpop.xlane.xlu0 %2345
        %v2347 = vsub.f32 %v2283, %v2301
        %v2348 = vsub.f32 %v2284, %v2304
        %v2349 = vsub.f32 %v2285, %v2307
        %v2350 = vsub.f32 %v2286, %v2310
        %v2351 = vsub.f32 %v2287, %v2313
        %v2352 = vsub.f32 %v2288, %v2316
        %v2353 = vsub.f32 %v2289, %v2319
        %v2354 = vsub.f32 %v2290, %v2322
        %v2355 = vsub.f32 %v2291, %v2325
        %v2356 = vsub.f32 %v2292, %v2328
        %v2357 = vsub.f32 %v2293, %v2331
        %v2358 = vsub.f32 %v2294, %v2334
        %v2359 = vsub.f32 %v2295, %v2337
        %v2360 = vsub.f32 %v2296, %v2340
        %v2361 = vsub.f32 %v2297, %v2343
        %v2362 = vsub.f32 %v2298, %v2346
        %v2363 = vmul.f32 %v2347, 1.442695
        %v2364 = vpow.pop %v2363
        %v2365 = vmul.f32 %v2348, 1.442695
        %v2366 = vpow.pop %v2365
        %v2367 = vmul.f32 %v2349, 1.442695
        %v2368 = vpow.pop %v2367
        %v2369 = vmul.f32 %v2350, 1.442695
        %v2370 = vpow.pop %v2369
        %v2371 = vmul.f32 %v2351, 1.442695
        %v2372 = vpow.pop %v2371
        %v2373 = vmul.f32 %v2352, 1.442695
        %v2374 = vpow.pop %v2373
        %v2375 = vmul.f32 %v2353, 1.442695
        %v2376 = vpow.pop %v2375
        %v2377 = vmul.f32 %v2354, 1.442695
        %v2378 = vpow.pop %v2377
        %v2379 = vmul.f32 %v2355, 1.442695
        %v2380 = vpow.pop %v2379
        %v2381 = vmul.f32 %v2356, 1.442695
        %v2382 = vpow.pop %v2381
        %v2383 = vmul.f32 %v2357, 1.442695
        %v2384 = vpow.pop %v2383
        %v2385 = vmul.f32 %v2358, 1.442695
        %v2386 = vpow.pop %v2385
        %v2387 = vmul.f32 %v2359, 1.442695
        %v2388 = vpow.pop %v2387
        %v2389 = vmul.f32 %v2360, 1.442695
        %v2390 = vpow.pop %v2389
        %v2391 = vmul.f32 %v2361, 1.442695
        %v2392 = vpow.pop %v2391
        %v2393 = vmul.f32 %v2362, 1.442695
        %v2394 = vpow.pop %v2393
        %v2395 = vsel %vm1392, %v2364, 0.0
        %2396 = vadd.xlane.f32.xlu0 %v2395
        %v2397 = vpop.xlane.xlu0 %2396
        %v2398 = vsel %vm1392, %v2366, 0.0
        %2399 = vadd.xlane.f32.xlu0 %v2398
        %v2400 = vpop.xlane.xlu0 %2399
        %v2401 = vsel %vm1392, %v2368, 0.0
        %2402 = vadd.xlane.f32.xlu0 %v2401
        %v2403 = vpop.xlane.xlu0 %2402
        %v2404 = vsel %vm1392, %v2370, 0.0
        %2405 = vadd.xlane.f32.xlu0 %v2404
        %v2406 = vpop.xlane.xlu0 %2405
        %v2407 = vsel %vm1392, %v2372, 0.0
        %2408 = vadd.xlane.f32.xlu0 %v2407
        %v2409 = vpop.xlane.xlu0 %2408
        %v2410 = vsel %vm1392, %v2374, 0.0
        %2411 = vadd.xlane.f32.xlu0 %v2410
        %v2412 = vpop.xlane.xlu0 %2411
        %v2413 = vsel %vm1392, %v2376, 0.0
        %2414 = vadd.xlane.f32.xlu0 %v2413
        %v2415 = vpop.xlane.xlu0 %2414
        %v2416 = vsel %vm1392, %v2378, 0.0
        %2417 = vadd.xlane.f32.xlu0 %v2416
        %v2418 = vpop.xlane.xlu0 %2417
        %v2419 = vsel %vm1392, %v2380, 0.0
        %2420 = vadd.xlane.f32.xlu0 %v2419
        %v2421 = vpop.xlane.xlu0 %2420
        %v2422 = vsel %vm1392, %v2382, 0.0
        %2423 = vadd.xlane.f32.xlu0 %v2422
        %v2424 = vpop.xlane.xlu0 %2423
        %v2425 = vsel %vm1392, %v2384, 0.0
        %2426 = vadd.xlane.f32.xlu0 %v2425
        %v2427 = vpop.xlane.xlu0 %2426
        %v2428 = vsel %vm1392, %v2386, 0.0
        %2429 = vadd.xlane.f32.xlu0 %v2428
        %v2430 = vpop.xlane.xlu0 %2429
        %v2431 = vsel %vm1392, %v2388, 0.0
        %2432 = vadd.xlane.f32.xlu0 %v2431
        %v2433 = vpop.xlane.xlu0 %2432
        %v2434 = vsel %vm1392, %v2390, 0.0
        %2435 = vadd.xlane.f32.xlu0 %v2434
        %v2436 = vpop.xlane.xlu0 %2435
        %v2437 = vsel %vm1392, %v2392, 0.0
        %2438 = vadd.xlane.f32.xlu0 %v2437
        %v2439 = vpop.xlane.xlu0 %2438
        %v2440 = vsel %vm1392, %v2394, 0.0
        %2441 = vadd.xlane.f32.xlu0 %v2440
        %v2442 = vpop.xlane.xlu0 %2441
        %v2443 = vrcp.pop %v2397
        %v2444 = vrcp.pop %v2400
        %v2445 = vrcp.pop %v2403
        %v2446 = vrcp.pop %v2406
        %v2447 = vrcp.pop %v2409
        %v2448 = vrcp.pop %v2412
        %v2449 = vrcp.pop %v2415
        %v2450 = vrcp.pop %v2418
        %v2451 = vrcp.pop %v2421
        %v2452 = vrcp.pop %v2424
        %v2453 = vrcp.pop %v2427
        %v2454 = vrcp.pop %v2430
        %v2455 = vrcp.pop %v2433
        %v2456 = vrcp.pop %v2436
        %v2457 = vrcp.pop %v2439
        %v2458 = vrcp.pop %v2442
        %v2459 = vmul.f32 %v2364, %v2443
        %v2460 = vmul.f32 %v2366, %v2444
        %v2461 = vmul.f32 %v2368, %v2445
        %v2462 = vmul.f32 %v2370, %v2446
        %v2463 = vmul.f32 %v2372, %v2447
        %v2464 = vmul.f32 %v2374, %v2448
        %v2465 = vmul.f32 %v2376, %v2449
        %v2466 = vmul.f32 %v2378, %v2450
        %v2467 = vmul.f32 %v2380, %v2451
        %v2468 = vmul.f32 %v2382, %v2452
        %v2469 = vmul.f32 %v2384, %v2453
        %v2470 = vmul.f32 %v2386, %v2454
        %v2471 = vmul.f32 %v2388, %v2455
        %v2472 = vmul.f32 %v2390, %v2456
        %v2473 = vmul.f32 %v2392, %v2457
        %v2474 = vmul.f32 %v2394, %v2458
        %v2475 = vpack.c.bf16 %v2460, %v2459
        %v2476 = vpack.c.bf16 %v2462, %v2461
        %v2477 = vpack.c.bf16 %v2464, %v2463
        %v2478 = vpack.c.bf16 %v2466, %v2465
        %v2479 = vpack.c.bf16 %v2468, %v2467
        %v2480 = vpack.c.bf16 %v2470, %v2469
        %v2481 = vpack.c.bf16 %v2472, %v2471
        %v2482 = vpack.c.bf16 %v2474, %v2473
        %v2483 = vpack.c.bf16 %v2032, %v2028
        %v2485 = vsel %vm1392, %v2475, 0
        %v2488 = vsel %vm1392, %v2476, 0
        %v2491 = vsel %vm1392, %v2477, 0
        %v2494 = vsel %vm1392, %v2478, 0
        %v2497 = vsel %vm1392, %v2479, 0
        %v2500 = vsel %vm1392, %v2480, 0
        %v2503 = vsel %vm1392, %v2481, 0
        %v2506 = vsel %vm1392, %v2482, 0
        %2508 = vmatprep.subr.bf16.mxu0 0
        %2509 = vmatpush1.bf16.msra.mxu0 0
        %2510 = vmatprep.subr.bf16.mxu0 0
        %2511 = vmatpush1.bf16.msra.mxu0 0
        %2512 = vmatprep.subr.bf16.mxu0 0
        %2513 = vmatpush1.bf16.msra.mxu0 0
        %2514 = vmatprep.subr.bf16.mxu0 0
        %2515 = vmatpush1.bf16.msra.mxu0 0
        %2516 = vmatprep.subr.bf16.mxu0 0
        %2517 = vmatpush1.bf16.msra.mxu0 0
        %2518 = vmatprep.subr.bf16.mxu0 0
        %2519 = vmatpush1.bf16.msra.mxu0 0
        %2520 = vmatprep.subr.bf16.mxu0 0
        %2521 = vmatpush1.bf16.msra.mxu0 0
        %2522 = vmatprep.subr.bf16.mxu0 0
        %2523 = vmatpush1.bf16.msra.mxu0 %v2483
        %2524 = vmatprep.subr.bf16.mxu0 0
        %2525 = vmatpush2.bf16.msra.mxu0 0
        %2526 = vmatprep.subr.bf16.mxu0 0
        %2527 = vmatpush2.bf16.msra.mxu0 0
        %2528 = vmatprep.subr.bf16.mxu0 0
        %2529 = vmatpush2.bf16.msra.mxu0 0
        %2530 = vmatprep.subr.bf16.mxu0 0
        %2531 = vmatpush2.bf16.msra.mxu0 0
        %2532 = vmatprep.subr.bf16.mxu0 0
        %2533 = vmatpush2.bf16.msra.mxu0 0
        %2534 = vmatprep.subr.bf16.mxu0 0
        %2535 = vmatpush2.bf16.msra.mxu0 0
        %2536 = vmatprep.subr.bf16.mxu0 0
        %2537 = vmatpush2.bf16.msra.mxu0 0
        %2538 = vmatprep.subr.bf16.mxu0 0
        %2539 = vmatpush2.bf16.msra.mxu0 0
        %2540 = vmatprep.mubr.bf16.mxu0 0
        %2541 = vmatmul.mubr.bf16.gmra.mxu0 %v2485
        %v2542 = vpop.f32.mrf.mxu0
        %v2543 = vadd.f32 0.0, %v2542
        %v2544 = vpop.f32.mrf.mxu0
        %v2545 = vpop.f32.mrf.mxu0
        %v2546 = vadd.f32 0.0, %v2545
        %v2547 = vpop.f32.mrf.mxu0
        %2548 = vmatprep.mubr.bf16.mxu0 0
        %2549 = vmatmul.mubr.bf16.gmra.mxu0 %v2488
        %v2550 = vpop.f32.mrf.mxu0
        %v2551 = vadd.f32 0.0, %v2550
        %v2552 = vpop.f32.mrf.mxu0
        %v2553 = vpop.f32.mrf.mxu0
        %v2554 = vadd.f32 0.0, %v2553
        %v2555 = vpop.f32.mrf.mxu0
        %2556 = vmatprep.mubr.bf16.mxu0 0
        %2557 = vmatmul.mubr.bf16.gmra.mxu0 %v2491
        %v2558 = vpop.f32.mrf.mxu0
        %v2559 = vadd.f32 0.0, %v2558
        %v2560 = vpop.f32.mrf.mxu0
        %v2561 = vpop.f32.mrf.mxu0
        %v2562 = vadd.f32 0.0, %v2561
        %v2563 = vpop.f32.mrf.mxu0
        %2564 = vmatprep.mubr.bf16.mxu0 0
        %2565 = vmatmul.mubr.bf16.gmra.mxu0 %v2494
        %v2566 = vpop.f32.mrf.mxu0
        %v2567 = vadd.f32 0.0, %v2566
        %v2568 = vpop.f32.mrf.mxu0
        %v2569 = vpop.f32.mrf.mxu0
        %v2570 = vadd.f32 0.0, %v2569
        %v2571 = vpop.f32.mrf.mxu0
        %2572 = vmatprep.mubr.bf16.mxu0 0
        %2573 = vmatmul.mubr.bf16.gmra.mxu0 %v2497
        %v2574 = vpop.f32.mrf.mxu0
        %v2575 = vadd.f32 0.0, %v2574
        %v2576 = vpop.f32.mrf.mxu0
        %v2577 = vpop.f32.mrf.mxu0
        %v2578 = vadd.f32 0.0, %v2577
        %v2579 = vpop.f32.mrf.mxu0
        %2580 = vmatprep.mubr.bf16.mxu0 0
        %2581 = vmatmul.mubr.bf16.gmra.mxu0 %v2500
        %v2582 = vpop.f32.mrf.mxu0
        %v2583 = vadd.f32 0.0, %v2582
        %v2584 = vpop.f32.mrf.mxu0
        %v2585 = vpop.f32.mrf.mxu0
        %v2586 = vadd.f32 0.0, %v2585
        %v2587 = vpop.f32.mrf.mxu0
        %2588 = vmatprep.mubr.bf16.mxu0 0
        %2589 = vmatmul.mubr.bf16.gmra.mxu0 %v2503
        %v2590 = vpop.f32.mrf.mxu0
        %v2591 = vadd.f32 0.0, %v2590
        %v2592 = vpop.f32.mrf.mxu0
        %v2593 = vpop.f32.mrf.mxu0
        %v2594 = vadd.f32 0.0, %v2593
        %v2595 = vpop.f32.mrf.mxu0
        %2596 = vmatprep.mubr.bf16.mxu0 0
        %2597 = vmatmul.mubr.bf16.gmra.mxu0 %v2506
        %v2598 = vpop.f32.mrf.mxu0
        %v2599 = vadd.f32 0.0, %v2598
        %v2600 = vpop.f32.mrf.mxu0
        %v2601 = vpop.f32.mrf.mxu0
        %v2602 = vadd.f32 0.0, %v2601
        %v2603 = vpop.f32.mrf.mxu0
        %2604 = vdwg.mxu0
        %v2605 = vmul.f32 %v2543, %v924
        %v2606 = vmul.f32 %v2546, %v925
        %v2607 = vmul.f32 %v2551, %v926
        %v2608 = vmul.f32 %v2554, %v927
        %v2609 = vmul.f32 %v2559, %v928
        %v2610 = vmul.f32 %v2562, %v929
        %v2611 = vmul.f32 %v2567, %v930
        %v2612 = vmul.f32 %v2570, %v931
        %v2613 = vmul.f32 %v2575, %v932
        %v2614 = vmul.f32 %v2578, %v933
        %v2615 = vmul.f32 %v2583, %v934
        %v2616 = vmul.f32 %v2586, %v935
        %v2617 = vmul.f32 %v2591, %v936
        %v2618 = vmul.f32 %v2594, %v937
        %v2619 = vmul.f32 %v2599, %v938
        %v2620 = vmul.f32 %v2602, %v939
        %v2621 = vadd.f32 %v2605, %v2607
        %v2622 = vadd.f32 %v2606, %v2608
        %v2623 = vadd.f32 %v2621, %v2609
        %v2624 = vadd.f32 %v2622, %v2610
        %v2625 = vadd.f32 %v2623, %v2611
        %v2626 = vadd.f32 %v2624, %v2612
        %v2627 = vadd.f32 %v2625, %v2613
        %v2628 = vadd.f32 %v2626, %v2614
        %v2629 = vadd.f32 %v2627, %v2615
        %v2630 = vadd.f32 %v2628, %v2616
        %v2631 = vadd.f32 %v2629, %v2617
        %v2632 = vadd.f32 %v2630, %v2618
        %v2633 = vadd.f32 %v2631, %v2619
        %v2634 = vadd.f32 %v2632, %v2620
        %v2635 = vpack.c.bf16 %v2634, %v2633
        %s2636 = scalar_lea.vmem %s765, 128 [#allocation11]
        %v2637 = vld [vmem:[%s2636] sm:$0xf]
        %v2638 = vld [vmem:[%s2636 + $0x4] sm:$0xf]
        %v2639 = vld [vmem:[%s2636 + $0x8] sm:$0xf]
        %v2640 = vld [vmem:[%s2636 + $0xc] sm:$0xf]
        %v2641 = vld [vmem:[%s2636 + $0x10] sm:$0xf]
        %v2642 = vld [vmem:[%s2636 + $0x14] sm:$0xf]
        %v2643 = vld [vmem:[%s2636 + $0x18] sm:$0xf]
        %v2644 = vld [vmem:[%s2636 + $0x1c] sm:$0xf]
        %v2645 = vld [vmem:[%s2636 + $0x20] sm:$0xf]
        %v2646 = vld [vmem:[%s2636 + $0x24] sm:$0xf]
        %v2647 = vld [vmem:[%s2636 + $0x28] sm:$0xf]
        %v2648 = vld [vmem:[%s2636 + $0x2c] sm:$0xf]
        %v2649 = vld [vmem:[%s2636 + $0x30] sm:$0xf]
        %v2650 = vld [vmem:[%s2636 + $0x34] sm:$0xf]
        %v2651 = vld [vmem:[%s2636 + $0x38] sm:$0xf]
        %v2652 = vld [vmem:[%s2636 + $0x3c] sm:$0xf]
        %v2653 = vlaneseq
        %v2654 = vshrl.u32 %v2653, 7
        %v2655 = vsub.s32 2, %v2654
        %v2656 = vrot.slane %v975, %v2655
        %v2673 = vunpack.c.l.b16 %v2637
        %v2674 = vunpack.c.l.b16 %v2638
        %v2675 = vunpack.c.l.b16 %v2639
        %v2676 = vunpack.c.l.b16 %v2640
        %v2677 = vunpack.c.l.b16 %v2641
        %v2678 = vunpack.c.l.b16 %v2642
        %v2679 = vunpack.c.l.b16 %v2643
        %v2680 = vunpack.c.l.b16 %v2644
        %v2681 = vunpack.c.l.b16 %v2645
        %v2682 = vunpack.c.l.b16 %v2646
        %v2683 = vunpack.c.l.b16 %v2647
        %v2684 = vunpack.c.l.b16 %v2648
        %v2685 = vunpack.c.l.b16 %v2649
        %v2686 = vunpack.c.l.b16 %v2650
        %v2687 = vunpack.c.l.b16 %v2651
        %v2688 = vunpack.c.l.b16 %v2652
        %v2689 = vpack.c.b16 %v2674, %v2673
        %v2690 = vpack.c.b16 %v2676, %v2675
        %v2691 = vpack.c.b16 %v2678, %v2677
        %v2692 = vpack.c.b16 %v2680, %v2679
        %v2693 = vpack.c.b16 %v2682, %v2681
        %v2694 = vpack.c.b16 %v2684, %v2683
        %v2695 = vpack.c.b16 %v2686, %v2685
        %v2696 = vpack.c.b16 %v2688, %v2687
        %2705 = vmatprep.subr.bf16.mxu0 0
        %2706 = vmatpush1.bf16.msra.mxu0 %v2696
        %2707 = vmatprep.subr.bf16.mxu0 0
        %2708 = vmatpush1.bf16.msra.mxu0 %v2695
        %2709 = vmatprep.subr.bf16.mxu0 0
        %2710 = vmatpush1.bf16.msra.mxu0 %v2694
        %2711 = vmatprep.subr.bf16.mxu0 0
        %2712 = vmatpush1.bf16.msra.mxu0 %v2693
        %2713 = vmatprep.subr.bf16.mxu0 0
        %2714 = vmatpush1.bf16.msra.mxu0 %v2692
        %2715 = vmatprep.subr.bf16.mxu0 0
        %2716 = vmatpush1.bf16.msra.mxu0 %v2691
        %2717 = vmatprep.subr.bf16.mxu0 0
        %2718 = vmatpush1.bf16.msra.mxu0 %v2690
        %2719 = vmatprep.subr.bf16.mxu0 0
        %2720 = vmatpush1.bf16.msra.mxu0 %v2689
        %2721 = vmatprep.subr.bf16.mxu0 0
        %2722 = vmatpush2.bf16.msra.mxu0 0
        %2723 = vmatprep.subr.bf16.mxu0 0
        %2724 = vmatpush2.bf16.msra.mxu0 0
        %2725 = vmatprep.subr.bf16.mxu0 0
        %2726 = vmatpush2.bf16.msra.mxu0 0
        %2727 = vmatprep.subr.bf16.mxu0 0
        %2728 = vmatpush2.bf16.msra.mxu0 0
        %2729 = vmatprep.subr.bf16.mxu0 0
        %2730 = vmatpush2.bf16.msra.mxu0 0
        %2731 = vmatprep.subr.bf16.mxu0 0
        %2732 = vmatpush2.bf16.msra.mxu0 0
        %2733 = vmatprep.subr.bf16.mxu0 0
        %2734 = vmatpush2.bf16.msra.mxu0 0
        %2735 = vmatprep.subr.bf16.mxu0 0
        %2736 = vmatpush2.bf16.msra.mxu0 0
        %2737 = vmatprep.mubr.bf16.mxu0 0
        %2738 = vmatmul.mubr.bf16.gmra.mxu0 %v2635
        %v2739 = vpop.f32.mrf.mxu0
        %v2740 = vadd.f32 %v2656, %v2739
        %v2741 = vpop.f32.mrf.mxu0
        %v2742 = vpop.f32.mrf.mxu0
        %v2743 = vadd.f32 %v2656, %v2742
        %v2744 = vpop.f32.mrf.mxu0
        %2745 = vdwg.mxu0
        %v2746 = vadd.f32 %v2740, %v1881
        %v2747 = vadd.f32 %v2743, %v1882
        %2748 = vadd.xlane.f32.xlu0 %v2746
        %v2749 = vpop.xlane.xlu0 %2748
        %2750 = vadd.xlane.f32.xlu0 %v2747
        %v2751 = vpop.xlane.xlu0 %2750
        %v2752 = vmul.f32 %v2749, 0.015625
        %v2753 = vmul.f32 %v2751, 0.015625
        %v2754 = vsub.f32 %v2746, %v2752
        %v2755 = vsub.f32 %v2747, %v2753
        %v2756 = vmul.f32 %v2754, %v2754
        %v2757 = vmul.f32 %v2755, %v2755
        %2758 = vadd.xlane.f32.xlu0 %v2756
        %v2759 = vpop.xlane.xlu0 %2758
        %2760 = vadd.xlane.f32.xlu0 %v2757
        %v2761 = vpop.xlane.xlu0 %2760
        %v2762 = vmul.f32 %v2752, 64.0
        %v2763 = vmul.f32 %v2753, 64.0
        %v2764 = vmul.f32 %v2762, %v2752
        %v2765 = vmul.f32 %v2763, %v2753
        %v2766 = vsub.f32 %v2759, %v2764
        %v2767 = vsub.f32 %v2761, %v2765
        %v2768 = vmul.f32 %v2766, 0.015625
        %v2769 = vmul.f32 %v2767, 0.015625
        %v2770 = vmax.f32 %v2768, 0.0
        %v2771 = vmax.f32 %v2769, 0.0
        %v2772 = vadd.f32 %v2770, 1e-05
        %v2773 = vadd.f32 %v2771, 1e-05
        %v2774 = vrsqrt.pop %v2772
        %v2775 = vrsqrt.pop %v2773
        %v2776 = vmul.f32 %v2754, %v2774
        %v2777 = vmul.f32 %v2755, %v2775
        %v2778 = vlaneseq
        %v2779 = vshrl.u32 %v2778, 7
        %v2780 = vsub.s32 1, %v2779
        %v2781 = vrot.slane %v973, %v2780
        %v2782 = vmul.f32 %v2776, %v2781
        %v2783 = vmul.f32 %v2777, %v2781
        %v2784 = vlaneseq
        %v2785 = vshrl.u32 %v2784, 7
        %v2786 = vsub.s32 1, %v2785
        %v2787 = vrot.slane %v974, %v2786
        %v2788 = vadd.f32 %v2782, %v2787
        %v2789 = vadd.f32 %v2783, %v2787
        %v2790 = vpack.c.bf16 %v2789, %v2788
        %v2791 = vld [vmem:[%s774] sm:$0xff]
        %v2792 = vld [vmem:[%s774 + $0x8] sm:$0xff]
        %v2793 = vld [vmem:[%s774 + $0x10] sm:$0xff]
        %v2794 = vld [vmem:[%s774 + $0x18] sm:$0xff]
        %v2795 = vld [vmem:[%s774 + $0x20] sm:$0xff]
        %v2796 = vld [vmem:[%s774 + $0x28] sm:$0xff]
        %v2797 = vld [vmem:[%s774 + $0x30] sm:$0xff]
        %v2798 = vld [vmem:[%s774 + $0x38] sm:$0xff]
        %v2799 = vld [vmem:[%s774 + $0x40] sm:$0xff]
        %v2800 = vld [vmem:[%s774 + $0x48] sm:$0xff]
        %v2801 = vld [vmem:[%s774 + $0x50] sm:$0xff]
        %v2802 = vld [vmem:[%s774 + $0x58] sm:$0xff]
        %v2803 = vld [vmem:[%s774 + $0x60] sm:$0xff]
        %v2804 = vld [vmem:[%s774 + $0x68] sm:$0xff]
        %v2805 = vld [vmem:[%s774 + $0x70] sm:$0xff]
        %v2806 = vld [vmem:[%s774 + $0x78] sm:$0xff]
        %v2807 = vld [vmem:[%s783] sm:$0x3]
        %v2809 = vlaneseq
        %v2810 = vshrl.u32 %v2809, 7
        %v2811 = vsub.s32 0, %v2810
        %v2812 = vrot.slane %v2807, %v2811
        %v2813 = vlaneseq
        %v2814 = vshrl.u32 %v2813, 7
        %v2815 = vsub.s32 1, %v2814
        %v2816 = vrot.slane %v2807, %v2815
        %v2835 = vunpack.c.l.b16 %v2791
        %v2836 = vunpack.c.h.b16 %v2791
        %v2837 = vunpack.c.l.b16 %v2792
        %v2838 = vunpack.c.h.b16 %v2792
        %v2839 = vunpack.c.l.b16 %v2793
        %v2840 = vunpack.c.h.b16 %v2793
        %v2841 = vunpack.c.l.b16 %v2794
        %v2842 = vunpack.c.h.b16 %v2794
        %v2843 = vunpack.c.l.b16 %v2795
        %v2844 = vunpack.c.h.b16 %v2795
        %v2845 = vunpack.c.l.b16 %v2796
        %v2846 = vunpack.c.h.b16 %v2796
        %v2847 = vunpack.c.l.b16 %v2797
        %v2848 = vunpack.c.h.b16 %v2797
        %v2849 = vunpack.c.l.b16 %v2798
        %v2850 = vunpack.c.h.b16 %v2798
        %v2851 = vunpack.c.l.b16 %v2799
        %v2852 = vunpack.c.h.b16 %v2799
        %v2853 = vunpack.c.l.b16 %v2800
        %v2854 = vunpack.c.h.b16 %v2800
        %v2855 = vunpack.c.l.b16 %v2801
        %v2856 = vunpack.c.h.b16 %v2801
        %v2857 = vunpack.c.l.b16 %v2802
        %v2858 = vunpack.c.h.b16 %v2802
        %v2859 = vunpack.c.l.b16 %v2803
        %v2860 = vunpack.c.h.b16 %v2803
        %v2861 = vunpack.c.l.b16 %v2804
        %v2862 = vunpack.c.h.b16 %v2804
        %v2863 = vunpack.c.l.b16 %v2805
        %v2864 = vunpack.c.h.b16 %v2805
        %v2865 = vunpack.c.l.b16 %v2806
        %v2866 = vunpack.c.h.b16 %v2806
        %v2867 = vpack.c.b16 %v2837, %v2835
        %v2868 = vpack.c.b16 %v2838, %v2836
        %v2869 = vpack.c.b16 %v2841, %v2839
        %v2870 = vpack.c.b16 %v2842, %v2840
        %v2871 = vpack.c.b16 %v2845, %v2843
        %v2872 = vpack.c.b16 %v2846, %v2844
        %v2873 = vpack.c.b16 %v2849, %v2847
        %v2874 = vpack.c.b16 %v2850, %v2848
        %v2875 = vpack.c.b16 %v2853, %v2851
        %v2876 = vpack.c.b16 %v2854, %v2852
        %v2877 = vpack.c.b16 %v2857, %v2855
        %v2878 = vpack.c.b16 %v2858, %v2856
        %v2879 = vpack.c.b16 %v2861, %v2859
        %v2880 = vpack.c.b16 %v2862, %v2860
        %v2881 = vpack.c.b16 %v2865, %v2863
        %v2882 = vpack.c.b16 %v2866, %v2864
        %2899 = vmatprep.subr.bf16.mxu0 %v2882
        %2900 = vmatpush1.bf16.msra.mxu0 %v2881
        %2901 = vmatprep.subr.bf16.mxu0 %v2880
        %2902 = vmatpush1.bf16.msra.mxu0 %v2879
        %2903 = vmatprep.subr.bf16.mxu0 %v2878
        %2904 = vmatpush1.bf16.msra.mxu0 %v2877
        %2905 = vmatprep.subr.bf16.mxu0 %v2876
        %2906 = vmatpush1.bf16.msra.mxu0 %v2875
        %2907 = vmatprep.subr.bf16.mxu0 %v2874
        %2908 = vmatpush1.bf16.msra.mxu0 %v2873
        %2909 = vmatprep.subr.bf16.mxu0 %v2872
        %2910 = vmatpush1.bf16.msra.mxu0 %v2871
        %2911 = vmatprep.subr.bf16.mxu0 %v2870
        %2912 = vmatpush1.bf16.msra.mxu0 %v2869
        %2913 = vmatprep.subr.bf16.mxu0 %v2868
        %2914 = vmatpush1.bf16.msra.mxu0 %v2867
        %2915 = vmatprep.subr.bf16.mxu0 0
        %2916 = vmatpush2.bf16.msra.mxu0 0
        %2917 = vmatprep.subr.bf16.mxu0 0
        %2918 = vmatpush2.bf16.msra.mxu0 0
        %2919 = vmatprep.subr.bf16.mxu0 0
        %2920 = vmatpush2.bf16.msra.mxu0 0
        %2921 = vmatprep.subr.bf16.mxu0 0
        %2922 = vmatpush2.bf16.msra.mxu0 0
        %2923 = vmatprep.subr.bf16.mxu0 0
        %2924 = vmatpush2.bf16.msra.mxu0 0
        %2925 = vmatprep.subr.bf16.mxu0 0
        %2926 = vmatpush2.bf16.msra.mxu0 0
        %2927 = vmatprep.subr.bf16.mxu0 0
        %2928 = vmatpush2.bf16.msra.mxu0 0
        %2929 = vmatprep.subr.bf16.mxu0 0
        %2930 = vmatpush2.bf16.msra.mxu0 0
        %2931 = vmatprep.mubr.bf16.mxu0 0
        %2932 = vmatmul.mubr.bf16.gmra.mxu0 %v2790
        %v2933 = vpop.f32.mrf.mxu0
        %v2934 = vadd.f32 %v2812, %v2933
        %v2935 = vpop.f32.mrf.mxu0
        %v2936 = vadd.f32 %v2816, %v2935
        %v2937 = vpop.f32.mrf.mxu0
        %v2938 = vadd.f32 %v2812, %v2937
        %v2939 = vpop.f32.mrf.mxu0
        %v2940 = vadd.f32 %v2816, %v2939
        %2941 = vdwg.mxu0
        %v2942 = vmax.f32 %v2934, 0.0
        %v2943 = vmax.f32 %v2936, 0.0
        %v2944 = vmax.f32 %v2938, 0.0
        %v2945 = vmax.f32 %v2940, 0.0
        %v2946 = vpack.c.bf16 %v2944, %v2942
        %v2947 = vpack.c.bf16 %v2945, %v2943
        %v2948 = vld [vmem:[%s792] sm:$0xf]
        %v2949 = vld [vmem:[%s792 + $0x4] sm:$0xf]
        %v2950 = vld [vmem:[%s792 + $0x8] sm:$0xf]
        %v2951 = vld [vmem:[%s792 + $0xc] sm:$0xf]
        %v2952 = vld [vmem:[%s792 + $0x10] sm:$0xf]
        %v2953 = vld [vmem:[%s792 + $0x14] sm:$0xf]
        %v2954 = vld [vmem:[%s792 + $0x18] sm:$0xf]
        %v2955 = vld [vmem:[%s792 + $0x1c] sm:$0xf]
        %v2956 = vld [vmem:[%s792 + $0x20] sm:$0xf]
        %v2957 = vld [vmem:[%s792 + $0x24] sm:$0xf]
        %v2958 = vld [vmem:[%s792 + $0x28] sm:$0xf]
        %v2959 = vld [vmem:[%s792 + $0x2c] sm:$0xf]
        %v2960 = vld [vmem:[%s792 + $0x30] sm:$0xf]
        %v2961 = vld [vmem:[%s792 + $0x34] sm:$0xf]
        %v2962 = vld [vmem:[%s792 + $0x38] sm:$0xf]
        %v2963 = vld [vmem:[%s792 + $0x3c] sm:$0xf]
        %v2964 = vld [vmem:[%s792 + $0x40] sm:$0xf]
        %v2965 = vld [vmem:[%s792 + $0x44] sm:$0xf]
        %v2966 = vld [vmem:[%s792 + $0x48] sm:$0xf]
        %v2967 = vld [vmem:[%s792 + $0x4c] sm:$0xf]
        %v2968 = vld [vmem:[%s792 + $0x50] sm:$0xf]
        %v2969 = vld [vmem:[%s792 + $0x54] sm:$0xf]
        %v2970 = vld [vmem:[%s792 + $0x58] sm:$0xf]
        %v2971 = vld [vmem:[%s792 + $0x5c] sm:$0xf]
        %v2972 = vld [vmem:[%s792 + $0x60] sm:$0xf]
        %v2973 = vld [vmem:[%s792 + $0x64] sm:$0xf]
        %v2974 = vld [vmem:[%s792 + $0x68] sm:$0xf]
        %v2975 = vld [vmem:[%s792 + $0x6c] sm:$0xf]
        %v2976 = vld [vmem:[%s792 + $0x70] sm:$0xf]
        %v2977 = vld [vmem:[%s792 + $0x74] sm:$0xf]
        %v2978 = vld [vmem:[%s792 + $0x78] sm:$0xf]
        %v2979 = vld [vmem:[%s792 + $0x7c] sm:$0xf]
        %v2980 = vld [vmem:[%s909] sm:$0x1]
        %v2982 = vlaneseq
        %v2983 = vshrl.u32 %v2982, 7
        %v2984 = vsub.s32 0, %v2983
        %v2985 = vrot.slane %v2980, %v2984
        %v3019 = vunpack.c.l.b16 %v2948
        %v3020 = vunpack.c.l.b16 %v2949
        %v3021 = vunpack.c.l.b16 %v2950
        %v3022 = vunpack.c.l.b16 %v2951
        %v3023 = vunpack.c.l.b16 %v2952
        %v3024 = vunpack.c.l.b16 %v2953
        %v3025 = vunpack.c.l.b16 %v2954
        %v3026 = vunpack.c.l.b16 %v2955
        %v3027 = vunpack.c.l.b16 %v2956
        %v3028 = vunpack.c.l.b16 %v2957
        %v3029 = vunpack.c.l.b16 %v2958
        %v3030 = vunpack.c.l.b16 %v2959
        %v3031 = vunpack.c.l.b16 %v2960
        %v3032 = vunpack.c.l.b16 %v2961
        %v3033 = vunpack.c.l.b16 %v2962
        %v3034 = vunpack.c.l.b16 %v2963
        %v3035 = vunpack.c.l.b16 %v2964
        %v3036 = vunpack.c.l.b16 %v2965
        %v3037 = vunpack.c.l.b16 %v2966
        %v3038 = vunpack.c.l.b16 %v2967
        %v3039 = vunpack.c.l.b16 %v2968
        %v3040 = vunpack.c.l.b16 %v2969
        %v3041 = vunpack.c.l.b16 %v2970
        %v3042 = vunpack.c.l.b16 %v2971
        %v3043 = vunpack.c.l.b16 %v2972
        %v3044 = vunpack.c.l.b16 %v2973
        %v3045 = vunpack.c.l.b16 %v2974
        %v3046 = vunpack.c.l.b16 %v2975
        %v3047 = vunpack.c.l.b16 %v2976
        %v3048 = vunpack.c.l.b16 %v2977
        %v3049 = vunpack.c.l.b16 %v2978
        %v3050 = vunpack.c.l.b16 %v2979
        %v3051 = vpack.c.b16 %v3020, %v3019
        %v3052 = vpack.c.b16 %v3022, %v3021
        %v3053 = vpack.c.b16 %v3024, %v3023
        %v3054 = vpack.c.b16 %v3026, %v3025
        %v3055 = vpack.c.b16 %v3028, %v3027
        %v3056 = vpack.c.b16 %v3030, %v3029
        %v3057 = vpack.c.b16 %v3032, %v3031
        %v3058 = vpack.c.b16 %v3034, %v3033
        %v3059 = vpack.c.b16 %v3036, %v3035
        %v3060 = vpack.c.b16 %v3038, %v3037
        %v3061 = vpack.c.b16 %v3040, %v3039
        %v3062 = vpack.c.b16 %v3042, %v3041
        %v3063 = vpack.c.b16 %v3044, %v3043
        %v3064 = vpack.c.b16 %v3046, %v3045
        %v3065 = vpack.c.b16 %v3048, %v3047
        %v3066 = vpack.c.b16 %v3050, %v3049
        %3083 = vmatprep.subr.bf16.mxu0 0
        %3084 = vmatpush1.bf16.msra.mxu0 %v3058
        %3085 = vmatprep.subr.bf16.mxu0 0
        %3086 = vmatpush1.bf16.msra.mxu0 %v3057
        %3087 = vmatprep.subr.bf16.mxu0 0
        %3088 = vmatpush1.bf16.msra.mxu0 %v3056
        %3089 = vmatprep.subr.bf16.mxu0 0
        %3090 = vmatpush1.bf16.msra.mxu0 %v3055
        %3091 = vmatprep.subr.bf16.mxu0 0
        %3092 = vmatpush1.bf16.msra.mxu0 %v3054
        %3093 = vmatprep.subr.bf16.mxu0 0
        %3094 = vmatpush1.bf16.msra.mxu0 %v3053
        %3095 = vmatprep.subr.bf16.mxu0 0
        %3096 = vmatpush1.bf16.msra.mxu0 %v3052
        %3097 = vmatprep.subr.bf16.mxu0 0
        %3098 = vmatpush1.bf16.msra.mxu0 %v3051
        %3099 = vmatprep.subr.bf16.mxu0 0
        %3100 = vmatpush2.bf16.msra.mxu0 %v3066
        %3101 = vmatprep.subr.bf16.mxu0 0
        %3102 = vmatpush2.bf16.msra.mxu0 %v3065
        %3103 = vmatprep.subr.bf16.mxu0 0
        %3104 = vmatpush2.bf16.msra.mxu0 %v3064
        %3105 = vmatprep.subr.bf16.mxu0 0
        %3106 = vmatpush2.bf16.msra.mxu0 %v3063
        %3107 = vmatprep.subr.bf16.mxu0 0
        %3108 = vmatpush2.bf16.msra.mxu0 %v3062
        %3109 = vmatprep.subr.bf16.mxu0 0
        %3110 = vmatpush2.bf16.msra.mxu0 %v3061
        %3111 = vmatprep.subr.bf16.mxu0 0
        %3112 = vmatpush2.bf16.msra.mxu0 %v3060
        %3113 = vmatprep.subr.bf16.mxu0 0
        %3114 = vmatpush2.bf16.msra.mxu0 %v3059
        %3115 = vmatprep.mubr.bf16.mxu0 %v2947
        %3116 = vmatmul.mubr.bf16.gmra.mxu0 %v2946
        %v3117 = vpop.f32.mrf.mxu0
        %v3118 = vadd.f32 %v2985, %v3117
        %v3119 = vpop.f32.mrf.mxu0
        %v3120 = vpop.f32.mrf.mxu0
        %v3121 = vadd.f32 %v2985, %v3120
        %v3122 = vpop.f32.mrf.mxu0
        %3123 = vdwg.mxu0
        %v3124 = vadd.f32 %v3118, %v2788
        %v3125 = vadd.f32 %v3121, %v2789
        %3126 = vadd.xlane.f32.xlu0 %v3124
        %v3127 = vpop.xlane.xlu0 %3126
        %3128 = vadd.xlane.f32.xlu0 %v3125
        %v3129 = vpop.xlane.xlu0 %3128
        %v3130 = vmul.f32 %v3127, 0.015625
        %v3131 = vmul.f32 %v3129, 0.015625
        %v3132 = vsub.f32 %v3124, %v3130
        %v3133 = vsub.f32 %v3125, %v3131
        %v3134 = vmul.f32 %v3132, %v3132
        %v3135 = vmul.f32 %v3133, %v3133
        %3136 = vadd.xlane.f32.xlu0 %v3134
        %v3137 = vpop.xlane.xlu0 %3136
        %3138 = vadd.xlane.f32.xlu0 %v3135
        %v3139 = vpop.xlane.xlu0 %3138
        %v3140 = vmul.f32 %v3130, 64.0
        %v3141 = vmul.f32 %v3131, 64.0
        %v3142 = vmul.f32 %v3140, %v3130
        %v3143 = vmul.f32 %v3141, %v3131
        %v3144 = vsub.f32 %v3137, %v3142
        %v3145 = vsub.f32 %v3139, %v3143
        %v3146 = vmul.f32 %v3144, 0.015625
        %v3147 = vmul.f32 %v3145, 0.015625
        %v3148 = vmax.f32 %v3146, 0.0
        %v3149 = vmax.f32 %v3147, 0.0
        %v3150 = vadd.f32 %v3148, 1e-05
        %v3151 = vadd.f32 %v3149, 1e-05
        %v3152 = vrsqrt.pop %v3150
        %v3153 = vrsqrt.pop %v3151
        %v3154 = vmul.f32 %v3132, %v3152
        %v3155 = vmul.f32 %v3133, %v3153
        %v3156 = vlaneseq
        %v3157 = vshrl.u32 %v3156, 7
        %v3158 = vsub.s32 2, %v3157
        %v3159 = vrot.slane %v973, %v3158
        %v3160 = vmul.f32 %v3154, %v3159
        %v3161 = vmul.f32 %v3155, %v3159
        %v3162 = vlaneseq
        %v3163 = vshrl.u32 %v3162, 7
        %v3164 = vsub.s32 2, %v3163
        %v3165 = vrot.slane %v974, %v3164
        %v3166 = vadd.f32 %v3160, %v3165
        %v3167 = vadd.f32 %v3161, %v3165
        %3168 = vst [vmem:[#allocation2] sm:$0xff] %v3166
        %3169 = vst [vmem:[#allocation2 + $0x8] sm:$0xff] %v3167
        %p3170 = scmp.eq.s32.totalorder %s32, 1
        // Predicated region
        $region133: #{tpu_custom_call.1} parent=91 // pred_check
          %p3171 = pneg %p3170
        $region134: #{tpu_custom_call.1} parent=91 // pred_check_branch
          %3173 = sbr.rel (%p3171) target = $region136
        $region135: #{tpu_custom_call.1} parent=91 // pred_region
          %v3174 = vpack.c.bf16 %v3167, %v3166
          %v3175 = vld [vmem:[%s16] sm:$0xf]
          %v3176 = vld [vmem:[%s16 + $0x4] sm:$0xf]
          %v3177 = vld [vmem:[%s16 + $0x8] sm:$0xf]
          %v3178 = vld [vmem:[%s16 + $0xc] sm:$0xf]
          %v3179 = vld [vmem:[%s16 + $0x10] sm:$0xf]
          %v3180 = vld [vmem:[%s16 + $0x14] sm:$0xf]
          %v3181 = vld [vmem:[%s16 + $0x18] sm:$0xf]
          %v3182 = vld [vmem:[%s16 + $0x1c] sm:$0xf]
          %v3183 = vld [vmem:[%s16 + $0x20] sm:$0xf]
          %v3184 = vld [vmem:[%s16 + $0x24] sm:$0xf]
          %v3185 = vld [vmem:[%s16 + $0x28] sm:$0xf]
          %v3186 = vld [vmem:[%s16 + $0x2c] sm:$0xf]
          %v3187 = vld [vmem:[%s16 + $0x30] sm:$0xf]
          %v3188 = vld [vmem:[%s16 + $0x34] sm:$0xf]
          %v3189 = vld [vmem:[%s16 + $0x38] sm:$0xf]
          %v3190 = vld [vmem:[%s16 + $0x3c] sm:$0xf]
          %v3191 = vld [vmem:[%s17] sm:$0x1]
          %v3193 = vlaneseq
          %v3194 = vshrl.u32 %v3193, 7
          %v3195 = vsub.s32 0, %v3194
          %v3196 = vrot.slane %v3191, %v3195
          %v3214 = vunpack.c.l.b16 %v3175
          %v3215 = vunpack.c.l.b16 %v3176
          %v3216 = vunpack.c.l.b16 %v3177
          %v3217 = vunpack.c.l.b16 %v3178
          %v3218 = vunpack.c.l.b16 %v3179
          %v3219 = vunpack.c.l.b16 %v3180
          %v3220 = vunpack.c.l.b16 %v3181
          %v3221 = vunpack.c.l.b16 %v3182
          %v3222 = vunpack.c.l.b16 %v3183
          %v3223 = vunpack.c.l.b16 %v3184
          %v3224 = vunpack.c.l.b16 %v3185
          %v3225 = vunpack.c.l.b16 %v3186
          %v3226 = vunpack.c.l.b16 %v3187
          %v3227 = vunpack.c.l.b16 %v3188
          %v3228 = vunpack.c.l.b16 %v3189
          %v3229 = vunpack.c.l.b16 %v3190
          %v3230 = vpack.c.b16 %v3215, %v3214
          %v3231 = vpack.c.b16 %v3217, %v3216
          %v3232 = vpack.c.b16 %v3219, %v3218
          %v3233 = vpack.c.b16 %v3221, %v3220
          %v3234 = vpack.c.b16 %v3223, %v3222
          %v3235 = vpack.c.b16 %v3225, %v3224
          %v3236 = vpack.c.b16 %v3227, %v3226
          %v3237 = vpack.c.b16 %v3229, %v3228
          %3246 = vmatprep.subr.bf16.mxu0 0
          %3247 = vmatpush1.bf16.msra.mxu0 %v3237
          %3248 = vmatprep.subr.bf16.mxu0 0
          %3249 = vmatpush1.bf16.msra.mxu0 %v3236
          %3250 = vmatprep.subr.bf16.mxu0 0
          %3251 = vmatpush1.bf16.msra.mxu0 %v3235
          %3252 = vmatprep.subr.bf16.mxu0 0
          %3253 = vmatpush1.bf16.msra.mxu0 %v3234
          %3254 = vmatprep.subr.bf16.mxu0 0
          %3255 = vmatpush1.bf16.msra.mxu0 %v3233
          %3256 = vmatprep.subr.bf16.mxu0 0
          %3257 = vmatpush1.bf16.msra.mxu0 %v3232
          %3258 = vmatprep.subr.bf16.mxu0 0
          %3259 = vmatpush1.bf16.msra.mxu0 %v3231
          %3260 = vmatprep.subr.bf16.mxu0 0
          %3261 = vmatpush1.bf16.msra.mxu0 %v3230
          %3262 = vmatprep.subr.bf16.mxu0 0
          %3263 = vmatpush2.bf16.msra.mxu0 0
          %3264 = vmatprep.subr.bf16.mxu0 0
          %3265 = vmatpush2.bf16.msra.mxu0 0
          %3266 = vmatprep.subr.bf16.mxu0 0
          %3267 = vmatpush2.bf16.msra.mxu0 0
          %3268 = vmatprep.subr.bf16.mxu0 0
          %3269 = vmatpush2.bf16.msra.mxu0 0
          %3270 = vmatprep.subr.bf16.mxu0 0
          %3271 = vmatpush2.bf16.msra.mxu0 0
          %3272 = vmatprep.subr.bf16.mxu0 0
          %3273 = vmatpush2.bf16.msra.mxu0 0
          %3274 = vmatprep.subr.bf16.mxu0 0
          %3275 = vmatpush2.bf16.msra.mxu0 0
          %3276 = vmatprep.subr.bf16.mxu0 0
          %3277 = vmatpush2.bf16.msra.mxu0 0
          %3278 = vmatprep.mubr.bf16.mxu0 0
          %3279 = vmatmul.mubr.bf16.gmra.mxu0 %v3174
          %v3280 = vpop.f32.mrf.mxu0
          %v3281 = vadd.f32 %v3196, %v3280
          %v3282 = vpop.f32.mrf.mxu0
          %v3283 = vpop.f32.mrf.mxu0
          %v3284 = vadd.f32 %v3196, %v3283
          %v3285 = vpop.f32.mrf.mxu0
          %3286 = vdwg.mxu0
          %v3287 = vmax.f32 %v3281, %v3284
          %v3288 = vsub.f32 %v3281, %v3287
          %v3289 = vmul.f32 %v3288, 1.442695
          %v3290 = vpow.pop %v3289
          %v3291 = vsub.f32 %v3284, %v3287
          %v3292 = vmul.f32 %v3291, 1.442695
          %v3293 = vpow.pop %v3292
          %v3294 = vadd.f32 %v3290, %v3293
          %v3295 = vrcp.pop %v3294
          %v3296 = vmul.f32 %v3290, %v3295
          %3297 = vst [vmem:[#allocation15] sm:$0xff] %v3296
          %v3298 = vmul.f32 %v3293, %v3295
          %s3299 = scalar_lea.vmem [#allocation15], 8
          %3300 = vst [vmem:[%s3299] sm:$0xff] %v3298
        $region136: #{tpu_custom_call.1} parent=91 // pred_fallthru
          _
        // Predicated region
        $region137: #{tpu_custom_call.1} parent=91 // pred_check
          %p3301 = pneg %p483
        $region138: #{tpu_custom_call.1} parent=91 // pred_check_branch
          %3303 = sbr.rel (%p3301) target = $region140
        $region139: #{tpu_custom_call.1} parent=91 // pred_region
          %s3305 = ssub.s32 256, 256
          %3306 = vsyncadd [#allocation5], %s3305
          %s3307 = sshll.u32 [#allocation15], 4
          %s3308 = int_to_ptr.vmem [resolvable:$true] %s3307
          %3313 = dma.vmem_to_hbm [thread:$0]  %s3308, 256, %s18, [#allocation5], 128, 128, 8
        $region140: #{tpu_custom_call.1} parent=91 // pred_fallthru
          _
        // Predicated region
        $region141: #{tpu_custom_call.1} parent=91 // pred_check
          %p3314 = pneg %p483
        $region142: #{tpu_custom_call.1} parent=91 // pred_check_branch
          %3316 = sbr.rel (%p3314) target = $region144
        $region143: #{tpu_custom_call.1} parent=91 // pred_region
          %3317 = dma.done [#allocation5], 256
        $region144: #{tpu_custom_call.1} parent=91 // pred_fallthru
          _
      $region92: #{tpu_custom_call.1} parent=5 // pred_fallthru
        _
      %p3318 = scmp.le.s32.totalorder 2, %s27
      // Predicated region
      $region145: #{tpu_custom_call.1} parent=5 // pred_check
        %p3319 = pneg %p3318
      $region146: #{tpu_custom_call.1} parent=5 // pred_check_branch
        %3321 = sbr.rel (%p3319) target = $region148
      $region147: #{tpu_custom_call.1} parent=5 // pred_region
        %s3322 = ssub.s32 %s27, 2
      $region148: #{tpu_custom_call.1} parent=5 // pred_fallthru
        _
    $region6: #{tpu_custom_call.1} parent=1 // loop_footer
      %s31 = sadd.s32 1, %s27
    $region7: #{tpu_custom_call.1} parent=1 // loop_footer_branch
      %26 = sbr.rel target = $region3
    $region8: #{tpu_custom_call.1} parent=1 // loop_exit
      _
    %3323 = vsyncpa [#allocation4], 1
    %s3324 = scalar_lea.sflag [#allocation4], 1
    %3325 = vsyncpa %s3324, 1
    %3326 = vsyncpa [#allocation7], 1
    %3327 = vsyncpa [#allocation5], 1
    %s3328 = scalar_lea.sflag [#allocation5], 1
    %3329 = vsyncpa %s3328, 1

</llo_original>
